<compile_context>
chip_gen: v6e
topology: v6e:2x2x1
jax: 0.10.0
libtpu: 0.0.40
codegen_flags: <defaults>
</compile_context>

<pallas_src>
import functools

import jax
import jax.numpy as jnp
from jax.experimental import pallas as pl
from jax.experimental.pallas import tpu as pltpu


def _layer_norm(x, w, b, eps):
    mu = jnp.mean(x, axis=-1, keepdims=True)
    xc = x - mu
    var = jnp.mean(xc * xc, axis=-1, keepdims=True)
    return xc * jax.lax.rsqrt(var + eps) * w + b


def _behrt_lab_kernel(lab_ref, tok_ref, pos_ref,
                      w_in_ref, b_in_ref, w_out_ref,
                      w_ff1_ref, b_ff1_ref, w_ff2_ref, vec_ref,
                      out_ref, *, nh, eps):
    TB, T = lab_ref.shape
    H = tok_ref.shape[1]
    L = w_in_ref.shape[0]
    dh = H // nh
    scale = 1.0 / (dh ** 0.5)
    cd = w_in_ref.dtype              # storage dtype of the big matrices (f32 or bf16)

    # ---- token embedding + positional embedding (f32 activations) ----
    lab = lab_ref[...].astype(jnp.float32)             # [TB, T]
    tok = tok_ref[...].astype(jnp.float32)             # [2, H]  rows: weight, bias
    pos = pos_ref[...].astype(jnp.float32)             # [T, H]
    x3 = (lab[:, :, None] * tok[0:1, :][None, :, :]
          + tok[1:2, :][None, :, :] + pos[None, :, :])  # [TB, T, H]
    x2 = x3.reshape(TB * T, H)

    # small per-layer vectors, kept f32
    b_in_all = b_in_ref[...].astype(jnp.float32)        # [L, 3H]
    b_ff1_all = b_ff1_ref[...].astype(jnp.float32)      # [L, FF]
    vec_all = vec_ref[...].astype(jnp.float32)          # [L, 6, H]

    for layer in range(L):                               # static unrolled (L small)
        w_in = w_in_ref[layer]                           # [H, 3H]
        w_out = w_out_ref[layer]                         # [H, H]
        w_ff1 = w_ff1_ref[layer]                         # [H, FF]
        w_ff2 = w_ff2_ref[layer]                         # [FF, H]
        b_in = b_in_all[layer:layer + 1, :]              # [1, 3H]
        b_ff1 = b_ff1_all[layer:layer + 1, :]            # [1, FF]
        vecs = vec_all[layer]                            # [6, H]
        b_out, ln1_w, ln1_b = vecs[0:1, :], vecs[1:2, :], vecs[2:3, :]
        b_ff2, ln2_w, ln2_b = vecs[3:4, :], vecs[4:5, :], vecs[5:6, :]

        # ---- multi-head self-attention (post-norm) ----
        qkv = jnp.dot(x2.astype(cd), w_in,
                      preferred_element_type=jnp.float32) + b_in       # [TB*T, 3H]
        q = qkv[:, 0:H].reshape(TB, T, H) * scale
        k = qkv[:, H:2 * H].reshape(TB, T, H)
        v = qkv[:, 2 * H:3 * H].reshape(TB, T, H)

        attn = jnp.zeros((TB * T, H), jnp.float32)
        for h in range(nh):                              # static head loop
            sl = slice(h * dh, (h + 1) * dh)
            s = jnp.einsum("btd,bsd->bts", q[:, :, sl], k[:, :, sl],
                           preferred_element_type=jnp.float32)          # [TB, T, T]
            s = s - jnp.max(s, axis=-1, keepdims=True)
            p = jnp.exp(s)
            p = p / jnp.sum(p, axis=-1, keepdims=True)
            o_h = jnp.einsum("bts,bsd->btd", p, v[:, :, sl],
                             preferred_element_type=jnp.float32)        # [TB, T, dh]
            # fused per-head out_proj: concat_h(o_h) @ W_out == sum_h o_h @ W_out[h-block]
            attn = attn + jnp.dot(o_h.reshape(TB * T, dh).astype(cd), w_out[sl, :],
                                  preferred_element_type=jnp.float32)
        x2 = _layer_norm(x2 + attn + b_out, ln1_w, ln1_b, eps)

        # ---- feed-forward (ReLU) ----
        hmid = jnp.maximum(
            jnp.dot(x2.astype(cd), w_ff1, preferred_element_type=jnp.float32) + b_ff1,
            0.0)
        ff = jnp.dot(hmid.astype(cd), w_ff2, preferred_element_type=jnp.float32) + b_ff2
        x2 = _layer_norm(x2 + ff, ln2_w, ln2_b, eps)

    # ---- mean over tokens -> lab_embedding [TB, H] (single lane-dense output) ----
    out_ref[...] = jnp.mean(x2.reshape(TB, T, H), axis=1).astype(out_ref.dtype)


def _pick_tile_b(B, T, H, FF, budget_bytes=8 * 1024 * 1024):
    """Largest batch tile whose live f32 intermediates fit a conservative budget,
    leaving room for resident weights + double-buffered input tiles under the
    v7x 64 MiB VMEM / default scoped limits."""
    per_row = 4 * T * (8 * H + FF)          # rough bytes of live f32 per batch row
    cap = max(1, budget_bytes // max(per_row, 1))
    if B <= cap:
        return B
    cap = min(cap, 128)
    best = 1
    for tb in range(cap, 0, -1):
        if B % tb == 0:
            if tb % 8 == 0:
                return tb                   # prefer sublane-aligned tile
            best = max(best, tb)
    return best


def behrt_lab_forward(lab_features, params, *, nhead, tile_b=None,
                      compute_dtype=jnp.float32, interpret=False):
    """Pallas implementation of BEHRTModel_Lab.forward (inference)."""
    B, T = lab_features.shape
    H = params["tok"].shape[1]
    FF = params["w_ff1"].shape[2]
    assert H % nhead == 0, "hidden_size must be divisible by nhead"

    cd = compute_dtype
    # inputs + large matrices in compute_dtype (bf16 halves HBM traffic on v6e/v7x);
    # biases / LayerNorm params stay f32.
    lab = lab_features.astype(cd)
    tok = params["tok"].astype(cd)
    pos = params["pos"].astype(cd)
    w_in = params["w_in"].astype(cd)
    w_out = params["w_out"].astype(cd)
    w_ff1 = params["w_ff1"].astype(cd)
    w_ff2 = params["w_ff2"].astype(cd)
    b_in = params["b_in"].astype(jnp.float32)
    b_ff1 = params["b_ff1"].astype(jnp.float32)
    vecs = params["vecs"].astype(jnp.float32)

    if tile_b is None:
        tile_b = _pick_tile_b(B, T, H, FF)
    grid = (B // tile_b,)

    def _const(a):
        return pl.BlockSpec(a.shape, lambda i, _nd=a.ndim: (0,) * _nd)

    kernel = functools.partial(_behrt_lab_kernel, nh=nhead, eps=1e-5)

    return pl.pallas_call(
        kernel,
        grid=grid,
        in_specs=[
            pl.BlockSpec((tile_b, T), lambda i: (i, 0)),   # lab features, batch-tiled
            _const(tok), _const(pos),
            _const(w_in), _const(b_in), _const(w_out),
            _const(w_ff1), _const(b_ff1), _const(w_ff2),
            _const(vecs),
        ],
        out_specs=pl.BlockSpec((tile_b, H), lambda i: (i, 0)),
        out_shape=jax.ShapeDtypeStruct((B, H), jnp.float32),
        compiler_params=pltpu.CompilerParams(
            dimension_semantics=("parallel",),             # batch axis -> 2 TCs on v7x
            vmem_limit_bytes=48 * 1024 * 1024,
        ),
        interpret=interpret,
    )(lab, tok, pos, w_in, b_in, w_out, w_ff1, b_ff1, w_ff2, vecs)


def init_params(key, lab_token_count, hidden_size, num_layers, dim_feedforward):
    """Deterministic parameters, packed for the kernel layout."""
    T, H, L, FF = lab_token_count, hidden_size, num_layers, dim_feedforward
    ks = jax.random.split(key, 11)
    s = 0.1

    def nrm(k, shape):
        return s * jax.random.normal(k, shape, jnp.float32)

    tok = jnp.concatenate([nrm(ks[0], (1, H)), nrm(ks[1], (1, H))], axis=0)  # [w; b]
    pos = nrm(ks[2], (T, H))
    w_in = nrm(ks[3], (L, H, 3 * H))          # pre-transposed QKV projection
    b_in = nrm(ks[4], (L, 3 * H))
    w_out = nrm(ks[5], (L, H, H))
    w_ff1 = nrm(ks[6], (L, H, FF))
    b_ff1 = nrm(ks[7], (L, FF))
    w_ff2 = nrm(ks[8], (L, FF, H))
    b_out = nrm(ks[9], (L, 1, H))
    b_ff2 = nrm(ks[10], (L, 1, H))
    ones = jnp.ones((L, 1, H), jnp.float32)
    zeros = jnp.zeros((L, 1, H), jnp.float32)
    # packed per-layer vectors: [b_out, ln1_w, ln1_b, b_ff2, ln2_w, ln2_b]
    vecs = jnp.concatenate([b_out, ones, zeros, b_ff2, ones, zeros], axis=1)  # [L,6,H]
    return dict(tok=tok, pos=pos, w_in=w_in, b_in=b_in, w_out=w_out,
                w_ff1=w_ff1, b_ff1=b_ff1, w_ff2=w_ff2, vecs=vecs)


def _reference(lab, params, *, nhead, eps=1e-5):
    """Plain-JAX reference mirroring the PyTorch eval forward."""
    tok_w, tok_b = params["tok"][0], params["tok"][1]
    pos = params["pos"]
    B, T = lab.shape
    H = tok_w.shape[0]
    L = params["w_in"].shape[0]
    dh = H // nhead
    scale = 1.0 / (dh ** 0.5)

    def ln(x, w, b):
        mu = jnp.mean(x, axis=-1, keepdims=True)
        xc = x - mu
        var = jnp.mean(xc * xc, axis=-1, keepdims=True)
        return xc * jax.lax.rsqrt(var + eps) * w + b

    x = lab[:, :, None] * tok_w + tok_b + pos[None]
    for i in range(L):
        w_in, b_in = params["w_in"][i], params["b_in"][i]
        w_out = params["w_out"][i]
        w1, b1, w2 = params["w_ff1"][i], params["b_ff1"][i], params["w_ff2"][i]
        vec = params["vecs"][i]
        b_out, ln1_w, ln1_b, b_ff2, ln2_w, ln2_b = (vec[j] for j in range(6))

        qkv = x @ w_in + b_in
        q, k, v = qkv[..., :H], qkv[..., H:2 * H], qkv[..., 2 * H:]
        q = q.reshape(B, T, nhead, dh).transpose(0, 2, 1, 3) * scale
        k = k.reshape(B, T, nhead, dh).transpose(0, 2, 1, 3)
        v = v.reshape(B, T, nhead, dh).transpose(0, 2, 1, 3)
        s = jnp.einsum("bhtd,bhsd->bhts", q, k)
        p = jax.nn.softmax(s, axis=-1)
        o = jnp.einsum("bhts,bhsd->bhtd", p, v).transpose(0, 2, 1, 3).reshape(B, T, H)
        x = ln(x + (o @ w_out + b_out), ln1_w, ln1_b)
        h1 = jnp.maximum(x @ w1 + b1, 0.0)
        x = ln(x + (h1 @ w2 + b_ff2), ln2_w, ln2_b)
    return x.mean(axis=1)


if __name__ == "__main__":
    # Small deterministic config consistent with BEHRTModel_Lab:
    #   batch=2, lab_token_count=8, hidden_size=32, nhead=4, num_layers=2, ffn=64
    B, T, H, NH, L, FF = 2, 8, 32, 4, 2, 64

    key = jax.random.PRNGKey(0)
    k_params, k_lab = jax.random.split(key)
    params = init_params(k_params, T, H, L, FF)
    lab_features = jax.random.normal(k_lab, (B, T), jnp.float32)

    out = behrt_lab_forward(lab_features, params, nhead=NH)
    out = jax.block_until_ready(out)
    assert out.shape == (B, H)

    ref = _reference(lab_features, params, nhead=NH)
    # Tolerance covers MXU-vs-XLA f32 matmul precision differences across chips.
    assert jnp.allclose(out, ref, rtol=1e-2, atol=1e-2), \
        float(jnp.max(jnp.abs(out - ref)))

    # bf16 weight/input storage (v6e/v7x feedback): halves HBM traffic, f32 accumulate.
    out_bf16 = jax.block_until_ready(
        behrt_lab_forward(lab_features, params, nhead=NH, compute_dtype=jnp.bfloat16))
    assert out_bf16.shape == (B, H)
    assert jnp.allclose(out_bf16, ref, rtol=1e-1, atol=1e-1)

    print("KERNEL_OK")
</pallas_src>

<mosaic_0001>
module attributes {stable_mosaic.version = 11 : i64} {
  func.func @_behrt_lab_kernel(%arg0: i32, %arg1: memref<2x8xf32, #tpu.memory_space<vmem>>, %arg2: memref<2x32xf32, #tpu.memory_space<vmem>>, %arg3: memref<8x32xf32, #tpu.memory_space<vmem>>, %arg4: memref<2x32x96xf32, #tpu.memory_space<vmem>>, %arg5: memref<2x96xf32, #tpu.memory_space<vmem>>, %arg6: memref<2x32x32xf32, #tpu.memory_space<vmem>>, %arg7: memref<2x32x64xf32, #tpu.memory_space<vmem>>, %arg8: memref<2x64xf32, #tpu.memory_space<vmem>>, %arg9: memref<2x64x32xf32, #tpu.memory_space<vmem>>, %arg10: memref<2x6x32xf32, #tpu.memory_space<vmem>>, %arg11: memref<2x32xf32, #tpu.memory_space<vmem>>) attributes {dimension_semantics = [#tpu.dimension_semantics<parallel>], iteration_bounds = array<i64: 1>, scalar_prefetch = 0 : i64, scratch_operands = 0 : i64, tpu.core_type = #tpu.core_type<tc>, window_params = [{transform_indices = @transform_0, window_bounds = array<i64: 2, 8>}, {pipeline_mode = #tpu.pipeline_mode<synchronous>, transform_indices = @transform_1, window_bounds = array<i64: 2, 32>}, {pipeline_mode = #tpu.pipeline_mode<synchronous>, transform_indices = @transform_2, window_bounds = array<i64: 8, 32>}, {pipeline_mode = #tpu.pipeline_mode<synchronous>, transform_indices = @transform_3, window_bounds = array<i64: 2, 32, 96>}, {pipeline_mode = #tpu.pipeline_mode<synchronous>, transform_indices = @transform_4, window_bounds = array<i64: 2, 96>}, {pipeline_mode = #tpu.pipeline_mode<synchronous>, transform_indices = @transform_5, window_bounds = array<i64: 2, 32, 32>}, {pipeline_mode = #tpu.pipeline_mode<synchronous>, transform_indices = @transform_6, window_bounds = array<i64: 2, 32, 64>}, {pipeline_mode = #tpu.pipeline_mode<synchronous>, transform_indices = @transform_7, window_bounds = array<i64: 2, 64>}, {pipeline_mode = #tpu.pipeline_mode<synchronous>, transform_indices = @transform_8, window_bounds = array<i64: 2, 64, 32>}, {pipeline_mode = #tpu.pipeline_mode<synchronous>, transform_indices = @transform_9, window_bounds = array<i64: 2, 6, 32>}, {transform_indices = @transform_10, window_bounds = array<i64: 2, 32>}]} {
    %c0 = arith.constant 0 : index
    %c0_0 = arith.constant 0 : index
    %0 = vector.load %arg1[%c0, %c0_0] : memref<2x8xf32, #tpu.memory_space<vmem>>, vector<2x8xf32>
    %c0_1 = arith.constant 0 : index
    %c0_2 = arith.constant 0 : index
    %1 = vector.load %arg2[%c0_1, %c0_2] : memref<2x32xf32, #tpu.memory_space<vmem>>, vector<2x32xf32>
    %c0_3 = arith.constant 0 : index
    %c0_4 = arith.constant 0 : index
    %2 = vector.load %arg3[%c0_3, %c0_4] : memref<8x32xf32, #tpu.memory_space<vmem>>, vector<8x32xf32>
    %3 = vector.shape_cast %0 : vector<2x8xf32> to vector<2x8x1xf32>
    %4 = vector.extract_strided_slice %1 {offsets = [0, 0], sizes = [1, 32], strides = [1, 1]} : vector<2x32xf32> to vector<1x32xf32>
    %5 = vector.shape_cast %4 : vector<1x32xf32> to vector<1x1x32xf32>
    %6 = vector.broadcast %3 : vector<2x8x1xf32> to vector<2x8x32xf32>
    %7 = vector.broadcast %5 : vector<1x1x32xf32> to vector<2x8x32xf32>
    %8 = arith.mulf %6, %7 : vector<2x8x32xf32>
    %9 = vector.extract_strided_slice %1 {offsets = [1, 0], sizes = [1, 32], strides = [1, 1]} : vector<2x32xf32> to vector<1x32xf32>
    %10 = vector.shape_cast %9 : vector<1x32xf32> to vector<1x1x32xf32>
    %11 = vector.broadcast %10 : vector<1x1x32xf32> to vector<2x8x32xf32>
    %12 = arith.addf %8, %11 : vector<2x8x32xf32>
    %13 = vector.shape_cast %2 : vector<8x32xf32> to vector<1x8x32xf32>
    %14 = vector.broadcast %13 : vector<1x8x32xf32> to vector<2x8x32xf32>
    %15 = arith.addf %12, %14 : vector<2x8x32xf32>
    %16 = vector.shape_cast %15 : vector<2x8x32xf32> to vector<16x32xf32>
    %c0_5 = arith.constant 0 : index
    %c0_6 = arith.constant 0 : index
    %17 = vector.load %arg5[%c0_5, %c0_6] : memref<2x96xf32, #tpu.memory_space<vmem>>, vector<2x96xf32>
    %c0_7 = arith.constant 0 : index
    %c0_8 = arith.constant 0 : index
    %18 = vector.load %arg8[%c0_7, %c0_8] : memref<2x64xf32, #tpu.memory_space<vmem>>, vector<2x64xf32>
    %c0_9 = arith.constant 0 : index
    %c0_10 = arith.constant 0 : index
    %c0_11 = arith.constant 0 : index
    %19 = vector.load %arg10[%c0_9, %c0_10, %c0_11] : memref<2x6x32xf32, #tpu.memory_space<vmem>>, vector<2x6x32xf32>
    %c0_12 = arith.constant 0 : index
    %c0_13 = arith.constant 0 : index
    %c0_14 = arith.constant 0 : index
    %20 = vector.load %arg4[%c0_12, %c0_13, %c0_14] : memref<2x32x96xf32, #tpu.memory_space<vmem>>, vector<1x32x96xf32>
    %21 = vector.shape_cast %20 : vector<1x32x96xf32> to vector<32x96xf32>
    %c0_15 = arith.constant 0 : index
    %c0_16 = arith.constant 0 : index
    %c0_17 = arith.constant 0 : index
    %22 = vector.load %arg6[%c0_15, %c0_16, %c0_17] : memref<2x32x32xf32, #tpu.memory_space<vmem>>, vector<1x32x32xf32>
    %23 = vector.shape_cast %22 : vector<1x32x32xf32> to vector<32x32xf32>
    %c0_18 = arith.constant 0 : index
    %c0_19 = arith.constant 0 : index
    %c0_20 = arith.constant 0 : index
    %24 = vector.load %arg7[%c0_18, %c0_19, %c0_20] : memref<2x32x64xf32, #tpu.memory_space<vmem>>, vector<1x32x64xf32>
    %25 = vector.shape_cast %24 : vector<1x32x64xf32> to vector<32x64xf32>
    %c0_21 = arith.constant 0 : index
    %c0_22 = arith.constant 0 : index
    %c0_23 = arith.constant 0 : index
    %26 = vector.load %arg9[%c0_21, %c0_22, %c0_23] : memref<2x64x32xf32, #tpu.memory_space<vmem>>, vector<1x64x32xf32>
    %27 = vector.shape_cast %26 : vector<1x64x32xf32> to vector<64x32xf32>
    %28 = vector.extract_strided_slice %17 {offsets = [0, 0], sizes = [1, 96], strides = [1, 1]} : vector<2x96xf32> to vector<1x96xf32>
    %29 = vector.extract_strided_slice %18 {offsets = [0, 0], sizes = [1, 64], strides = [1, 1]} : vector<2x64xf32> to vector<1x64xf32>
    %30 = vector.extract_strided_slice %19 {offsets = [0, 0, 0], sizes = [1, 6, 32], strides = [1, 1, 1]} : vector<2x6x32xf32> to vector<1x6x32xf32>
    %31 = vector.shape_cast %30 : vector<1x6x32xf32> to vector<6x32xf32>
    %32 = vector.extract_strided_slice %31 {offsets = [0, 0], sizes = [1, 32], strides = [1, 1]} : vector<6x32xf32> to vector<1x32xf32>
    %33 = vector.extract_strided_slice %31 {offsets = [1, 0], sizes = [1, 32], strides = [1, 1]} : vector<6x32xf32> to vector<1x32xf32>
    %34 = vector.extract_strided_slice %31 {offsets = [2, 0], sizes = [1, 32], strides = [1, 1]} : vector<6x32xf32> to vector<1x32xf32>
    %35 = vector.extract_strided_slice %31 {offsets = [3, 0], sizes = [1, 32], strides = [1, 1]} : vector<6x32xf32> to vector<1x32xf32>
    %36 = vector.extract_strided_slice %31 {offsets = [4, 0], sizes = [1, 32], strides = [1, 1]} : vector<6x32xf32> to vector<1x32xf32>
    %37 = vector.extract_strided_slice %31 {offsets = [5, 0], sizes = [1, 32], strides = [1, 1]} : vector<6x32xf32> to vector<1x32xf32>
    %cst = arith.constant dense<0.000000e+00> : vector<16x96xf32>
    %38 = tpu.matmul %16, %21, %cst {dimension_numbers = #tpu.dot_dimension_numbers<[1], [0], [0], [1], [0, 0, 1, 1], [], []>} : vector<16x32xf32>, vector<32x96xf32>, vector<16x96xf32> -> vector<16x96xf32>
    %39 = vector.broadcast %28 : vector<1x96xf32> to vector<16x96xf32>
    %40 = arith.addf %38, %39 : vector<16x96xf32>
    %41 = vector.extract_strided_slice %40 {offsets = [0, 0], sizes = [16, 32], strides = [1, 1]} : vector<16x96xf32> to vector<16x32xf32>
    %42 = vector.shape_cast %41 : vector<16x32xf32> to vector<2x8x32xf32>
    %cst_24 = arith.constant 0.353553385 : f32
    %43 = vector.broadcast %cst_24 : f32 to vector<2x8x32xf32>
    %44 = arith.mulf %42, %43 : vector<2x8x32xf32>
    %45 = vector.extract_strided_slice %40 {offsets = [0, 32], sizes = [16, 32], strides = [1, 1]} : vector<16x96xf32> to vector<16x32xf32>
    %46 = vector.shape_cast %45 : vector<16x32xf32> to vector<2x8x32xf32>
    %47 = vector.extract_strided_slice %40 {offsets = [0, 64], sizes = [16, 32], strides = [1, 1]} : vector<16x96xf32> to vector<16x32xf32>
    %48 = vector.shape_cast %47 : vector<16x32xf32> to vector<2x8x32xf32>
    %cst_25 = arith.constant 0.000000e+00 : f32
    %49 = vector.broadcast %cst_25 : f32 to vector<16x32xf32>
    %50 = vector.extract_strided_slice %44 {offsets = [0, 0, 0], sizes = [2, 8, 8], strides = [1, 1, 1]} : vector<2x8x32xf32> to vector<2x8x8xf32>
    %51 = vector.extract_strided_slice %46 {offsets = [0, 0, 0], sizes = [2, 8, 8], strides = [1, 1, 1]} : vector<2x8x32xf32> to vector<2x8x8xf32>
    "tpu.trace_start"() <{level = 10 : i32, message = "btd,bsd->bts"}> : () -> ()
    %cst_26 = arith.constant dense<0.000000e+00> : vector<2x8x8xf32>
    %52 = tpu.matmul %50, %51, %cst_26 {dimension_numbers = #tpu.dot_dimension_numbers<[2], [2], [1], [1], [0, 0, 0, 1, 1, 1], [0], [0]>} : vector<2x8x8xf32>, vector<2x8x8xf32>, vector<2x8x8xf32> -> vector<2x8x8xf32>
    "tpu.trace_stop"() : () -> ()
    %cst_27 = arith.constant dense<0xFF800000> : vector<2x8xf32>
    %53 = vector.multi_reduction <maximumf>, %52, %cst_27 [2] : vector<2x8x8xf32> to vector<2x8xf32>
    %54 = vector.shape_cast %53 : vector<2x8xf32> to vector<2x8x1xf32>
    %55 = vector.broadcast %54 : vector<2x8x1xf32> to vector<2x8x8xf32>
    %56 = arith.subf %52, %55 : vector<2x8x8xf32>
    %57 = math.exp %56 : vector<2x8x8xf32>
    %cst_28 = arith.constant dense<0.000000e+00> : vector<2x8xf32>
    %58 = vector.multi_reduction <add>, %57, %cst_28 [2] : vector<2x8x8xf32> to vector<2x8xf32>
    %59 = vector.shape_cast %58 : vector<2x8xf32> to vector<2x8x1xf32>
    %60 = vector.broadcast %59 : vector<2x8x1xf32> to vector<2x8x8xf32>
    %61 = arith.divf %57, %60 : vector<2x8x8xf32>
    %62 = vector.extract_strided_slice %48 {offsets = [0, 0, 0], sizes = [2, 8, 8], strides = [1, 1, 1]} : vector<2x8x32xf32> to vector<2x8x8xf32>
    "tpu.trace_start"() <{level = 10 : i32, message = "bts,bsd->btd"}> : () -> ()
    %cst_29 = arith.constant dense<0.000000e+00> : vector<2x8x8xf32>
    %63 = tpu.matmul %61, %62, %cst_29 {dimension_numbers = #tpu.dot_dimension_numbers<[2], [1], [1], [2], [0, 0, 0, 1, 1, 2], [0], [0]>} : vector<2x8x8xf32>, vector<2x8x8xf32>, vector<2x8x8xf32> -> vector<2x8x8xf32>
    "tpu.trace_stop"() : () -> ()
    %64 = vector.shape_cast %63 : vector<2x8x8xf32> to vector<16x8xf32>
    %65 = vector.extract_strided_slice %23 {offsets = [0, 0], sizes = [8, 32], strides = [1, 1]} : vector<32x32xf32> to vector<8x32xf32>
    %cst_30 = arith.constant dense<0.000000e+00> : vector<16x32xf32>
    %66 = tpu.matmul %64, %65, %cst_30 {dimension_numbers = #tpu.dot_dimension_numbers<[1], [0], [0], [1], [0, 0, 1, 1], [], []>} : vector<16x8xf32>, vector<8x32xf32>, vector<16x32xf32> -> vector<16x32xf32>
    %67 = arith.addf %49, %66 : vector<16x32xf32>
    %68 = vector.extract_strided_slice %44 {offsets = [0, 0, 8], sizes = [2, 8, 8], strides = [1, 1, 1]} : vector<2x8x32xf32> to vector<2x8x8xf32>
    %69 = vector.extract_strided_slice %46 {offsets = [0, 0, 8], sizes = [2, 8, 8], strides = [1, 1, 1]} : vector<2x8x32xf32> to vector<2x8x8xf32>
    "tpu.trace_start"() <{level = 10 : i32, message = "btd,bsd->bts"}> : () -> ()
    %cst_31 = arith.constant dense<0.000000e+00> : vector<2x8x8xf32>
    %70 = tpu.matmul %68, %69, %cst_31 {dimension_numbers = #tpu.dot_dimension_numbers<[2], [2], [1], [1], [0, 0, 0, 1, 1, 1], [0], [0]>} : vector<2x8x8xf32>, vector<2x8x8xf32>, vector<2x8x8xf32> -> vector<2x8x8xf32>
    "tpu.trace_stop"() : () -> ()
    %cst_32 = arith.constant dense<0xFF800000> : vector<2x8xf32>
    %71 = vector.multi_reduction <maximumf>, %70, %cst_32 [2] : vector<2x8x8xf32> to vector<2x8xf32>
    %72 = vector.shape_cast %71 : vector<2x8xf32> to vector<2x8x1xf32>
    %73 = vector.broadcast %72 : vector<2x8x1xf32> to vector<2x8x8xf32>
    %74 = arith.subf %70, %73 : vector<2x8x8xf32>
    %75 = math.exp %74 : vector<2x8x8xf32>
    %cst_33 = arith.constant dense<0.000000e+00> : vector<2x8xf32>
    %76 = vector.multi_reduction <add>, %75, %cst_33 [2] : vector<2x8x8xf32> to vector<2x8xf32>
    %77 = vector.shape_cast %76 : vector<2x8xf32> to vector<2x8x1xf32>
    %78 = vector.broadcast %77 : vector<2x8x1xf32> to vector<2x8x8xf32>
    %79 = arith.divf %75, %78 : vector<2x8x8xf32>
    %80 = vector.extract_strided_slice %48 {offsets = [0, 0, 8], sizes = [2, 8, 8], strides = [1, 1, 1]} : vector<2x8x32xf32> to vector<2x8x8xf32>
    "tpu.trace_start"() <{level = 10 : i32, message = "bts,bsd->btd"}> : () -> ()
    %cst_34 = arith.constant dense<0.000000e+00> : vector<2x8x8xf32>
    %81 = tpu.matmul %79, %80, %cst_34 {dimension_numbers = #tpu.dot_dimension_numbers<[2], [1], [1], [2], [0, 0, 0, 1, 1, 2], [0], [0]>} : vector<2x8x8xf32>, vector<2x8x8xf32>, vector<2x8x8xf32> -> vector<2x8x8xf32>
    "tpu.trace_stop"() : () -> ()
    %82 = vector.shape_cast %81 : vector<2x8x8xf32> to vector<16x8xf32>
    %83 = vector.extract_strided_slice %23 {offsets = [8, 0], sizes = [8, 32], strides = [1, 1]} : vector<32x32xf32> to vector<8x32xf32>
    %cst_35 = arith.constant dense<0.000000e+00> : vector<16x32xf32>
    %84 = tpu.matmul %82, %83, %cst_35 {dimension_numbers = #tpu.dot_dimension_numbers<[1], [0], [0], [1], [0, 0, 1, 1], [], []>} : vector<16x8xf32>, vector<8x32xf32>, vector<16x32xf32> -> vector<16x32xf32>
    %85 = arith.addf %67, %84 : vector<16x32xf32>
    %86 = vector.extract_strided_slice %44 {offsets = [0, 0, 16], sizes = [2, 8, 8], strides = [1, 1, 1]} : vector<2x8x32xf32> to vector<2x8x8xf32>
    %87 = vector.extract_strided_slice %46 {offsets = [0, 0, 16], sizes = [2, 8, 8], strides = [1, 1, 1]} : vector<2x8x32xf32> to vector<2x8x8xf32>
    "tpu.trace_start"() <{level = 10 : i32, message = "btd,bsd->bts"}> : () -> ()
    %cst_36 = arith.constant dense<0.000000e+00> : vector<2x8x8xf32>
    %88 = tpu.matmul %86, %87, %cst_36 {dimension_numbers = #tpu.dot_dimension_numbers<[2], [2], [1], [1], [0, 0, 0, 1, 1, 1], [0], [0]>} : vector<2x8x8xf32>, vector<2x8x8xf32>, vector<2x8x8xf32> -> vector<2x8x8xf32>
    "tpu.trace_stop"() : () -> ()
    %cst_37 = arith.constant dense<0xFF800000> : vector<2x8xf32>
    %89 = vector.multi_reduction <maximumf>, %88, %cst_37 [2] : vector<2x8x8xf32> to vector<2x8xf32>
    %90 = vector.shape_cast %89 : vector<2x8xf32> to vector<2x8x1xf32>
    %91 = vector.broadcast %90 : vector<2x8x1xf32> to vector<2x8x8xf32>
    %92 = arith.subf %88, %91 : vector<2x8x8xf32>
    %93 = math.exp %92 : vector<2x8x8xf32>
    %cst_38 = arith.constant dense<0.000000e+00> : vector<2x8xf32>
    %94 = vector.multi_reduction <add>, %93, %cst_38 [2] : vector<2x8x8xf32> to vector<2x8xf32>
    %95 = vector.shape_cast %94 : vector<2x8xf32> to vector<2x8x1xf32>
    %96 = vector.broadcast %95 : vector<2x8x1xf32> to vector<2x8x8xf32>
    %97 = arith.divf %93, %96 : vector<2x8x8xf32>
    %98 = vector.extract_strided_slice %48 {offsets = [0, 0, 16], sizes = [2, 8, 8], strides = [1, 1, 1]} : vector<2x8x32xf32> to vector<2x8x8xf32>
    "tpu.trace_start"() <{level = 10 : i32, message = "bts,bsd->btd"}> : () -> ()
    %cst_39 = arith.constant dense<0.000000e+00> : vector<2x8x8xf32>
    %99 = tpu.matmul %97, %98, %cst_39 {dimension_numbers = #tpu.dot_dimension_numbers<[2], [1], [1], [2], [0, 0, 0, 1, 1, 2], [0], [0]>} : vector<2x8x8xf32>, vector<2x8x8xf32>, vector<2x8x8xf32> -> vector<2x8x8xf32>
    "tpu.trace_stop"() : () -> ()
    %100 = vector.shape_cast %99 : vector<2x8x8xf32> to vector<16x8xf32>
    %101 = vector.extract_strided_slice %23 {offsets = [16, 0], sizes = [8, 32], strides = [1, 1]} : vector<32x32xf32> to vector<8x32xf32>
    %cst_40 = arith.constant dense<0.000000e+00> : vector<16x32xf32>
    %102 = tpu.matmul %100, %101, %cst_40 {dimension_numbers = #tpu.dot_dimension_numbers<[1], [0], [0], [1], [0, 0, 1, 1], [], []>} : vector<16x8xf32>, vector<8x32xf32>, vector<16x32xf32> -> vector<16x32xf32>
    %103 = arith.addf %85, %102 : vector<16x32xf32>
    %104 = vector.extract_strided_slice %44 {offsets = [0, 0, 24], sizes = [2, 8, 8], strides = [1, 1, 1]} : vector<2x8x32xf32> to vector<2x8x8xf32>
    %105 = vector.extract_strided_slice %46 {offsets = [0, 0, 24], sizes = [2, 8, 8], strides = [1, 1, 1]} : vector<2x8x32xf32> to vector<2x8x8xf32>
    "tpu.trace_start"() <{level = 10 : i32, message = "btd,bsd->bts"}> : () -> ()
    %cst_41 = arith.constant dense<0.000000e+00> : vector<2x8x8xf32>
    %106 = tpu.matmul %104, %105, %cst_41 {dimension_numbers = #tpu.dot_dimension_numbers<[2], [2], [1], [1], [0, 0, 0, 1, 1, 1], [0], [0]>} : vector<2x8x8xf32>, vector<2x8x8xf32>, vector<2x8x8xf32> -> vector<2x8x8xf32>
    "tpu.trace_stop"() : () -> ()
    %cst_42 = arith.constant dense<0xFF800000> : vector<2x8xf32>
    %107 = vector.multi_reduction <maximumf>, %106, %cst_42 [2] : vector<2x8x8xf32> to vector<2x8xf32>
    %108 = vector.shape_cast %107 : vector<2x8xf32> to vector<2x8x1xf32>
    %109 = vector.broadcast %108 : vector<2x8x1xf32> to vector<2x8x8xf32>
    %110 = arith.subf %106, %109 : vector<2x8x8xf32>
    %111 = math.exp %110 : vector<2x8x8xf32>
    %cst_43 = arith.constant dense<0.000000e+00> : vector<2x8xf32>
    %112 = vector.multi_reduction <add>, %111, %cst_43 [2] : vector<2x8x8xf32> to vector<2x8xf32>
    %113 = vector.shape_cast %112 : vector<2x8xf32> to vector<2x8x1xf32>
    %114 = vector.broadcast %113 : vector<2x8x1xf32> to vector<2x8x8xf32>
    %115 = arith.divf %111, %114 : vector<2x8x8xf32>
    %116 = vector.extract_strided_slice %48 {offsets = [0, 0, 24], sizes = [2, 8, 8], strides = [1, 1, 1]} : vector<2x8x32xf32> to vector<2x8x8xf32>
    "tpu.trace_start"() <{level = 10 : i32, message = "bts,bsd->btd"}> : () -> ()
    %cst_44 = arith.constant dense<0.000000e+00> : vector<2x8x8xf32>
    %117 = tpu.matmul %115, %116, %cst_44 {dimension_numbers = #tpu.dot_dimension_numbers<[2], [1], [1], [2], [0, 0, 0, 1, 1, 2], [0], [0]>} : vector<2x8x8xf32>, vector<2x8x8xf32>, vector<2x8x8xf32> -> vector<2x8x8xf32>
    "tpu.trace_stop"() : () -> ()
    %118 = vector.shape_cast %117 : vector<2x8x8xf32> to vector<16x8xf32>
    %119 = vector.extract_strided_slice %23 {offsets = [24, 0], sizes = [8, 32], strides = [1, 1]} : vector<32x32xf32> to vector<8x32xf32>
    %cst_45 = arith.constant dense<0.000000e+00> : vector<16x32xf32>
    %120 = tpu.matmul %118, %119, %cst_45 {dimension_numbers = #tpu.dot_dimension_numbers<[1], [0], [0], [1], [0, 0, 1, 1], [], []>} : vector<16x8xf32>, vector<8x32xf32>, vector<16x32xf32> -> vector<16x32xf32>
    %121 = arith.addf %103, %120 : vector<16x32xf32>
    %122 = arith.addf %16, %121 : vector<16x32xf32>
    %123 = vector.broadcast %32 : vector<1x32xf32> to vector<16x32xf32>
    %124 = arith.addf %122, %123 : vector<16x32xf32>
    %cst_46 = arith.constant dense<0.000000e+00> : vector<16xf32>
    %125 = vector.multi_reduction <add>, %124, %cst_46 [1] : vector<16x32xf32> to vector<16xf32>
    %126 = vector.shape_cast %125 : vector<16xf32> to vector<16x1xf32>
    %cst_47 = arith.constant 3.200000e+01 : f32
    %127 = vector.broadcast %cst_47 : f32 to vector<16x1xf32>
    %128 = arith.divf %126, %127 : vector<16x1xf32>
    %129 = vector.broadcast %128 : vector<16x1xf32> to vector<16x32xf32>
    %130 = arith.subf %124, %129 : vector<16x32xf32>
    %131 = arith.mulf %130, %130 : vector<16x32xf32>
    %cst_48 = arith.constant dense<0.000000e+00> : vector<16xf32>
    %132 = vector.multi_reduction <add>, %131, %cst_48 [1] : vector<16x32xf32> to vector<16xf32>
    %133 = vector.shape_cast %132 : vector<16xf32> to vector<16x1xf32>
    %cst_49 = arith.constant 3.200000e+01 : f32
    %134 = vector.broadcast %cst_49 : f32 to vector<16x1xf32>
    %135 = arith.divf %133, %134 : vector<16x1xf32>
    %cst_50 = arith.constant 9.99999974E-6 : f32
    %136 = vector.broadcast %cst_50 : f32 to vector<16x1xf32>
    %137 = arith.addf %135, %136 : vector<16x1xf32>
    %138 = math.rsqrt %137 : vector<16x1xf32>
    %139 = vector.broadcast %138 : vector<16x1xf32> to vector<16x32xf32>
    %140 = arith.mulf %130, %139 : vector<16x32xf32>
    %141 = vector.broadcast %33 : vector<1x32xf32> to vector<16x32xf32>
    %142 = arith.mulf %140, %141 : vector<16x32xf32>
    %143 = vector.broadcast %34 : vector<1x32xf32> to vector<16x32xf32>
    %144 = arith.addf %142, %143 : vector<16x32xf32>
    %cst_51 = arith.constant dense<0.000000e+00> : vector<16x64xf32>
    %145 = tpu.matmul %144, %25, %cst_51 {dimension_numbers = #tpu.dot_dimension_numbers<[1], [0], [0], [1], [0, 0, 1, 1], [], []>} : vector<16x32xf32>, vector<32x64xf32>, vector<16x64xf32> -> vector<16x64xf32>
    %146 = vector.broadcast %29 : vector<1x64xf32> to vector<16x64xf32>
    %147 = arith.addf %145, %146 : vector<16x64xf32>
    %cst_52 = arith.constant 0.000000e+00 : f32
    %148 = vector.broadcast %cst_52 : f32 to vector<16x64xf32>
    %149 = arith.maximumf %147, %148 : vector<16x64xf32>
    %cst_53 = arith.constant dense<0.000000e+00> : vector<16x32xf32>
    %150 = tpu.matmul %149, %27, %cst_53 {dimension_numbers = #tpu.dot_dimension_numbers<[1], [0], [0], [1], [0, 0, 1, 1], [], []>} : vector<16x64xf32>, vector<64x32xf32>, vector<16x32xf32> -> vector<16x32xf32>
    %151 = vector.broadcast %35 : vector<1x32xf32> to vector<16x32xf32>
    %152 = arith.addf %150, %151 : vector<16x32xf32>
    %153 = arith.addf %144, %152 : vector<16x32xf32>
    %cst_54 = arith.constant dense<0.000000e+00> : vector<16xf32>
    %154 = vector.multi_reduction <add>, %153, %cst_54 [1] : vector<16x32xf32> to vector<16xf32>
    %155 = vector.shape_cast %154 : vector<16xf32> to vector<16x1xf32>
    %cst_55 = arith.constant 3.200000e+01 : f32
    %156 = vector.broadcast %cst_55 : f32 to vector<16x1xf32>
    %157 = arith.divf %155, %156 : vector<16x1xf32>
    %158 = vector.broadcast %157 : vector<16x1xf32> to vector<16x32xf32>
    %159 = arith.subf %153, %158 : vector<16x32xf32>
    %160 = arith.mulf %159, %159 : vector<16x32xf32>
    %cst_56 = arith.constant dense<0.000000e+00> : vector<16xf32>
    %161 = vector.multi_reduction <add>, %160, %cst_56 [1] : vector<16x32xf32> to vector<16xf32>
    %162 = vector.shape_cast %161 : vector<16xf32> to vector<16x1xf32>
    %cst_57 = arith.constant 3.200000e+01 : f32
    %163 = vector.broadcast %cst_57 : f32 to vector<16x1xf32>
    %164 = arith.divf %162, %163 : vector<16x1xf32>
    %cst_58 = arith.constant 9.99999974E-6 : f32
    %165 = vector.broadcast %cst_58 : f32 to vector<16x1xf32>
    %166 = arith.addf %164, %165 : vector<16x1xf32>
    %167 = math.rsqrt %166 : vector<16x1xf32>
    %168 = vector.broadcast %167 : vector<16x1xf32> to vector<16x32xf32>
    %169 = arith.mulf %159, %168 : vector<16x32xf32>
    %170 = vector.broadcast %36 : vector<1x32xf32> to vector<16x32xf32>
    %171 = arith.mulf %169, %170 : vector<16x32xf32>
    %172 = vector.broadcast %37 : vector<1x32xf32> to vector<16x32xf32>
    %173 = arith.addf %171, %172 : vector<16x32xf32>
    %c1 = arith.constant 1 : index
    %c0_59 = arith.constant 0 : index
    %c0_60 = arith.constant 0 : index
    %174 = vector.load %arg4[%c1, %c0_59, %c0_60] : memref<2x32x96xf32, #tpu.memory_space<vmem>>, vector<1x32x96xf32>
    %175 = vector.shape_cast %174 : vector<1x32x96xf32> to vector<32x96xf32>
    %c1_61 = arith.constant 1 : index
    %c0_62 = arith.constant 0 : index
    %c0_63 = arith.constant 0 : index
    %176 = vector.load %arg6[%c1_61, %c0_62, %c0_63] : memref<2x32x32xf32, #tpu.memory_space<vmem>>, vector<1x32x32xf32>
    %177 = vector.shape_cast %176 : vector<1x32x32xf32> to vector<32x32xf32>
    %c1_64 = arith.constant 1 : index
    %c0_65 = arith.constant 0 : index
    %c0_66 = arith.constant 0 : index
    %178 = vector.load %arg7[%c1_64, %c0_65, %c0_66] : memref<2x32x64xf32, #tpu.memory_space<vmem>>, vector<1x32x64xf32>
    %179 = vector.shape_cast %178 : vector<1x32x64xf32> to vector<32x64xf32>
    %c1_67 = arith.constant 1 : index
    %c0_68 = arith.constant 0 : index
    %c0_69 = arith.constant 0 : index
    %180 = vector.load %arg9[%c1_67, %c0_68, %c0_69] : memref<2x64x32xf32, #tpu.memory_space<vmem>>, vector<1x64x32xf32>
    %181 = vector.shape_cast %180 : vector<1x64x32xf32> to vector<64x32xf32>
    %182 = vector.extract_strided_slice %17 {offsets = [1, 0], sizes = [1, 96], strides = [1, 1]} : vector<2x96xf32> to vector<1x96xf32>
    %183 = vector.extract_strided_slice %18 {offsets = [1, 0], sizes = [1, 64], strides = [1, 1]} : vector<2x64xf32> to vector<1x64xf32>
    %184 = vector.extract_strided_slice %19 {offsets = [1, 0, 0], sizes = [1, 6, 32], strides = [1, 1, 1]} : vector<2x6x32xf32> to vector<1x6x32xf32>
    %185 = vector.shape_cast %184 : vector<1x6x32xf32> to vector<6x32xf32>
    %186 = vector.extract_strided_slice %185 {offsets = [0, 0], sizes = [1, 32], strides = [1, 1]} : vector<6x32xf32> to vector<1x32xf32>
    %187 = vector.extract_strided_slice %185 {offsets = [1, 0], sizes = [1, 32], strides = [1, 1]} : vector<6x32xf32> to vector<1x32xf32>
    %188 = vector.extract_strided_slice %185 {offsets = [2, 0], sizes = [1, 32], strides = [1, 1]} : vector<6x32xf32> to vector<1x32xf32>
    %189 = vector.extract_strided_slice %185 {offsets = [3, 0], sizes = [1, 32], strides = [1, 1]} : vector<6x32xf32> to vector<1x32xf32>
    %190 = vector.extract_strided_slice %185 {offsets = [4, 0], sizes = [1, 32], strides = [1, 1]} : vector<6x32xf32> to vector<1x32xf32>
    %191 = vector.extract_strided_slice %185 {offsets = [5, 0], sizes = [1, 32], strides = [1, 1]} : vector<6x32xf32> to vector<1x32xf32>
    %cst_70 = arith.constant dense<0.000000e+00> : vector<16x96xf32>
    %192 = tpu.matmul %173, %175, %cst_70 {dimension_numbers = #tpu.dot_dimension_numbers<[1], [0], [0], [1], [0, 0, 1, 1], [], []>} : vector<16x32xf32>, vector<32x96xf32>, vector<16x96xf32> -> vector<16x96xf32>
    %193 = vector.broadcast %182 : vector<1x96xf32> to vector<16x96xf32>
    %194 = arith.addf %192, %193 : vector<16x96xf32>
    %195 = vector.extract_strided_slice %194 {offsets = [0, 0], sizes = [16, 32], strides = [1, 1]} : vector<16x96xf32> to vector<16x32xf32>
    %196 = vector.shape_cast %195 : vector<16x32xf32> to vector<2x8x32xf32>
    %cst_71 = arith.constant 0.353553385 : f32
    %197 = vector.broadcast %cst_71 : f32 to vector<2x8x32xf32>
    %198 = arith.mulf %196, %197 : vector<2x8x32xf32>
    %199 = vector.extract_strided_slice %194 {offsets = [0, 32], sizes = [16, 32], strides = [1, 1]} : vector<16x96xf32> to vector<16x32xf32>
    %200 = vector.shape_cast %199 : vector<16x32xf32> to vector<2x8x32xf32>
    %201 = vector.extract_strided_slice %194 {offsets = [0, 64], sizes = [16, 32], strides = [1, 1]} : vector<16x96xf32> to vector<16x32xf32>
    %202 = vector.shape_cast %201 : vector<16x32xf32> to vector<2x8x32xf32>
    %cst_72 = arith.constant 0.000000e+00 : f32
    %203 = vector.broadcast %cst_72 : f32 to vector<16x32xf32>
    %204 = vector.extract_strided_slice %198 {offsets = [0, 0, 0], sizes = [2, 8, 8], strides = [1, 1, 1]} : vector<2x8x32xf32> to vector<2x8x8xf32>
    %205 = vector.extract_strided_slice %200 {offsets = [0, 0, 0], sizes = [2, 8, 8], strides = [1, 1, 1]} : vector<2x8x32xf32> to vector<2x8x8xf32>
    "tpu.trace_start"() <{level = 10 : i32, message = "btd,bsd->bts"}> : () -> ()
    %cst_73 = arith.constant dense<0.000000e+00> : vector<2x8x8xf32>
    %206 = tpu.matmul %204, %205, %cst_73 {dimension_numbers = #tpu.dot_dimension_numbers<[2], [2], [1], [1], [0, 0, 0, 1, 1, 1], [0], [0]>} : vector<2x8x8xf32>, vector<2x8x8xf32>, vector<2x8x8xf32> -> vector<2x8x8xf32>
    "tpu.trace_stop"() : () -> ()
    %cst_74 = arith.constant dense<0xFF800000> : vector<2x8xf32>
    %207 = vector.multi_reduction <maximumf>, %206, %cst_74 [2] : vector<2x8x8xf32> to vector<2x8xf32>
    %208 = vector.shape_cast %207 : vector<2x8xf32> to vector<2x8x1xf32>
    %209 = vector.broadcast %208 : vector<2x8x1xf32> to vector<2x8x8xf32>
    %210 = arith.subf %206, %209 : vector<2x8x8xf32>
    %211 = math.exp %210 : vector<2x8x8xf32>
    %cst_75 = arith.constant dense<0.000000e+00> : vector<2x8xf32>
    %212 = vector.multi_reduction <add>, %211, %cst_75 [2] : vector<2x8x8xf32> to vector<2x8xf32>
    %213 = vector.shape_cast %212 : vector<2x8xf32> to vector<2x8x1xf32>
    %214 = vector.broadcast %213 : vector<2x8x1xf32> to vector<2x8x8xf32>
    %215 = arith.divf %211, %214 : vector<2x8x8xf32>
    %216 = vector.extract_strided_slice %202 {offsets = [0, 0, 0], sizes = [2, 8, 8], strides = [1, 1, 1]} : vector<2x8x32xf32> to vector<2x8x8xf32>
    "tpu.trace_start"() <{level = 10 : i32, message = "bts,bsd->btd"}> : () -> ()
    %cst_76 = arith.constant dense<0.000000e+00> : vector<2x8x8xf32>
    %217 = tpu.matmul %215, %216, %cst_76 {dimension_numbers = #tpu.dot_dimension_numbers<[2], [1], [1], [2], [0, 0, 0, 1, 1, 2], [0], [0]>} : vector<2x8x8xf32>, vector<2x8x8xf32>, vector<2x8x8xf32> -> vector<2x8x8xf32>
    "tpu.trace_stop"() : () -> ()
    %218 = vector.shape_cast %217 : vector<2x8x8xf32> to vector<16x8xf32>
    %219 = vector.extract_strided_slice %177 {offsets = [0, 0], sizes = [8, 32], strides = [1, 1]} : vector<32x32xf32> to vector<8x32xf32>
    %cst_77 = arith.constant dense<0.000000e+00> : vector<16x32xf32>
    %220 = tpu.matmul %218, %219, %cst_77 {dimension_numbers = #tpu.dot_dimension_numbers<[1], [0], [0], [1], [0, 0, 1, 1], [], []>} : vector<16x8xf32>, vector<8x32xf32>, vector<16x32xf32> -> vector<16x32xf32>
    %221 = arith.addf %203, %220 : vector<16x32xf32>
    %222 = vector.extract_strided_slice %198 {offsets = [0, 0, 8], sizes = [2, 8, 8], strides = [1, 1, 1]} : vector<2x8x32xf32> to vector<2x8x8xf32>
    %223 = vector.extract_strided_slice %200 {offsets = [0, 0, 8], sizes = [2, 8, 8], strides = [1, 1, 1]} : vector<2x8x32xf32> to vector<2x8x8xf32>
    "tpu.trace_start"() <{level = 10 : i32, message = "btd,bsd->bts"}> : () -> ()
    %cst_78 = arith.constant dense<0.000000e+00> : vector<2x8x8xf32>
    %224 = tpu.matmul %222, %223, %cst_78 {dimension_numbers = #tpu.dot_dimension_numbers<[2], [2], [1], [1], [0, 0, 0, 1, 1, 1], [0], [0]>} : vector<2x8x8xf32>, vector<2x8x8xf32>, vector<2x8x8xf32> -> vector<2x8x8xf32>
    "tpu.trace_stop"() : () -> ()
    %cst_79 = arith.constant dense<0xFF800000> : vector<2x8xf32>
    %225 = vector.multi_reduction <maximumf>, %224, %cst_79 [2] : vector<2x8x8xf32> to vector<2x8xf32>
    %226 = vector.shape_cast %225 : vector<2x8xf32> to vector<2x8x1xf32>
    %227 = vector.broadcast %226 : vector<2x8x1xf32> to vector<2x8x8xf32>
    %228 = arith.subf %224, %227 : vector<2x8x8xf32>
    %229 = math.exp %228 : vector<2x8x8xf32>
    %cst_80 = arith.constant dense<0.000000e+00> : vector<2x8xf32>
    %230 = vector.multi_reduction <add>, %229, %cst_80 [2] : vector<2x8x8xf32> to vector<2x8xf32>
    %231 = vector.shape_cast %230 : vector<2x8xf32> to vector<2x8x1xf32>
    %232 = vector.broadcast %231 : vector<2x8x1xf32> to vector<2x8x8xf32>
    %233 = arith.divf %229, %232 : vector<2x8x8xf32>
    %234 = vector.extract_strided_slice %202 {offsets = [0, 0, 8], sizes = [2, 8, 8], strides = [1, 1, 1]} : vector<2x8x32xf32> to vector<2x8x8xf32>
    "tpu.trace_start"() <{level = 10 : i32, message = "bts,bsd->btd"}> : () -> ()
    %cst_81 = arith.constant dense<0.000000e+00> : vector<2x8x8xf32>
    %235 = tpu.matmul %233, %234, %cst_81 {dimension_numbers = #tpu.dot_dimension_numbers<[2], [1], [1], [2], [0, 0, 0, 1, 1, 2], [0], [0]>} : vector<2x8x8xf32>, vector<2x8x8xf32>, vector<2x8x8xf32> -> vector<2x8x8xf32>
    "tpu.trace_stop"() : () -> ()
    %236 = vector.shape_cast %235 : vector<2x8x8xf32> to vector<16x8xf32>
    %237 = vector.extract_strided_slice %177 {offsets = [8, 0], sizes = [8, 32], strides = [1, 1]} : vector<32x32xf32> to vector<8x32xf32>
    %cst_82 = arith.constant dense<0.000000e+00> : vector<16x32xf32>
    %238 = tpu.matmul %236, %237, %cst_82 {dimension_numbers = #tpu.dot_dimension_numbers<[1], [0], [0], [1], [0, 0, 1, 1], [], []>} : vector<16x8xf32>, vector<8x32xf32>, vector<16x32xf32> -> vector<16x32xf32>
    %239 = arith.addf %221, %238 : vector<16x32xf32>
    %240 = vector.extract_strided_slice %198 {offsets = [0, 0, 16], sizes = [2, 8, 8], strides = [1, 1, 1]} : vector<2x8x32xf32> to vector<2x8x8xf32>
    %241 = vector.extract_strided_slice %200 {offsets = [0, 0, 16], sizes = [2, 8, 8], strides = [1, 1, 1]} : vector<2x8x32xf32> to vector<2x8x8xf32>
    "tpu.trace_start"() <{level = 10 : i32, message = "btd,bsd->bts"}> : () -> ()
    %cst_83 = arith.constant dense<0.000000e+00> : vector<2x8x8xf32>
    %242 = tpu.matmul %240, %241, %cst_83 {dimension_numbers = #tpu.dot_dimension_numbers<[2], [2], [1], [1], [0, 0, 0, 1, 1, 1], [0], [0]>} : vector<2x8x8xf32>, vector<2x8x8xf32>, vector<2x8x8xf32> -> vector<2x8x8xf32>
    "tpu.trace_stop"() : () -> ()
    %cst_84 = arith.constant dense<0xFF800000> : vector<2x8xf32>
    %243 = vector.multi_reduction <maximumf>, %242, %cst_84 [2] : vector<2x8x8xf32> to vector<2x8xf32>
    %244 = vector.shape_cast %243 : vector<2x8xf32> to vector<2x8x1xf32>
    %245 = vector.broadcast %244 : vector<2x8x1xf32> to vector<2x8x8xf32>
    %246 = arith.subf %242, %245 : vector<2x8x8xf32>
    %247 = math.exp %246 : vector<2x8x8xf32>
    %cst_85 = arith.constant dense<0.000000e+00> : vector<2x8xf32>
    %248 = vector.multi_reduction <add>, %247, %cst_85 [2] : vector<2x8x8xf32> to vector<2x8xf32>
    %249 = vector.shape_cast %248 : vector<2x8xf32> to vector<2x8x1xf32>
    %250 = vector.broadcast %249 : vector<2x8x1xf32> to vector<2x8x8xf32>
    %251 = arith.divf %247, %250 : vector<2x8x8xf32>
    %252 = vector.extract_strided_slice %202 {offsets = [0, 0, 16], sizes = [2, 8, 8], strides = [1, 1, 1]} : vector<2x8x32xf32> to vector<2x8x8xf32>
    "tpu.trace_start"() <{level = 10 : i32, message = "bts,bsd->btd"}> : () -> ()
    %cst_86 = arith.constant dense<0.000000e+00> : vector<2x8x8xf32>
    %253 = tpu.matmul %251, %252, %cst_86 {dimension_numbers = #tpu.dot_dimension_numbers<[2], [1], [1], [2], [0, 0, 0, 1, 1, 2], [0], [0]>} : vector<2x8x8xf32>, vector<2x8x8xf32>, vector<2x8x8xf32> -> vector<2x8x8xf32>
    "tpu.trace_stop"() : () -> ()
    %254 = vector.shape_cast %253 : vector<2x8x8xf32> to vector<16x8xf32>
    %255 = vector.extract_strided_slice %177 {offsets = [16, 0], sizes = [8, 32], strides = [1, 1]} : vector<32x32xf32> to vector<8x32xf32>
    %cst_87 = arith.constant dense<0.000000e+00> : vector<16x32xf32>
    %256 = tpu.matmul %254, %255, %cst_87 {dimension_numbers = #tpu.dot_dimension_numbers<[1], [0], [0], [1], [0, 0, 1, 1], [], []>} : vector<16x8xf32>, vector<8x32xf32>, vector<16x32xf32> -> vector<16x32xf32>
    %257 = arith.addf %239, %256 : vector<16x32xf32>
    %258 = vector.extract_strided_slice %198 {offsets = [0, 0, 24], sizes = [2, 8, 8], strides = [1, 1, 1]} : vector<2x8x32xf32> to vector<2x8x8xf32>
    %259 = vector.extract_strided_slice %200 {offsets = [0, 0, 24], sizes = [2, 8, 8], strides = [1, 1, 1]} : vector<2x8x32xf32> to vector<2x8x8xf32>
    "tpu.trace_start"() <{level = 10 : i32, message = "btd,bsd->bts"}> : () -> ()
    %cst_88 = arith.constant dense<0.000000e+00> : vector<2x8x8xf32>
    %260 = tpu.matmul %258, %259, %cst_88 {dimension_numbers = #tpu.dot_dimension_numbers<[2], [2], [1], [1], [0, 0, 0, 1, 1, 1], [0], [0]>} : vector<2x8x8xf32>, vector<2x8x8xf32>, vector<2x8x8xf32> -> vector<2x8x8xf32>
    "tpu.trace_stop"() : () -> ()
    %cst_89 = arith.constant dense<0xFF800000> : vector<2x8xf32>
    %261 = vector.multi_reduction <maximumf>, %260, %cst_89 [2] : vector<2x8x8xf32> to vector<2x8xf32>
    %262 = vector.shape_cast %261 : vector<2x8xf32> to vector<2x8x1xf32>
    %263 = vector.broadcast %262 : vector<2x8x1xf32> to vector<2x8x8xf32>
    %264 = arith.subf %260, %263 : vector<2x8x8xf32>
    %265 = math.exp %264 : vector<2x8x8xf32>
    %cst_90 = arith.constant dense<0.000000e+00> : vector<2x8xf32>
    %266 = vector.multi_reduction <add>, %265, %cst_90 [2] : vector<2x8x8xf32> to vector<2x8xf32>
    %267 = vector.shape_cast %266 : vector<2x8xf32> to vector<2x8x1xf32>
    %268 = vector.broadcast %267 : vector<2x8x1xf32> to vector<2x8x8xf32>
    %269 = arith.divf %265, %268 : vector<2x8x8xf32>
    %270 = vector.extract_strided_slice %202 {offsets = [0, 0, 24], sizes = [2, 8, 8], strides = [1, 1, 1]} : vector<2x8x32xf32> to vector<2x8x8xf32>
    "tpu.trace_start"() <{level = 10 : i32, message = "bts,bsd->btd"}> : () -> ()
    %cst_91 = arith.constant dense<0.000000e+00> : vector<2x8x8xf32>
    %271 = tpu.matmul %269, %270, %cst_91 {dimension_numbers = #tpu.dot_dimension_numbers<[2], [1], [1], [2], [0, 0, 0, 1, 1, 2], [0], [0]>} : vector<2x8x8xf32>, vector<2x8x8xf32>, vector<2x8x8xf32> -> vector<2x8x8xf32>
    "tpu.trace_stop"() : () -> ()
    %272 = vector.shape_cast %271 : vector<2x8x8xf32> to vector<16x8xf32>
    %273 = vector.extract_strided_slice %177 {offsets = [24, 0], sizes = [8, 32], strides = [1, 1]} : vector<32x32xf32> to vector<8x32xf32>
    %cst_92 = arith.constant dense<0.000000e+00> : vector<16x32xf32>
    %274 = tpu.matmul %272, %273, %cst_92 {dimension_numbers = #tpu.dot_dimension_numbers<[1], [0], [0], [1], [0, 0, 1, 1], [], []>} : vector<16x8xf32>, vector<8x32xf32>, vector<16x32xf32> -> vector<16x32xf32>
    %275 = arith.addf %257, %274 : vector<16x32xf32>
    %276 = arith.addf %173, %275 : vector<16x32xf32>
    %277 = vector.broadcast %186 : vector<1x32xf32> to vector<16x32xf32>
    %278 = arith.addf %276, %277 : vector<16x32xf32>
    %cst_93 = arith.constant dense<0.000000e+00> : vector<16xf32>
    %279 = vector.multi_reduction <add>, %278, %cst_93 [1] : vector<16x32xf32> to vector<16xf32>
    %280 = vector.shape_cast %279 : vector<16xf32> to vector<16x1xf32>
    %cst_94 = arith.constant 3.200000e+01 : f32
    %281 = vector.broadcast %cst_94 : f32 to vector<16x1xf32>
    %282 = arith.divf %280, %281 : vector<16x1xf32>
    %283 = vector.broadcast %282 : vector<16x1xf32> to vector<16x32xf32>
    %284 = arith.subf %278, %283 : vector<16x32xf32>
    %285 = arith.mulf %284, %284 : vector<16x32xf32>
    %cst_95 = arith.constant dense<0.000000e+00> : vector<16xf32>
    %286 = vector.multi_reduction <add>, %285, %cst_95 [1] : vector<16x32xf32> to vector<16xf32>
    %287 = vector.shape_cast %286 : vector<16xf32> to vector<16x1xf32>
    %cst_96 = arith.constant 3.200000e+01 : f32
    %288 = vector.broadcast %cst_96 : f32 to vector<16x1xf32>
    %289 = arith.divf %287, %288 : vector<16x1xf32>
    %cst_97 = arith.constant 9.99999974E-6 : f32
    %290 = vector.broadcast %cst_97 : f32 to vector<16x1xf32>
    %291 = arith.addf %289, %290 : vector<16x1xf32>
    %292 = math.rsqrt %291 : vector<16x1xf32>
    %293 = vector.broadcast %292 : vector<16x1xf32> to vector<16x32xf32>
    %294 = arith.mulf %284, %293 : vector<16x32xf32>
    %295 = vector.broadcast %187 : vector<1x32xf32> to vector<16x32xf32>
    %296 = arith.mulf %294, %295 : vector<16x32xf32>
    %297 = vector.broadcast %188 : vector<1x32xf32> to vector<16x32xf32>
    %298 = arith.addf %296, %297 : vector<16x32xf32>
    %cst_98 = arith.constant dense<0.000000e+00> : vector<16x64xf32>
    %299 = tpu.matmul %298, %179, %cst_98 {dimension_numbers = #tpu.dot_dimension_numbers<[1], [0], [0], [1], [0, 0, 1, 1], [], []>} : vector<16x32xf32>, vector<32x64xf32>, vector<16x64xf32> -> vector<16x64xf32>
    %300 = vector.broadcast %183 : vector<1x64xf32> to vector<16x64xf32>
    %301 = arith.addf %299, %300 : vector<16x64xf32>
    %cst_99 = arith.constant 0.000000e+00 : f32
    %302 = vector.broadcast %cst_99 : f32 to vector<16x64xf32>
    %303 = arith.maximumf %301, %302 : vector<16x64xf32>
    %cst_100 = arith.constant dense<0.000000e+00> : vector<16x32xf32>
    %304 = tpu.matmul %303, %181, %cst_100 {dimension_numbers = #tpu.dot_dimension_numbers<[1], [0], [0], [1], [0, 0, 1, 1], [], []>} : vector<16x64xf32>, vector<64x32xf32>, vector<16x32xf32> -> vector<16x32xf32>
    %305 = vector.broadcast %189 : vector<1x32xf32> to vector<16x32xf32>
    %306 = arith.addf %304, %305 : vector<16x32xf32>
    %307 = arith.addf %298, %306 : vector<16x32xf32>
    %cst_101 = arith.constant dense<0.000000e+00> : vector<16xf32>
    %308 = vector.multi_reduction <add>, %307, %cst_101 [1] : vector<16x32xf32> to vector<16xf32>
    %309 = vector.shape_cast %308 : vector<16xf32> to vector<16x1xf32>
    %cst_102 = arith.constant 3.200000e+01 : f32
    %310 = vector.broadcast %cst_102 : f32 to vector<16x1xf32>
    %311 = arith.divf %309, %310 : vector<16x1xf32>
    %312 = vector.broadcast %311 : vector<16x1xf32> to vector<16x32xf32>
    %313 = arith.subf %307, %312 : vector<16x32xf32>
    %314 = arith.mulf %313, %313 : vector<16x32xf32>
    %cst_103 = arith.constant dense<0.000000e+00> : vector<16xf32>
    %315 = vector.multi_reduction <add>, %314, %cst_103 [1] : vector<16x32xf32> to vector<16xf32>
    %316 = vector.shape_cast %315 : vector<16xf32> to vector<16x1xf32>
    %cst_104 = arith.constant 3.200000e+01 : f32
    %317 = vector.broadcast %cst_104 : f32 to vector<16x1xf32>
    %318 = arith.divf %316, %317 : vector<16x1xf32>
    %cst_105 = arith.constant 9.99999974E-6 : f32
    %319 = vector.broadcast %cst_105 : f32 to vector<16x1xf32>
    %320 = arith.addf %318, %319 : vector<16x1xf32>
    %321 = math.rsqrt %320 : vector<16x1xf32>
    %322 = vector.broadcast %321 : vector<16x1xf32> to vector<16x32xf32>
    %323 = arith.mulf %313, %322 : vector<16x32xf32>
    %324 = vector.broadcast %190 : vector<1x32xf32> to vector<16x32xf32>
    %325 = arith.mulf %323, %324 : vector<16x32xf32>
    %326 = vector.broadcast %191 : vector<1x32xf32> to vector<16x32xf32>
    %327 = arith.addf %325, %326 : vector<16x32xf32>
    %328 = vector.shape_cast %327 : vector<16x32xf32> to vector<2x8x32xf32>
    %cst_106 = arith.constant dense<0.000000e+00> : vector<2x32xf32>
    %329 = vector.multi_reduction <add>, %328, %cst_106 [1] : vector<2x8x32xf32> to vector<2x32xf32>
    %cst_107 = arith.constant 8.000000e+00 : f32
    %330 = vector.broadcast %cst_107 : f32 to vector<2x32xf32>
    %331 = arith.divf %329, %330 : vector<2x32xf32>
    %c0_108 = arith.constant 0 : index
    %c0_109 = arith.constant 0 : index
    %332 = vector.load %arg11[%c0_108, %c0_109] : memref<2x32xf32, #tpu.memory_space<vmem>>, vector<2x32xf32>
    tpu.vector_store %arg11[%c0_108, %c0_109], %331 {strides = array<i32>} : memref<2x32xf32, #tpu.memory_space<vmem>>, vector<2x32xf32>,
    return
  }
  func.func @transform_0(%arg0: i32) -> (i32, i32) {
    %c0_i32 = arith.constant 0 : i32
    %c0_i32_0 = arith.constant 0 : i32
    return %arg0, %c0_i32 : i32, i32
  }
  func.func @transform_1(%arg0: i32) -> (i32, i32) {
    %c0_i32 = arith.constant 0 : i32
    %c0_i32_0 = arith.constant 0 : i32
    %c0_i32_1 = arith.constant 0 : i32
    return %c0_i32, %c0_i32_0 : i32, i32
  }
  func.func @transform_2(%arg0: i32) -> (i32, i32) {
    %c0_i32 = arith.constant 0 : i32
    %c0_i32_0 = arith.constant 0 : i32
    %c0_i32_1 = arith.constant 0 : i32
    return %c0_i32, %c0_i32_0 : i32, i32
  }
  func.func @transform_3(%arg0: i32) -> (i32, i32, i32) {
    %c0_i32 = arith.constant 0 : i32
    %c0_i32_0 = arith.constant 0 : i32
    %c0_i32_1 = arith.constant 0 : i32
    %c0_i32_2 = arith.constant 0 : i32
    return %c0_i32, %c0_i32_0, %c0_i32_1 : i32, i32, i32
  }
  func.func @transform_4(%arg0: i32) -> (i32, i32) {
    %c0_i32 = arith.constant 0 : i32
    %c0_i32_0 = arith.constant 0 : i32
    %c0_i32_1 = arith.constant 0 : i32
    return %c0_i32, %c0_i32_0 : i32, i32
  }
  func.func @transform_5(%arg0: i32) -> (i32, i32, i32) {
    %c0_i32 = arith.constant 0 : i32
    %c0_i32_0 = arith.constant 0 : i32
    %c0_i32_1 = arith.constant 0 : i32
    %c0_i32_2 = arith.constant 0 : i32
    return %c0_i32, %c0_i32_0, %c0_i32_1 : i32, i32, i32
  }
  func.func @transform_6(%arg0: i32) -> (i32, i32, i32) {
    %c0_i32 = arith.constant 0 : i32
    %c0_i32_0 = arith.constant 0 : i32
    %c0_i32_1 = arith.constant 0 : i32
    %c0_i32_2 = arith.constant 0 : i32
    return %c0_i32, %c0_i32_0, %c0_i32_1 : i32, i32, i32
  }
  func.func @transform_7(%arg0: i32) -> (i32, i32) {
    %c0_i32 = arith.constant 0 : i32
    %c0_i32_0 = arith.constant 0 : i32
    %c0_i32_1 = arith.constant 0 : i32
    return %c0_i32, %c0_i32_0 : i32, i32
  }
  func.func @transform_8(%arg0: i32) -> (i32, i32, i32) {
    %c0_i32 = arith.constant 0 : i32
    %c0_i32_0 = arith.constant 0 : i32
    %c0_i32_1 = arith.constant 0 : i32
    %c0_i32_2 = arith.constant 0 : i32
    return %c0_i32, %c0_i32_0, %c0_i32_1 : i32, i32, i32
  }
  func.func @transform_9(%arg0: i32) -> (i32, i32, i32) {
    %c0_i32 = arith.constant 0 : i32
    %c0_i32_0 = arith.constant 0 : i32
    %c0_i32_1 = arith.constant 0 : i32
    %c0_i32_2 = arith.constant 0 : i32
    return %c0_i32, %c0_i32_0, %c0_i32_1 : i32, i32, i32
  }
  func.func @transform_10(%arg0: i32) -> (i32, i32) {
    %c0_i32 = arith.constant 0 : i32
    %c0_i32_0 = arith.constant 0 : i32
    return %arg0, %c0_i32 : i32, i32
  }
}

</mosaic_0001>

<llo_original>
// kernel: tpu_custom_call.1
$region0: #{tpu_custom_call.1}
  #allocation0 [shape = 'u32[]', space=smem, size = 0x4, offset = 0x4, fixed_abs, tag = 'smem constant byte address 0x4 - core index']
  #allocation1 [shape = 'u32[144,128]{1,0:T(1,128)}', space=vmem, size = 0x12000, scoped, tag = 'internal scratch']
  %s0 = inlined_call_operand.vmem [shape: f32[2,8], index: 0, kind: input, shape index: {}]
  %s1 = inlined_call_operand.vmem [shape: f32[2,32], index: 1, kind: input, shape index: {}]
  %s2 = inlined_call_operand.vmem [shape: f32[8,32], index: 2, kind: input, shape index: {}]
  %s3 = inlined_call_operand.vmem [shape: f32[2,32,96], index: 3, kind: input, shape index: {}]
  %s4 = inlined_call_operand.vmem [shape: f32[2,96], index: 4, kind: input, shape index: {}]
  %s5 = inlined_call_operand.vmem [shape: f32[2,32,32], index: 5, kind: input, shape index: {}]
  %s6 = inlined_call_operand.vmem [shape: f32[2,32,64], index: 6, kind: input, shape index: {}]
  %s7 = inlined_call_operand.vmem [shape: f32[2,64], index: 7, kind: input, shape index: {}]
  %s8 = inlined_call_operand.vmem [shape: f32[2,64,32], index: 8, kind: input, shape index: {}]
  %s9 = inlined_call_operand.vmem [shape: f32[2,6,32], index: 9, kind: input, shape index: {}]
  %s10 = inlined_call_operand.hbm [shape: f32[2,32], index: 10, kind: output, shape index: {}]
  %s11 = sld [smem:[#allocation0]]
  $region50: #{tpu_custom_call.1} parent=0
    _
  %s13 = ssub.s32 1, %s11
  %s14 = scalar_select 0, %s13, %s11
  $region1: #{tpu_custom_call.1} parent=0
    #allocation2 [shape = 'u8[1024]{0}', space=vmem, size = 0x400, scoped, tag = 'output window, operand 0, single buffered']
    #allocation3 [shape = 's32[1]{0}', space=sflag, size = 0x4, scoped, tag = 'scoped memory for tpu_custom_call.1']
    %15 = vsyncpa [#allocation3], 0
    // Predicated region
    $region2: #{tpu_custom_call.1} parent=1 // pred_check
      _
    $region3: #{tpu_custom_call.1} parent=1 // pred_check_branch
      %17 = sbr.rel (0) target = $region5
    $region4: #{tpu_custom_call.1} parent=1 // pred_region
      _
    $region5: #{tpu_custom_call.1} parent=1 // pred_fallthru
      _
    // Predicated region
    $region6: #{tpu_custom_call.1} parent=1 // pred_check
      _
    $region7: #{tpu_custom_call.1} parent=1 // pred_check_branch
      %19 = sbr.rel (0) target = $region9
    $region8: #{tpu_custom_call.1} parent=1 // pred_region
      _
    $region9: #{tpu_custom_call.1} parent=1 // pred_fallthru
      _
    // Predicated region
    $region10: #{tpu_custom_call.1} parent=1 // pred_check
      _
    $region11: #{tpu_custom_call.1} parent=1 // pred_check_branch
      %21 = sbr.rel (0) target = $region13
    $region12: #{tpu_custom_call.1} parent=1 // pred_region
      _
    $region13: #{tpu_custom_call.1} parent=1 // pred_fallthru
      _
    // Predicated region
    $region14: #{tpu_custom_call.1} parent=1 // pred_check
      _
    $region15: #{tpu_custom_call.1} parent=1 // pred_check_branch
      %23 = sbr.rel (0) target = $region17
    $region16: #{tpu_custom_call.1} parent=1 // pred_region
      _
    $region17: #{tpu_custom_call.1} parent=1 // pred_fallthru
      _
    // Predicated region
    $region18: #{tpu_custom_call.1} parent=1 // pred_check
      _
    $region19: #{tpu_custom_call.1} parent=1 // pred_check_branch
      %25 = sbr.rel (0) target = $region21
    $region20: #{tpu_custom_call.1} parent=1 // pred_region
      _
    $region21: #{tpu_custom_call.1} parent=1 // pred_fallthru
      _
    // Predicated region
    $region22: #{tpu_custom_call.1} parent=1 // pred_check
      _
    $region23: #{tpu_custom_call.1} parent=1 // pred_check_branch
      %27 = sbr.rel (0) target = $region25
    $region24: #{tpu_custom_call.1} parent=1 // pred_region
      _
    $region25: #{tpu_custom_call.1} parent=1 // pred_fallthru
      _
    // Predicated region
    $region26: #{tpu_custom_call.1} parent=1 // pred_check
      _
    $region27: #{tpu_custom_call.1} parent=1 // pred_check_branch
      %29 = sbr.rel (0) target = $region29
    $region28: #{tpu_custom_call.1} parent=1 // pred_region
      _
    $region29: #{tpu_custom_call.1} parent=1 // pred_fallthru
      _
    // Predicated region
    $region30: #{tpu_custom_call.1} parent=1 // pred_check
      _
    $region31: #{tpu_custom_call.1} parent=1 // pred_check_branch
      %31 = sbr.rel (0) target = $region33
    $region32: #{tpu_custom_call.1} parent=1 // pred_region
      _
    $region33: #{tpu_custom_call.1} parent=1 // pred_fallthru
      _
    // Predicated region
    $region34: #{tpu_custom_call.1} parent=1 // pred_check
      _
    $region35: #{tpu_custom_call.1} parent=1 // pred_check_branch
      %33 = sbr.rel (0) target = $region37
    $region36: #{tpu_custom_call.1} parent=1 // pred_region
      _
    $region37: #{tpu_custom_call.1} parent=1 // pred_fallthru
      _
    // Predicated region
    $region38: #{tpu_custom_call.1} parent=1 // pred_check
      _
    $region39: #{tpu_custom_call.1} parent=1 // pred_check_branch
      %35 = sbr.rel (0) target = $region41
    $region40: #{tpu_custom_call.1} parent=1 // pred_region
      _
    $region41: #{tpu_custom_call.1} parent=1 // pred_fallthru
      _
    %v36 = vld [vmem:[%s0] sm:$0x3]
    %v37 = vld [vmem:[%s1] sm:$0x3]
    %v38 = vld [vmem:[%s2] sm:$0xff]
    %v39 = vlaneseq
    %v40 = vshrl.u32 %v39, 7
    %v41 = vsub.s32 0, %v40
    %v42 = vrot.slane %v36, %v41
    %44 = vbcast.lane.b32.xlu0 %v42, 256
    %v45 = vpop.permute.xlu0 %44
    %v46 = vlaneseq
    %v47 = vshrl.u32 %v46, 7
    %v48 = vsub.s32 1, %v47
    %v49 = vrot.slane %v36, %v48
    %51 = vbcast.lane.b32.xlu0 %v49, 256
    %v52 = vpop.permute.xlu0 %51
    %v53 = vlaneseq
    %v54 = vshrl.u32 %v53, 7
    %v55 = vsub.s32 0, %v54
    %v56 = vrot.slane %v37, %v55
    %v57 = vmul.f32 %v45, %v56
    %v58 = vmul.f32 %v52, %v56
    %v59 = vlaneseq
    %v60 = vshrl.u32 %v59, 7
    %v61 = vsub.s32 1, %v60
    %v62 = vrot.slane %v37, %v61
    %v63 = vadd.f32 %v57, %v62
    %v64 = vadd.f32 %v58, %v62
    %v65 = vadd.f32 %v63, %v38
    %v66 = vadd.f32 %v64, %v38
    %v67 = vld [vmem:[%s4] sm:$0x3]
    %v68 = vld [vmem:[%s7] sm:$0x3]
    %v69 = vld [vmem:[%s9] sm:$0x3f]
    %v70 = vld [vmem:[%s9 + $0x8] sm:$0x3f]
    %v71 = vld [vmem:[%s3] sm:$0xff]
    %v72 = vld [vmem:[%s3 + $0x8] sm:$0xff]
    %v73 = vld [vmem:[%s3 + $0x10] sm:$0xff]
    %v74 = vld [vmem:[%s3 + $0x18] sm:$0xff]
    %v75 = vld [vmem:[%s5] sm:$0xff]
    %v76 = vld [vmem:[%s5 + $0x8] sm:$0xff]
    %v77 = vld [vmem:[%s5 + $0x10] sm:$0xff]
    %v78 = vld [vmem:[%s5 + $0x18] sm:$0xff]
    %v79 = vld [vmem:[%s6] sm:$0xff]
    %v80 = vld [vmem:[%s6 + $0x8] sm:$0xff]
    %v81 = vld [vmem:[%s6 + $0x10] sm:$0xff]
    %v82 = vld [vmem:[%s6 + $0x18] sm:$0xff]
    %v83 = vld [vmem:[%s8] sm:$0xff]
    %v84 = vld [vmem:[%s8 + $0x8] sm:$0xff]
    %v85 = vld [vmem:[%s8 + $0x10] sm:$0xff]
    %v86 = vld [vmem:[%s8 + $0x18] sm:$0xff]
    %v87 = vld [vmem:[%s8 + $0x20] sm:$0xff]
    %v88 = vld [vmem:[%s8 + $0x28] sm:$0xff]
    %v89 = vld [vmem:[%s8 + $0x30] sm:$0xff]
    %v90 = vld [vmem:[%s8 + $0x38] sm:$0xff]
    %v91 = vlaneseq
    %v92 = vshrl.u32 %v91, 7
    %v93 = vsub.s32 0, %v92
    %v94 = vrot.slane %v67, %v93
    %vm95 = vcmask 261120
    %v97 = vsel %vm95, %v65, 0
    %v100 = vsel %vm95, %v66, 0
    %102 = vmatprep.subr.mxu0 0.0
    %103 = vmatpush1.msra.mxu0 0.0
    %104 = vmatprep.subr.mxu0 0.0
    %105 = vmatpush1.msra.mxu0 0.0
    %106 = vmatprep.subr.mxu0 0.0
    %107 = vmatpush1.msra.mxu0 0.0
    %108 = vmatprep.subr.mxu0 0.0
    %109 = vmatpush1.msra.mxu0 0.0
    %110 = vmatprep.subr.mxu0 0.0
    %111 = vmatpush1.msra.mxu0 0.0
    %112 = vmatprep.subr.mxu0 0.0
    %113 = vmatpush1.msra.mxu0 0.0
    %114 = vmatprep.subr.mxu0 0.0
    %115 = vmatpush1.msra.mxu0 0.0
    %116 = vmatprep.subr.mxu0 0.0
    %117 = vmatpush1.msra.mxu0 0.0
    %118 = vmatprep.subr.mxu0 0.0
    %119 = vmatpush1.msra.mxu0 0.0
    %120 = vmatprep.subr.mxu0 0.0
    %121 = vmatpush1.msra.mxu0 0.0
    %122 = vmatprep.subr.mxu0 0.0
    %123 = vmatpush1.msra.mxu0 0.0
    %124 = vmatprep.subr.mxu0 0.0
    %125 = vmatpush1.msra.mxu0 0.0
    %126 = vmatprep.subr.mxu0 0.0
    %127 = vmatpush1.msra.mxu0 %v74
    %128 = vmatprep.subr.mxu0 0.0
    %129 = vmatpush1.msra.mxu0 %v73
    %130 = vmatprep.subr.mxu0 0.0
    %131 = vmatpush1.msra.mxu0 %v72
    %132 = vmatprep.subr.mxu0 0.0
    %133 = vmatpush1.msra.mxu0 %v71
    %134 = vmatprep.subr.mxu0 0.0
    %135 = vmatpush2.msra.mxu0 0.0
    %136 = vmatprep.subr.mxu0 0.0
    %137 = vmatpush2.msra.mxu0 0.0
    %138 = vmatprep.subr.mxu0 0.0
    %139 = vmatpush2.msra.mxu0 0.0
    %140 = vmatprep.subr.mxu0 0.0
    %141 = vmatpush2.msra.mxu0 0.0
    %142 = vmatprep.subr.mxu0 0.0
    %143 = vmatpush2.msra.mxu0 0.0
    %144 = vmatprep.subr.mxu0 0.0
    %145 = vmatpush2.msra.mxu0 0.0
    %146 = vmatprep.subr.mxu0 0.0
    %147 = vmatpush2.msra.mxu0 0.0
    %148 = vmatprep.subr.mxu0 0.0
    %149 = vmatpush2.msra.mxu0 0.0
    %150 = vmatprep.subr.mxu0 0.0
    %151 = vmatpush2.msra.mxu0 0.0
    %152 = vmatprep.subr.mxu0 0.0
    %153 = vmatpush2.msra.mxu0 0.0
    %154 = vmatprep.subr.mxu0 0.0
    %155 = vmatpush2.msra.mxu0 0.0
    %156 = vmatprep.subr.mxu0 0.0
    %157 = vmatpush2.msra.mxu0 0.0
    %158 = vmatprep.subr.mxu0 0.0
    %159 = vmatpush2.msra.mxu0 0.0
    %160 = vmatprep.subr.mxu0 0.0
    %161 = vmatpush2.msra.mxu0 0.0
    %162 = vmatprep.subr.mxu0 0.0
    %163 = vmatpush2.msra.mxu0 0.0
    %164 = vmatprep.subr.mxu0 0.0
    %165 = vmatpush2.msra.mxu0 0.0
    %166 = vmatprep.mubr.f32.mxu0 0.0
    %167 = vmatmul.mubr.f32.gmra.mxu0 %v97
    %v168 = vpop.f32.mrf.mxu0
    %v169 = vadd.f32 %v94, %v168
    %v170 = vpop.f32.mrf.mxu0
    %171 = vmatprep.mubr.f32.mxu0 0.0
    %172 = vmatmul.mubr.f32.gmra.mxu0 %v100
    %v173 = vpop.f32.mrf.mxu0
    %v174 = vadd.f32 %v94, %v173
    %v175 = vpop.f32.mrf.mxu0
    %176 = vdwg.mxu0
    %v177 = vmul.f32 %v169, 0.35355338
    %v178 = vmul.f32 %v174, 0.35355338
    %180 = vrot.lane.b32.xlu0 %v169, 96
    %v181 = vpop.permute.xlu0 %180
    %vm182 = vcmask 64512
    %v184 = vsel %vm182, %v177, 0
    %v186 = vsel %vm182, %v181, 0
    %188 = vmatprep.subr.mxu0 0.0
    %189 = vmatpush1.xpose.msra.mxu0 0.0
    %190 = vmatprep.subr.mxu0 0.0
    %191 = vmatpush1.xpose.msra.mxu0 0.0
    %192 = vmatprep.subr.mxu0 0.0
    %193 = vmatpush1.xpose.msra.mxu0 0.0
    %194 = vmatprep.subr.mxu0 0.0
    %195 = vmatpush1.xpose.msra.mxu0 0.0
    %196 = vmatprep.subr.mxu0 0.0
    %197 = vmatpush1.xpose.msra.mxu0 0.0
    %198 = vmatprep.subr.mxu0 0.0
    %199 = vmatpush1.xpose.msra.mxu0 0.0
    %200 = vmatprep.subr.mxu0 0.0
    %201 = vmatpush1.xpose.msra.mxu0 0.0
    %202 = vmatprep.subr.mxu0 0.0
    %203 = vmatpush1.xpose.msra.mxu0 0.0
    %204 = vmatprep.subr.mxu0 0.0
    %205 = vmatpush1.xpose.msra.mxu0 0.0
    %206 = vmatprep.subr.mxu0 0.0
    %207 = vmatpush1.xpose.msra.mxu0 0.0
    %208 = vmatprep.subr.mxu0 0.0
    %209 = vmatpush1.xpose.msra.mxu0 0.0
    %210 = vmatprep.subr.mxu0 0.0
    %211 = vmatpush1.xpose.msra.mxu0 0.0
    %212 = vmatprep.subr.mxu0 0.0
    %213 = vmatpush1.xpose.msra.mxu0 0.0
    %214 = vmatprep.subr.mxu0 0.0
    %215 = vmatpush1.xpose.msra.mxu0 0.0
    %216 = vmatprep.subr.mxu0 0.0
    %217 = vmatpush1.xpose.msra.mxu0 0.0
    %218 = vmatprep.subr.mxu0 0.0
    %219 = vmatpush1.xpose.msra.mxu0 %v186
    %220 = vmatprep.subr.mxu0 0.0
    %221 = vmatpush2.xpose.msra.mxu0 0.0
    %222 = vmatprep.subr.mxu0 0.0
    %223 = vmatpush2.xpose.msra.mxu0 0.0
    %224 = vmatprep.subr.mxu0 0.0
    %225 = vmatpush2.xpose.msra.mxu0 0.0
    %226 = vmatprep.subr.mxu0 0.0
    %227 = vmatpush2.xpose.msra.mxu0 0.0
    %228 = vmatprep.subr.mxu0 0.0
    %229 = vmatpush2.xpose.msra.mxu0 0.0
    %230 = vmatprep.subr.mxu0 0.0
    %231 = vmatpush2.xpose.msra.mxu0 0.0
    %232 = vmatprep.subr.mxu0 0.0
    %233 = vmatpush2.xpose.msra.mxu0 0.0
    %234 = vmatprep.subr.mxu0 0.0
    %235 = vmatpush2.xpose.msra.mxu0 0.0
    %236 = vmatprep.subr.mxu0 0.0
    %237 = vmatpush2.xpose.msra.mxu0 0.0
    %238 = vmatprep.subr.mxu0 0.0
    %239 = vmatpush2.xpose.msra.mxu0 0.0
    %240 = vmatprep.subr.mxu0 0.0
    %241 = vmatpush2.xpose.msra.mxu0 0.0
    %242 = vmatprep.subr.mxu0 0.0
    %243 = vmatpush2.xpose.msra.mxu0 0.0
    %244 = vmatprep.subr.mxu0 0.0
    %245 = vmatpush2.xpose.msra.mxu0 0.0
    %246 = vmatprep.subr.mxu0 0.0
    %247 = vmatpush2.xpose.msra.mxu0 0.0
    %248 = vmatprep.subr.mxu0 0.0
    %249 = vmatpush2.xpose.msra.mxu0 0.0
    %250 = vmatprep.subr.mxu0 0.0
    %251 = vmatpush2.xpose.msra.mxu0 0.0
    %252 = vmatprep.mubr.f32.mxu0 0.0
    %253 = vmatmul.mubr.f32.gmra.mxu0 %v184
    %v254 = vpop.f32.mrf.mxu0
    %v255 = vadd.f32 0.0, %v254
    %v256 = vpop.f32.mrf.mxu0
    %257 = vdwg.mxu0
    %259 = vrot.lane.b32.xlu0 %v174, 96
    %v260 = vpop.permute.xlu0 %259
    %v262 = vsel %vm182, %v178, 0
    %v264 = vsel %vm182, %v260, 0
    %266 = vmatprep.subr.mxu0 0.0
    %267 = vmatpush1.xpose.msra.mxu0 0.0
    %268 = vmatprep.subr.mxu0 0.0
    %269 = vmatpush1.xpose.msra.mxu0 0.0
    %270 = vmatprep.subr.mxu0 0.0
    %271 = vmatpush1.xpose.msra.mxu0 0.0
    %272 = vmatprep.subr.mxu0 0.0
    %273 = vmatpush1.xpose.msra.mxu0 0.0
    %274 = vmatprep.subr.mxu0 0.0
    %275 = vmatpush1.xpose.msra.mxu0 0.0
    %276 = vmatprep.subr.mxu0 0.0
    %277 = vmatpush1.xpose.msra.mxu0 0.0
    %278 = vmatprep.subr.mxu0 0.0
    %279 = vmatpush1.xpose.msra.mxu0 0.0
    %280 = vmatprep.subr.mxu0 0.0
    %281 = vmatpush1.xpose.msra.mxu0 0.0
    %282 = vmatprep.subr.mxu0 0.0
    %283 = vmatpush1.xpose.msra.mxu0 0.0
    %284 = vmatprep.subr.mxu0 0.0
    %285 = vmatpush1.xpose.msra.mxu0 0.0
    %286 = vmatprep.subr.mxu0 0.0
    %287 = vmatpush1.xpose.msra.mxu0 0.0
    %288 = vmatprep.subr.mxu0 0.0
    %289 = vmatpush1.xpose.msra.mxu0 0.0
    %290 = vmatprep.subr.mxu0 0.0
    %291 = vmatpush1.xpose.msra.mxu0 0.0
    %292 = vmatprep.subr.mxu0 0.0
    %293 = vmatpush1.xpose.msra.mxu0 0.0
    %294 = vmatprep.subr.mxu0 0.0
    %295 = vmatpush1.xpose.msra.mxu0 0.0
    %296 = vmatprep.subr.mxu0 0.0
    %297 = vmatpush1.xpose.msra.mxu0 %v264
    %298 = vmatprep.subr.mxu0 0.0
    %299 = vmatpush2.xpose.msra.mxu0 0.0
    %300 = vmatprep.subr.mxu0 0.0
    %301 = vmatpush2.xpose.msra.mxu0 0.0
    %302 = vmatprep.subr.mxu0 0.0
    %303 = vmatpush2.xpose.msra.mxu0 0.0
    %304 = vmatprep.subr.mxu0 0.0
    %305 = vmatpush2.xpose.msra.mxu0 0.0
    %306 = vmatprep.subr.mxu0 0.0
    %307 = vmatpush2.xpose.msra.mxu0 0.0
    %308 = vmatprep.subr.mxu0 0.0
    %309 = vmatpush2.xpose.msra.mxu0 0.0
    %310 = vmatprep.subr.mxu0 0.0
    %311 = vmatpush2.xpose.msra.mxu0 0.0
    %312 = vmatprep.subr.mxu0 0.0
    %313 = vmatpush2.xpose.msra.mxu0 0.0
    %314 = vmatprep.subr.mxu0 0.0
    %315 = vmatpush2.xpose.msra.mxu0 0.0
    %316 = vmatprep.subr.mxu0 0.0
    %317 = vmatpush2.xpose.msra.mxu0 0.0
    %318 = vmatprep.subr.mxu0 0.0
    %319 = vmatpush2.xpose.msra.mxu0 0.0
    %320 = vmatprep.subr.mxu0 0.0
    %321 = vmatpush2.xpose.msra.mxu0 0.0
    %322 = vmatprep.subr.mxu0 0.0
    %323 = vmatpush2.xpose.msra.mxu0 0.0
    %324 = vmatprep.subr.mxu0 0.0
    %325 = vmatpush2.xpose.msra.mxu0 0.0
    %326 = vmatprep.subr.mxu0 0.0
    %327 = vmatpush2.xpose.msra.mxu0 0.0
    %328 = vmatprep.subr.mxu0 0.0
    %329 = vmatpush2.xpose.msra.mxu0 0.0
    %330 = vmatprep.mubr.f32.mxu0 0.0
    %331 = vmatmul.mubr.f32.gmra.mxu0 %v262
    %v332 = vpop.f32.mrf.mxu0
    %v333 = vadd.f32 0.0, %v332
    %v334 = vpop.f32.mrf.mxu0
    %335 = vdwg.mxu0
    %v336 = vsel %vm182, %v255, -inf
    %337 = vmax.xlane.f32.xlu0 %v336
    %v338 = vpop.xlane.xlu0 %337
    %v339 = vsel %vm182, %v333, -inf
    %340 = vmax.xlane.f32.xlu0 %v339
    %v341 = vpop.xlane.xlu0 %340
    %v342 = vsub.f32 %v255, %v338
    %v343 = vsub.f32 %v333, %v341
    %v344 = vmul.f32 %v342, 1.442695
    %v345 = vpow.pop %v344
    %v346 = vmul.f32 %v343, 1.442695
    %v347 = vpow.pop %v346
    %v348 = vsel %vm182, %v345, 0.0
    %349 = vadd.xlane.f32.xlu0 %v348
    %v350 = vpop.xlane.xlu0 %349
    %v351 = vsel %vm182, %v347, 0.0
    %352 = vadd.xlane.f32.xlu0 %v351
    %v353 = vpop.xlane.xlu0 %352
    %v354 = vrcp.pop %v350
    %v355 = vmul.f32 %v345, %v354
    %v356 = vrcp.pop %v353
    %v357 = vmul.f32 %v347, %v356
    %358 = vrot.lane.b32.xlu0 %v169, 64
    %v359 = vpop.permute.xlu0 %358
    %v362 = vsel %vm182, %v355, 0
    %364 = vmatprep.subr.mxu0 0.0
    %365 = vmatpush1.msra.mxu0 0.0
    %366 = vmatprep.subr.mxu0 0.0
    %367 = vmatpush1.msra.mxu0 0.0
    %368 = vmatprep.subr.mxu0 0.0
    %369 = vmatpush1.msra.mxu0 0.0
    %370 = vmatprep.subr.mxu0 0.0
    %371 = vmatpush1.msra.mxu0 0.0
    %372 = vmatprep.subr.mxu0 0.0
    %373 = vmatpush1.msra.mxu0 0.0
    %374 = vmatprep.subr.mxu0 0.0
    %375 = vmatpush1.msra.mxu0 0.0
    %376 = vmatprep.subr.mxu0 0.0
    %377 = vmatpush1.msra.mxu0 0.0
    %378 = vmatprep.subr.mxu0 0.0
    %379 = vmatpush1.msra.mxu0 0.0
    %380 = vmatprep.subr.mxu0 0.0
    %381 = vmatpush1.msra.mxu0 0.0
    %382 = vmatprep.subr.mxu0 0.0
    %383 = vmatpush1.msra.mxu0 0.0
    %384 = vmatprep.subr.mxu0 0.0
    %385 = vmatpush1.msra.mxu0 0.0
    %386 = vmatprep.subr.mxu0 0.0
    %387 = vmatpush1.msra.mxu0 0.0
    %388 = vmatprep.subr.mxu0 0.0
    %389 = vmatpush1.msra.mxu0 0.0
    %390 = vmatprep.subr.mxu0 0.0
    %391 = vmatpush1.msra.mxu0 0.0
    %392 = vmatprep.subr.mxu0 0.0
    %393 = vmatpush1.msra.mxu0 0.0
    %394 = vmatprep.subr.mxu0 0.0
    %395 = vmatpush1.msra.mxu0 %v359
    %396 = vmatprep.subr.mxu0 0.0
    %397 = vmatpush2.msra.mxu0 0.0
    %398 = vmatprep.subr.mxu0 0.0
    %399 = vmatpush2.msra.mxu0 0.0
    %400 = vmatprep.subr.mxu0 0.0
    %401 = vmatpush2.msra.mxu0 0.0
    %402 = vmatprep.subr.mxu0 0.0
    %403 = vmatpush2.msra.mxu0 0.0
    %404 = vmatprep.subr.mxu0 0.0
    %405 = vmatpush2.msra.mxu0 0.0
    %406 = vmatprep.subr.mxu0 0.0
    %407 = vmatpush2.msra.mxu0 0.0
    %408 = vmatprep.subr.mxu0 0.0
    %409 = vmatpush2.msra.mxu0 0.0
    %410 = vmatprep.subr.mxu0 0.0
    %411 = vmatpush2.msra.mxu0 0.0
    %412 = vmatprep.subr.mxu0 0.0
    %413 = vmatpush2.msra.mxu0 0.0
    %414 = vmatprep.subr.mxu0 0.0
    %415 = vmatpush2.msra.mxu0 0.0
    %416 = vmatprep.subr.mxu0 0.0
    %417 = vmatpush2.msra.mxu0 0.0
    %418 = vmatprep.subr.mxu0 0.0
    %419 = vmatpush2.msra.mxu0 0.0
    %420 = vmatprep.subr.mxu0 0.0
    %421 = vmatpush2.msra.mxu0 0.0
    %422 = vmatprep.subr.mxu0 0.0
    %423 = vmatpush2.msra.mxu0 0.0
    %424 = vmatprep.subr.mxu0 0.0
    %425 = vmatpush2.msra.mxu0 0.0
    %426 = vmatprep.subr.mxu0 0.0
    %427 = vmatpush2.msra.mxu0 0.0
    %428 = vmatprep.mubr.f32.mxu0 0.0
    %429 = vmatmul.mubr.f32.gmra.mxu0 %v362
    %v430 = vpop.f32.mrf.mxu0
    %v431 = vadd.f32 0.0, %v430
    %v432 = vpop.f32.mrf.mxu0
    %433 = vdwg.mxu0
    %434 = vrot.lane.b32.xlu0 %v174, 64
    %v435 = vpop.permute.xlu0 %434
    %v438 = vsel %vm182, %v357, 0
    %440 = vmatprep.subr.mxu0 0.0
    %441 = vmatpush1.msra.mxu0 0.0
    %442 = vmatprep.subr.mxu0 0.0
    %443 = vmatpush1.msra.mxu0 0.0
    %444 = vmatprep.subr.mxu0 0.0
    %445 = vmatpush1.msra.mxu0 0.0
    %446 = vmatprep.subr.mxu0 0.0
    %447 = vmatpush1.msra.mxu0 0.0
    %448 = vmatprep.subr.mxu0 0.0
    %449 = vmatpush1.msra.mxu0 0.0
    %450 = vmatprep.subr.mxu0 0.0
    %451 = vmatpush1.msra.mxu0 0.0
    %452 = vmatprep.subr.mxu0 0.0
    %453 = vmatpush1.msra.mxu0 0.0
    %454 = vmatprep.subr.mxu0 0.0
    %455 = vmatpush1.msra.mxu0 0.0
    %456 = vmatprep.subr.mxu0 0.0
    %457 = vmatpush1.msra.mxu0 0.0
    %458 = vmatprep.subr.mxu0 0.0
    %459 = vmatpush1.msra.mxu0 0.0
    %460 = vmatprep.subr.mxu0 0.0
    %461 = vmatpush1.msra.mxu0 0.0
    %462 = vmatprep.subr.mxu0 0.0
    %463 = vmatpush1.msra.mxu0 0.0
    %464 = vmatprep.subr.mxu0 0.0
    %465 = vmatpush1.msra.mxu0 0.0
    %466 = vmatprep.subr.mxu0 0.0
    %467 = vmatpush1.msra.mxu0 0.0
    %468 = vmatprep.subr.mxu0 0.0
    %469 = vmatpush1.msra.mxu0 0.0
    %470 = vmatprep.subr.mxu0 0.0
    %471 = vmatpush1.msra.mxu0 %v435
    %472 = vmatprep.subr.mxu0 0.0
    %473 = vmatpush2.msra.mxu0 0.0
    %474 = vmatprep.subr.mxu0 0.0
    %475 = vmatpush2.msra.mxu0 0.0
    %476 = vmatprep.subr.mxu0 0.0
    %477 = vmatpush2.msra.mxu0 0.0
    %478 = vmatprep.subr.mxu0 0.0
    %479 = vmatpush2.msra.mxu0 0.0
    %480 = vmatprep.subr.mxu0 0.0
    %481 = vmatpush2.msra.mxu0 0.0
    %482 = vmatprep.subr.mxu0 0.0
    %483 = vmatpush2.msra.mxu0 0.0
    %484 = vmatprep.subr.mxu0 0.0
    %485 = vmatpush2.msra.mxu0 0.0
    %486 = vmatprep.subr.mxu0 0.0
    %487 = vmatpush2.msra.mxu0 0.0
    %488 = vmatprep.subr.mxu0 0.0
    %489 = vmatpush2.msra.mxu0 0.0
    %490 = vmatprep.subr.mxu0 0.0
    %491 = vmatpush2.msra.mxu0 0.0
    %492 = vmatprep.subr.mxu0 0.0
    %493 = vmatpush2.msra.mxu0 0.0
    %494 = vmatprep.subr.mxu0 0.0
    %495 = vmatpush2.msra.mxu0 0.0
    %496 = vmatprep.subr.mxu0 0.0
    %497 = vmatpush2.msra.mxu0 0.0
    %498 = vmatprep.subr.mxu0 0.0
    %499 = vmatpush2.msra.mxu0 0.0
    %500 = vmatprep.subr.mxu0 0.0
    %501 = vmatpush2.msra.mxu0 0.0
    %502 = vmatprep.subr.mxu0 0.0
    %503 = vmatpush2.msra.mxu0 0.0
    %504 = vmatprep.mubr.f32.mxu0 0.0
    %505 = vmatmul.mubr.f32.gmra.mxu0 %v438
    %v506 = vpop.f32.mrf.mxu0
    %v507 = vadd.f32 0.0, %v506
    %v508 = vpop.f32.mrf.mxu0
    %509 = vdwg.mxu0
    %510 = vrot.lane.b32.xlu0 %v177, 120
    %v511 = vpop.permute.xlu0 %510
    %512 = vrot.lane.b32.xlu0 %v169, 88
    %v513 = vpop.permute.xlu0 %512
    %v514 = vsel %vm182, %v511, 0
    %v516 = vsel %vm182, %v513, 0
    %518 = vmatprep.subr.mxu0 0.0
    %519 = vmatpush1.xpose.msra.mxu0 0.0
    %520 = vmatprep.subr.mxu0 0.0
    %521 = vmatpush1.xpose.msra.mxu0 0.0
    %522 = vmatprep.subr.mxu0 0.0
    %523 = vmatpush1.xpose.msra.mxu0 0.0
    %524 = vmatprep.subr.mxu0 0.0
    %525 = vmatpush1.xpose.msra.mxu0 0.0
    %526 = vmatprep.subr.mxu0 0.0
    %527 = vmatpush1.xpose.msra.mxu0 0.0
    %528 = vmatprep.subr.mxu0 0.0
    %529 = vmatpush1.xpose.msra.mxu0 0.0
    %530 = vmatprep.subr.mxu0 0.0
    %531 = vmatpush1.xpose.msra.mxu0 0.0
    %532 = vmatprep.subr.mxu0 0.0
    %533 = vmatpush1.xpose.msra.mxu0 0.0
    %534 = vmatprep.subr.mxu0 0.0
    %535 = vmatpush1.xpose.msra.mxu0 0.0
    %536 = vmatprep.subr.mxu0 0.0
    %537 = vmatpush1.xpose.msra.mxu0 0.0
    %538 = vmatprep.subr.mxu0 0.0
    %539 = vmatpush1.xpose.msra.mxu0 0.0
    %540 = vmatprep.subr.mxu0 0.0
    %541 = vmatpush1.xpose.msra.mxu0 0.0
    %542 = vmatprep.subr.mxu0 0.0
    %543 = vmatpush1.xpose.msra.mxu0 0.0
    %544 = vmatprep.subr.mxu0 0.0
    %545 = vmatpush1.xpose.msra.mxu0 0.0
    %546 = vmatprep.subr.mxu0 0.0
    %547 = vmatpush1.xpose.msra.mxu0 0.0
    %548 = vmatprep.subr.mxu0 0.0
    %549 = vmatpush1.xpose.msra.mxu0 %v516
    %550 = vmatprep.subr.mxu0 0.0
    %551 = vmatpush2.xpose.msra.mxu0 0.0
    %552 = vmatprep.subr.mxu0 0.0
    %553 = vmatpush2.xpose.msra.mxu0 0.0
    %554 = vmatprep.subr.mxu0 0.0
    %555 = vmatpush2.xpose.msra.mxu0 0.0
    %556 = vmatprep.subr.mxu0 0.0
    %557 = vmatpush2.xpose.msra.mxu0 0.0
    %558 = vmatprep.subr.mxu0 0.0
    %559 = vmatpush2.xpose.msra.mxu0 0.0
    %560 = vmatprep.subr.mxu0 0.0
    %561 = vmatpush2.xpose.msra.mxu0 0.0
    %562 = vmatprep.subr.mxu0 0.0
    %563 = vmatpush2.xpose.msra.mxu0 0.0
    %564 = vmatprep.subr.mxu0 0.0
    %565 = vmatpush2.xpose.msra.mxu0 0.0
    %566 = vmatprep.subr.mxu0 0.0
    %567 = vmatpush2.xpose.msra.mxu0 0.0
    %568 = vmatprep.subr.mxu0 0.0
    %569 = vmatpush2.xpose.msra.mxu0 0.0
    %570 = vmatprep.subr.mxu0 0.0
    %571 = vmatpush2.xpose.msra.mxu0 0.0
    %572 = vmatprep.subr.mxu0 0.0
    %573 = vmatpush2.xpose.msra.mxu0 0.0
    %574 = vmatprep.subr.mxu0 0.0
    %575 = vmatpush2.xpose.msra.mxu0 0.0
    %576 = vmatprep.subr.mxu0 0.0
    %577 = vmatpush2.xpose.msra.mxu0 0.0
    %578 = vmatprep.subr.mxu0 0.0
    %579 = vmatpush2.xpose.msra.mxu0 0.0
    %580 = vmatprep.subr.mxu0 0.0
    %581 = vmatpush2.xpose.msra.mxu0 0.0
    %582 = vmatprep.mubr.f32.mxu0 0.0
    %583 = vmatmul.mubr.f32.gmra.mxu0 %v514
    %v584 = vpop.f32.mrf.mxu0
    %v585 = vadd.f32 0.0, %v584
    %v586 = vpop.f32.mrf.mxu0
    %587 = vdwg.mxu0
    %588 = vrot.lane.b32.xlu0 %v178, 120
    %v589 = vpop.permute.xlu0 %588
    %590 = vrot.lane.b32.xlu0 %v174, 88
    %v591 = vpop.permute.xlu0 %590
    %v592 = vsel %vm182, %v589, 0
    %v594 = vsel %vm182, %v591, 0
    %596 = vmatprep.subr.mxu0 0.0
    %597 = vmatpush1.xpose.msra.mxu0 0.0
    %598 = vmatprep.subr.mxu0 0.0
    %599 = vmatpush1.xpose.msra.mxu0 0.0
    %600 = vmatprep.subr.mxu0 0.0
    %601 = vmatpush1.xpose.msra.mxu0 0.0
    %602 = vmatprep.subr.mxu0 0.0
    %603 = vmatpush1.xpose.msra.mxu0 0.0
    %604 = vmatprep.subr.mxu0 0.0
    %605 = vmatpush1.xpose.msra.mxu0 0.0
    %606 = vmatprep.subr.mxu0 0.0
    %607 = vmatpush1.xpose.msra.mxu0 0.0
    %608 = vmatprep.subr.mxu0 0.0
    %609 = vmatpush1.xpose.msra.mxu0 0.0
    %610 = vmatprep.subr.mxu0 0.0
    %611 = vmatpush1.xpose.msra.mxu0 0.0
    %612 = vmatprep.subr.mxu0 0.0
    %613 = vmatpush1.xpose.msra.mxu0 0.0
    %614 = vmatprep.subr.mxu0 0.0
    %615 = vmatpush1.xpose.msra.mxu0 0.0
    %616 = vmatprep.subr.mxu0 0.0
    %617 = vmatpush1.xpose.msra.mxu0 0.0
    %618 = vmatprep.subr.mxu0 0.0
    %619 = vmatpush1.xpose.msra.mxu0 0.0
    %620 = vmatprep.subr.mxu0 0.0
    %621 = vmatpush1.xpose.msra.mxu0 0.0
    %622 = vmatprep.subr.mxu0 0.0
    %623 = vmatpush1.xpose.msra.mxu0 0.0
    %624 = vmatprep.subr.mxu0 0.0
    %625 = vmatpush1.xpose.msra.mxu0 0.0
    %626 = vmatprep.subr.mxu0 0.0
    %627 = vmatpush1.xpose.msra.mxu0 %v594
    %628 = vmatprep.subr.mxu0 0.0
    %629 = vmatpush2.xpose.msra.mxu0 0.0
    %630 = vmatprep.subr.mxu0 0.0
    %631 = vmatpush2.xpose.msra.mxu0 0.0
    %632 = vmatprep.subr.mxu0 0.0
    %633 = vmatpush2.xpose.msra.mxu0 0.0
    %634 = vmatprep.subr.mxu0 0.0
    %635 = vmatpush2.xpose.msra.mxu0 0.0
    %636 = vmatprep.subr.mxu0 0.0
    %637 = vmatpush2.xpose.msra.mxu0 0.0
    %638 = vmatprep.subr.mxu0 0.0
    %639 = vmatpush2.xpose.msra.mxu0 0.0
    %640 = vmatprep.subr.mxu0 0.0
    %641 = vmatpush2.xpose.msra.mxu0 0.0
    %642 = vmatprep.subr.mxu0 0.0
    %643 = vmatpush2.xpose.msra.mxu0 0.0
    %644 = vmatprep.subr.mxu0 0.0
    %645 = vmatpush2.xpose.msra.mxu0 0.0
    %646 = vmatprep.subr.mxu0 0.0
    %647 = vmatpush2.xpose.msra.mxu0 0.0
    %648 = vmatprep.subr.mxu0 0.0
    %649 = vmatpush2.xpose.msra.mxu0 0.0
    %650 = vmatprep.subr.mxu0 0.0
    %651 = vmatpush2.xpose.msra.mxu0 0.0
    %652 = vmatprep.subr.mxu0 0.0
    %653 = vmatpush2.xpose.msra.mxu0 0.0
    %654 = vmatprep.subr.mxu0 0.0
    %655 = vmatpush2.xpose.msra.mxu0 0.0
    %656 = vmatprep.subr.mxu0 0.0
    %657 = vmatpush2.xpose.msra.mxu0 0.0
    %658 = vmatprep.subr.mxu0 0.0
    %659 = vmatpush2.xpose.msra.mxu0 0.0
    %660 = vmatprep.mubr.f32.mxu0 0.0
    %661 = vmatmul.mubr.f32.gmra.mxu0 %v592
    %v662 = vpop.f32.mrf.mxu0
    %v663 = vadd.f32 0.0, %v662
    %v664 = vpop.f32.mrf.mxu0
    %665 = vdwg.mxu0
    %v666 = vsel %vm182, %v585, -inf
    %667 = vmax.xlane.f32.xlu0 %v666
    %v668 = vpop.xlane.xlu0 %667
    %v669 = vsel %vm182, %v663, -inf
    %670 = vmax.xlane.f32.xlu0 %v669
    %v671 = vpop.xlane.xlu0 %670
    %v672 = vsub.f32 %v585, %v668
    %v673 = vsub.f32 %v663, %v671
    %v674 = vmul.f32 %v672, 1.442695
    %v675 = vpow.pop %v674
    %v676 = vmul.f32 %v673, 1.442695
    %v677 = vpow.pop %v676
    %v678 = vsel %vm182, %v675, 0.0
    %679 = vadd.xlane.f32.xlu0 %v678
    %v680 = vpop.xlane.xlu0 %679
    %v681 = vsel %vm182, %v677, 0.0
    %682 = vadd.xlane.f32.xlu0 %v681
    %v683 = vpop.xlane.xlu0 %682
    %v684 = vrcp.pop %v680
    %v685 = vmul.f32 %v675, %v684
    %v686 = vrcp.pop %v683
    %v687 = vmul.f32 %v677, %v686
    %688 = vrot.lane.b32.xlu0 %v169, 56
    %v689 = vpop.permute.xlu0 %688
    %v692 = vsel %vm182, %v685, 0
    %694 = vmatprep.subr.mxu0 0.0
    %695 = vmatpush1.msra.mxu0 0.0
    %696 = vmatprep.subr.mxu0 0.0
    %697 = vmatpush1.msra.mxu0 0.0
    %698 = vmatprep.subr.mxu0 0.0
    %699 = vmatpush1.msra.mxu0 0.0
    %700 = vmatprep.subr.mxu0 0.0
    %701 = vmatpush1.msra.mxu0 0.0
    %702 = vmatprep.subr.mxu0 0.0
    %703 = vmatpush1.msra.mxu0 0.0
    %704 = vmatprep.subr.mxu0 0.0
    %705 = vmatpush1.msra.mxu0 0.0
    %706 = vmatprep.subr.mxu0 0.0
    %707 = vmatpush1.msra.mxu0 0.0
    %708 = vmatprep.subr.mxu0 0.0
    %709 = vmatpush1.msra.mxu0 0.0
    %710 = vmatprep.subr.mxu0 0.0
    %711 = vmatpush1.msra.mxu0 0.0
    %712 = vmatprep.subr.mxu0 0.0
    %713 = vmatpush1.msra.mxu0 0.0
    %714 = vmatprep.subr.mxu0 0.0
    %715 = vmatpush1.msra.mxu0 0.0
    %716 = vmatprep.subr.mxu0 0.0
    %717 = vmatpush1.msra.mxu0 0.0
    %718 = vmatprep.subr.mxu0 0.0
    %719 = vmatpush1.msra.mxu0 0.0
    %720 = vmatprep.subr.mxu0 0.0
    %721 = vmatpush1.msra.mxu0 0.0
    %722 = vmatprep.subr.mxu0 0.0
    %723 = vmatpush1.msra.mxu0 0.0
    %724 = vmatprep.subr.mxu0 0.0
    %725 = vmatpush1.msra.mxu0 %v689
    %726 = vmatprep.subr.mxu0 0.0
    %727 = vmatpush2.msra.mxu0 0.0
    %728 = vmatprep.subr.mxu0 0.0
    %729 = vmatpush2.msra.mxu0 0.0
    %730 = vmatprep.subr.mxu0 0.0
    %731 = vmatpush2.msra.mxu0 0.0
    %732 = vmatprep.subr.mxu0 0.0
    %733 = vmatpush2.msra.mxu0 0.0
    %734 = vmatprep.subr.mxu0 0.0
    %735 = vmatpush2.msra.mxu0 0.0
    %736 = vmatprep.subr.mxu0 0.0
    %737 = vmatpush2.msra.mxu0 0.0
    %738 = vmatprep.subr.mxu0 0.0
    %739 = vmatpush2.msra.mxu0 0.0
    %740 = vmatprep.subr.mxu0 0.0
    %741 = vmatpush2.msra.mxu0 0.0
    %742 = vmatprep.subr.mxu0 0.0
    %743 = vmatpush2.msra.mxu0 0.0
    %744 = vmatprep.subr.mxu0 0.0
    %745 = vmatpush2.msra.mxu0 0.0
    %746 = vmatprep.subr.mxu0 0.0
    %747 = vmatpush2.msra.mxu0 0.0
    %748 = vmatprep.subr.mxu0 0.0
    %749 = vmatpush2.msra.mxu0 0.0
    %750 = vmatprep.subr.mxu0 0.0
    %751 = vmatpush2.msra.mxu0 0.0
    %752 = vmatprep.subr.mxu0 0.0
    %753 = vmatpush2.msra.mxu0 0.0
    %754 = vmatprep.subr.mxu0 0.0
    %755 = vmatpush2.msra.mxu0 0.0
    %756 = vmatprep.subr.mxu0 0.0
    %757 = vmatpush2.msra.mxu0 0.0
    %758 = vmatprep.mubr.f32.mxu0 0.0
    %759 = vmatmul.mubr.f32.gmra.mxu0 %v692
    %v760 = vpop.f32.mrf.mxu0
    %v761 = vadd.f32 0.0, %v760
    %v762 = vpop.f32.mrf.mxu0
    %763 = vdwg.mxu0
    %764 = vrot.lane.b32.xlu0 %v174, 56
    %v765 = vpop.permute.xlu0 %764
    %v768 = vsel %vm182, %v687, 0
    %770 = vmatprep.subr.mxu0 0.0
    %771 = vmatpush1.msra.mxu0 0.0
    %772 = vmatprep.subr.mxu0 0.0
    %773 = vmatpush1.msra.mxu0 0.0
    %774 = vmatprep.subr.mxu0 0.0
    %775 = vmatpush1.msra.mxu0 0.0
    %776 = vmatprep.subr.mxu0 0.0
    %777 = vmatpush1.msra.mxu0 0.0
    %778 = vmatprep.subr.mxu0 0.0
    %779 = vmatpush1.msra.mxu0 0.0
    %780 = vmatprep.subr.mxu0 0.0
    %781 = vmatpush1.msra.mxu0 0.0
    %782 = vmatprep.subr.mxu0 0.0
    %783 = vmatpush1.msra.mxu0 0.0
    %784 = vmatprep.subr.mxu0 0.0
    %785 = vmatpush1.msra.mxu0 0.0
    %786 = vmatprep.subr.mxu0 0.0
    %787 = vmatpush1.msra.mxu0 0.0
    %788 = vmatprep.subr.mxu0 0.0
    %789 = vmatpush1.msra.mxu0 0.0
    %790 = vmatprep.subr.mxu0 0.0
    %791 = vmatpush1.msra.mxu0 0.0
    %792 = vmatprep.subr.mxu0 0.0
    %793 = vmatpush1.msra.mxu0 0.0
    %794 = vmatprep.subr.mxu0 0.0
    %795 = vmatpush1.msra.mxu0 0.0
    %796 = vmatprep.subr.mxu0 0.0
    %797 = vmatpush1.msra.mxu0 0.0
    %798 = vmatprep.subr.mxu0 0.0
    %799 = vmatpush1.msra.mxu0 0.0
    %800 = vmatprep.subr.mxu0 0.0
    %801 = vmatpush1.msra.mxu0 %v765
    %802 = vmatprep.subr.mxu0 0.0
    %803 = vmatpush2.msra.mxu0 0.0
    %804 = vmatprep.subr.mxu0 0.0
    %805 = vmatpush2.msra.mxu0 0.0
    %806 = vmatprep.subr.mxu0 0.0
    %807 = vmatpush2.msra.mxu0 0.0
    %808 = vmatprep.subr.mxu0 0.0
    %809 = vmatpush2.msra.mxu0 0.0
    %810 = vmatprep.subr.mxu0 0.0
    %811 = vmatpush2.msra.mxu0 0.0
    %812 = vmatprep.subr.mxu0 0.0
    %813 = vmatpush2.msra.mxu0 0.0
    %814 = vmatprep.subr.mxu0 0.0
    %815 = vmatpush2.msra.mxu0 0.0
    %816 = vmatprep.subr.mxu0 0.0
    %817 = vmatpush2.msra.mxu0 0.0
    %818 = vmatprep.subr.mxu0 0.0
    %819 = vmatpush2.msra.mxu0 0.0
    %820 = vmatprep.subr.mxu0 0.0
    %821 = vmatpush2.msra.mxu0 0.0
    %822 = vmatprep.subr.mxu0 0.0
    %823 = vmatpush2.msra.mxu0 0.0
    %824 = vmatprep.subr.mxu0 0.0
    %825 = vmatpush2.msra.mxu0 0.0
    %826 = vmatprep.subr.mxu0 0.0
    %827 = vmatpush2.msra.mxu0 0.0
    %828 = vmatprep.subr.mxu0 0.0
    %829 = vmatpush2.msra.mxu0 0.0
    %830 = vmatprep.subr.mxu0 0.0
    %831 = vmatpush2.msra.mxu0 0.0
    %832 = vmatprep.subr.mxu0 0.0
    %833 = vmatpush2.msra.mxu0 0.0
    %834 = vmatprep.mubr.f32.mxu0 0.0
    %835 = vmatmul.mubr.f32.gmra.mxu0 %v768
    %v836 = vpop.f32.mrf.mxu0
    %v837 = vadd.f32 0.0, %v836
    %v838 = vpop.f32.mrf.mxu0
    %839 = vdwg.mxu0
    %v841 = vsel %vm182, %v761, 0
    %v844 = vsel %vm182, %v837, 0
    %846 = vmatprep.subr.mxu0 0.0
    %847 = vmatpush1.msra.mxu0 0.0
    %848 = vmatprep.subr.mxu0 0.0
    %849 = vmatpush1.msra.mxu0 0.0
    %850 = vmatprep.subr.mxu0 0.0
    %851 = vmatpush1.msra.mxu0 0.0
    %852 = vmatprep.subr.mxu0 0.0
    %853 = vmatpush1.msra.mxu0 0.0
    %854 = vmatprep.subr.mxu0 0.0
    %855 = vmatpush1.msra.mxu0 0.0
    %856 = vmatprep.subr.mxu0 0.0
    %857 = vmatpush1.msra.mxu0 0.0
    %858 = vmatprep.subr.mxu0 0.0
    %859 = vmatpush1.msra.mxu0 0.0
    %860 = vmatprep.subr.mxu0 0.0
    %861 = vmatpush1.msra.mxu0 0.0
    %862 = vmatprep.subr.mxu0 0.0
    %863 = vmatpush1.msra.mxu0 0.0
    %864 = vmatprep.subr.mxu0 0.0
    %865 = vmatpush1.msra.mxu0 0.0
    %866 = vmatprep.subr.mxu0 0.0
    %867 = vmatpush1.msra.mxu0 0.0
    %868 = vmatprep.subr.mxu0 0.0
    %869 = vmatpush1.msra.mxu0 0.0
    %870 = vmatprep.subr.mxu0 0.0
    %871 = vmatpush1.msra.mxu0 0.0
    %872 = vmatprep.subr.mxu0 0.0
    %873 = vmatpush1.msra.mxu0 0.0
    %874 = vmatprep.subr.mxu0 0.0
    %875 = vmatpush1.msra.mxu0 0.0
    %876 = vmatprep.subr.mxu0 0.0
    %877 = vmatpush1.msra.mxu0 %v76
    %878 = vmatprep.subr.mxu0 0.0
    %879 = vmatpush2.msra.mxu0 0.0
    %880 = vmatprep.subr.mxu0 0.0
    %881 = vmatpush2.msra.mxu0 0.0
    %882 = vmatprep.subr.mxu0 0.0
    %883 = vmatpush2.msra.mxu0 0.0
    %884 = vmatprep.subr.mxu0 0.0
    %885 = vmatpush2.msra.mxu0 0.0
    %886 = vmatprep.subr.mxu0 0.0
    %887 = vmatpush2.msra.mxu0 0.0
    %888 = vmatprep.subr.mxu0 0.0
    %889 = vmatpush2.msra.mxu0 0.0
    %890 = vmatprep.subr.mxu0 0.0
    %891 = vmatpush2.msra.mxu0 0.0
    %892 = vmatprep.subr.mxu0 0.0
    %893 = vmatpush2.msra.mxu0 0.0
    %894 = vmatprep.subr.mxu0 0.0
    %895 = vmatpush2.msra.mxu0 0.0
    %896 = vmatprep.subr.mxu0 0.0
    %897 = vmatpush2.msra.mxu0 0.0
    %898 = vmatprep.subr.mxu0 0.0
    %899 = vmatpush2.msra.mxu0 0.0
    %900 = vmatprep.subr.mxu0 0.0
    %901 = vmatpush2.msra.mxu0 0.0
    %902 = vmatprep.subr.mxu0 0.0
    %903 = vmatpush2.msra.mxu0 0.0
    %904 = vmatprep.subr.mxu0 0.0
    %905 = vmatpush2.msra.mxu0 0.0
    %906 = vmatprep.subr.mxu0 0.0
    %907 = vmatpush2.msra.mxu0 0.0
    %908 = vmatprep.subr.mxu0 0.0
    %909 = vmatpush2.msra.mxu0 0.0
    %910 = vmatprep.mubr.f32.mxu0 0.0
    %911 = vmatmul.mubr.f32.gmra.mxu0 %v841
    %v912 = vpop.f32.mrf.mxu0
    %v913 = vadd.f32 0.0, %v912
    %v914 = vpop.f32.mrf.mxu0
    %915 = vmatprep.mubr.f32.mxu0 0.0
    %916 = vmatmul.mubr.f32.gmra.mxu0 %v844
    %v917 = vpop.f32.mrf.mxu0
    %v918 = vadd.f32 0.0, %v917
    %v919 = vpop.f32.mrf.mxu0
    %920 = vdwg.mxu0
    %v922 = vsel %vm182, %v431, 0
    %v925 = vsel %vm182, %v507, 0
    %927 = vmatprep.subr.mxu0 0.0
    %928 = vmatpush1.msra.mxu0 0.0
    %929 = vmatprep.subr.mxu0 0.0
    %930 = vmatpush1.msra.mxu0 0.0
    %931 = vmatprep.subr.mxu0 0.0
    %932 = vmatpush1.msra.mxu0 0.0
    %933 = vmatprep.subr.mxu0 0.0
    %934 = vmatpush1.msra.mxu0 0.0
    %935 = vmatprep.subr.mxu0 0.0
    %936 = vmatpush1.msra.mxu0 0.0
    %937 = vmatprep.subr.mxu0 0.0
    %938 = vmatpush1.msra.mxu0 0.0
    %939 = vmatprep.subr.mxu0 0.0
    %940 = vmatpush1.msra.mxu0 0.0
    %941 = vmatprep.subr.mxu0 0.0
    %942 = vmatpush1.msra.mxu0 0.0
    %943 = vmatprep.subr.mxu0 0.0
    %944 = vmatpush1.msra.mxu0 0.0
    %945 = vmatprep.subr.mxu0 0.0
    %946 = vmatpush1.msra.mxu0 0.0
    %947 = vmatprep.subr.mxu0 0.0
    %948 = vmatpush1.msra.mxu0 0.0
    %949 = vmatprep.subr.mxu0 0.0
    %950 = vmatpush1.msra.mxu0 0.0
    %951 = vmatprep.subr.mxu0 0.0
    %952 = vmatpush1.msra.mxu0 0.0
    %953 = vmatprep.subr.mxu0 0.0
    %954 = vmatpush1.msra.mxu0 0.0
    %955 = vmatprep.subr.mxu0 0.0
    %956 = vmatpush1.msra.mxu0 0.0
    %957 = vmatprep.subr.mxu0 0.0
    %958 = vmatpush1.msra.mxu0 %v75
    %959 = vmatprep.subr.mxu0 0.0
    %960 = vmatpush2.msra.mxu0 0.0
    %961 = vmatprep.subr.mxu0 0.0
    %962 = vmatpush2.msra.mxu0 0.0
    %963 = vmatprep.subr.mxu0 0.0
    %964 = vmatpush2.msra.mxu0 0.0
    %965 = vmatprep.subr.mxu0 0.0
    %966 = vmatpush2.msra.mxu0 0.0
    %967 = vmatprep.subr.mxu0 0.0
    %968 = vmatpush2.msra.mxu0 0.0
    %969 = vmatprep.subr.mxu0 0.0
    %970 = vmatpush2.msra.mxu0 0.0
    %971 = vmatprep.subr.mxu0 0.0
    %972 = vmatpush2.msra.mxu0 0.0
    %973 = vmatprep.subr.mxu0 0.0
    %974 = vmatpush2.msra.mxu0 0.0
    %975 = vmatprep.subr.mxu0 0.0
    %976 = vmatpush2.msra.mxu0 0.0
    %977 = vmatprep.subr.mxu0 0.0
    %978 = vmatpush2.msra.mxu0 0.0
    %979 = vmatprep.subr.mxu0 0.0
    %980 = vmatpush2.msra.mxu0 0.0
    %981 = vmatprep.subr.mxu0 0.0
    %982 = vmatpush2.msra.mxu0 0.0
    %983 = vmatprep.subr.mxu0 0.0
    %984 = vmatpush2.msra.mxu0 0.0
    %985 = vmatprep.subr.mxu0 0.0
    %986 = vmatpush2.msra.mxu0 0.0
    %987 = vmatprep.subr.mxu0 0.0
    %988 = vmatpush2.msra.mxu0 0.0
    %989 = vmatprep.subr.mxu0 0.0
    %990 = vmatpush2.msra.mxu0 0.0
    %991 = vmatprep.mubr.f32.mxu0 0.0
    %992 = vmatmul.mubr.f32.gmra.mxu0 %v922
    %v993 = vpop.f32.mrf.mxu0
    %v994 = vadd.f32 %v913, %v993
    %v995 = vpop.f32.mrf.mxu0
    %996 = vmatprep.mubr.f32.mxu0 0.0
    %997 = vmatmul.mubr.f32.gmra.mxu0 %v925
    %v998 = vpop.f32.mrf.mxu0
    %v999 = vadd.f32 %v918, %v998
    %v1000 = vpop.f32.mrf.mxu0
    %1001 = vdwg.mxu0
    %1002 = vrot.lane.b32.xlu0 %v177, 112
    %v1003 = vpop.permute.xlu0 %1002
    %1004 = vrot.lane.b32.xlu0 %v169, 80
    %v1005 = vpop.permute.xlu0 %1004
    %v1006 = vsel %vm182, %v1003, 0
    %v1008 = vsel %vm182, %v1005, 0
    %1010 = vmatprep.subr.mxu0 0.0
    %1011 = vmatpush1.xpose.msra.mxu0 0.0
    %1012 = vmatprep.subr.mxu0 0.0
    %1013 = vmatpush1.xpose.msra.mxu0 0.0
    %1014 = vmatprep.subr.mxu0 0.0
    %1015 = vmatpush1.xpose.msra.mxu0 0.0
    %1016 = vmatprep.subr.mxu0 0.0
    %1017 = vmatpush1.xpose.msra.mxu0 0.0
    %1018 = vmatprep.subr.mxu0 0.0
    %1019 = vmatpush1.xpose.msra.mxu0 0.0
    %1020 = vmatprep.subr.mxu0 0.0
    %1021 = vmatpush1.xpose.msra.mxu0 0.0
    %1022 = vmatprep.subr.mxu0 0.0
    %1023 = vmatpush1.xpose.msra.mxu0 0.0
    %1024 = vmatprep.subr.mxu0 0.0
    %1025 = vmatpush1.xpose.msra.mxu0 0.0
    %1026 = vmatprep.subr.mxu0 0.0
    %1027 = vmatpush1.xpose.msra.mxu0 0.0
    %1028 = vmatprep.subr.mxu0 0.0
    %1029 = vmatpush1.xpose.msra.mxu0 0.0
    %1030 = vmatprep.subr.mxu0 0.0
    %1031 = vmatpush1.xpose.msra.mxu0 0.0
    %1032 = vmatprep.subr.mxu0 0.0
    %1033 = vmatpush1.xpose.msra.mxu0 0.0
    %1034 = vmatprep.subr.mxu0 0.0
    %1035 = vmatpush1.xpose.msra.mxu0 0.0
    %1036 = vmatprep.subr.mxu0 0.0
    %1037 = vmatpush1.xpose.msra.mxu0 0.0
    %1038 = vmatprep.subr.mxu0 0.0
    %1039 = vmatpush1.xpose.msra.mxu0 0.0
    %1040 = vmatprep.subr.mxu0 0.0
    %1041 = vmatpush1.xpose.msra.mxu0 %v1008
    %1042 = vmatprep.subr.mxu0 0.0
    %1043 = vmatpush2.xpose.msra.mxu0 0.0
    %1044 = vmatprep.subr.mxu0 0.0
    %1045 = vmatpush2.xpose.msra.mxu0 0.0
    %1046 = vmatprep.subr.mxu0 0.0
    %1047 = vmatpush2.xpose.msra.mxu0 0.0
    %1048 = vmatprep.subr.mxu0 0.0
    %1049 = vmatpush2.xpose.msra.mxu0 0.0
    %1050 = vmatprep.subr.mxu0 0.0
    %1051 = vmatpush2.xpose.msra.mxu0 0.0
    %1052 = vmatprep.subr.mxu0 0.0
    %1053 = vmatpush2.xpose.msra.mxu0 0.0
    %1054 = vmatprep.subr.mxu0 0.0
    %1055 = vmatpush2.xpose.msra.mxu0 0.0
    %1056 = vmatprep.subr.mxu0 0.0
    %1057 = vmatpush2.xpose.msra.mxu0 0.0
    %1058 = vmatprep.subr.mxu0 0.0
    %1059 = vmatpush2.xpose.msra.mxu0 0.0
    %1060 = vmatprep.subr.mxu0 0.0
    %1061 = vmatpush2.xpose.msra.mxu0 0.0
    %1062 = vmatprep.subr.mxu0 0.0
    %1063 = vmatpush2.xpose.msra.mxu0 0.0
    %1064 = vmatprep.subr.mxu0 0.0
    %1065 = vmatpush2.xpose.msra.mxu0 0.0
    %1066 = vmatprep.subr.mxu0 0.0
    %1067 = vmatpush2.xpose.msra.mxu0 0.0
    %1068 = vmatprep.subr.mxu0 0.0
    %1069 = vmatpush2.xpose.msra.mxu0 0.0
    %1070 = vmatprep.subr.mxu0 0.0
    %1071 = vmatpush2.xpose.msra.mxu0 0.0
    %1072 = vmatprep.subr.mxu0 0.0
    %1073 = vmatpush2.xpose.msra.mxu0 0.0
    %1074 = vmatprep.mubr.f32.mxu0 0.0
    %1075 = vmatmul.mubr.f32.gmra.mxu0 %v1006
    %v1076 = vpop.f32.mrf.mxu0
    %v1077 = vadd.f32 0.0, %v1076
    %v1078 = vpop.f32.mrf.mxu0
    %1079 = vdwg.mxu0
    %1080 = vrot.lane.b32.xlu0 %v178, 112
    %v1081 = vpop.permute.xlu0 %1080
    %1082 = vrot.lane.b32.xlu0 %v174, 80
    %v1083 = vpop.permute.xlu0 %1082
    %v1084 = vsel %vm182, %v1081, 0
    %v1086 = vsel %vm182, %v1083, 0
    %1088 = vmatprep.subr.mxu0 0.0
    %1089 = vmatpush1.xpose.msra.mxu0 0.0
    %1090 = vmatprep.subr.mxu0 0.0
    %1091 = vmatpush1.xpose.msra.mxu0 0.0
    %1092 = vmatprep.subr.mxu0 0.0
    %1093 = vmatpush1.xpose.msra.mxu0 0.0
    %1094 = vmatprep.subr.mxu0 0.0
    %1095 = vmatpush1.xpose.msra.mxu0 0.0
    %1096 = vmatprep.subr.mxu0 0.0
    %1097 = vmatpush1.xpose.msra.mxu0 0.0
    %1098 = vmatprep.subr.mxu0 0.0
    %1099 = vmatpush1.xpose.msra.mxu0 0.0
    %1100 = vmatprep.subr.mxu0 0.0
    %1101 = vmatpush1.xpose.msra.mxu0 0.0
    %1102 = vmatprep.subr.mxu0 0.0
    %1103 = vmatpush1.xpose.msra.mxu0 0.0
    %1104 = vmatprep.subr.mxu0 0.0
    %1105 = vmatpush1.xpose.msra.mxu0 0.0
    %1106 = vmatprep.subr.mxu0 0.0
    %1107 = vmatpush1.xpose.msra.mxu0 0.0
    %1108 = vmatprep.subr.mxu0 0.0
    %1109 = vmatpush1.xpose.msra.mxu0 0.0
    %1110 = vmatprep.subr.mxu0 0.0
    %1111 = vmatpush1.xpose.msra.mxu0 0.0
    %1112 = vmatprep.subr.mxu0 0.0
    %1113 = vmatpush1.xpose.msra.mxu0 0.0
    %1114 = vmatprep.subr.mxu0 0.0
    %1115 = vmatpush1.xpose.msra.mxu0 0.0
    %1116 = vmatprep.subr.mxu0 0.0
    %1117 = vmatpush1.xpose.msra.mxu0 0.0
    %1118 = vmatprep.subr.mxu0 0.0
    %1119 = vmatpush1.xpose.msra.mxu0 %v1086
    %1120 = vmatprep.subr.mxu0 0.0
    %1121 = vmatpush2.xpose.msra.mxu0 0.0
    %1122 = vmatprep.subr.mxu0 0.0
    %1123 = vmatpush2.xpose.msra.mxu0 0.0
    %1124 = vmatprep.subr.mxu0 0.0
    %1125 = vmatpush2.xpose.msra.mxu0 0.0
    %1126 = vmatprep.subr.mxu0 0.0
    %1127 = vmatpush2.xpose.msra.mxu0 0.0
    %1128 = vmatprep.subr.mxu0 0.0
    %1129 = vmatpush2.xpose.msra.mxu0 0.0
    %1130 = vmatprep.subr.mxu0 0.0
    %1131 = vmatpush2.xpose.msra.mxu0 0.0
    %1132 = vmatprep.subr.mxu0 0.0
    %1133 = vmatpush2.xpose.msra.mxu0 0.0
    %1134 = vmatprep.subr.mxu0 0.0
    %1135 = vmatpush2.xpose.msra.mxu0 0.0
    %1136 = vmatprep.subr.mxu0 0.0
    %1137 = vmatpush2.xpose.msra.mxu0 0.0
    %1138 = vmatprep.subr.mxu0 0.0
    %1139 = vmatpush2.xpose.msra.mxu0 0.0
    %1140 = vmatprep.subr.mxu0 0.0
    %1141 = vmatpush2.xpose.msra.mxu0 0.0
    %1142 = vmatprep.subr.mxu0 0.0
    %1143 = vmatpush2.xpose.msra.mxu0 0.0
    %1144 = vmatprep.subr.mxu0 0.0
    %1145 = vmatpush2.xpose.msra.mxu0 0.0
    %1146 = vmatprep.subr.mxu0 0.0
    %1147 = vmatpush2.xpose.msra.mxu0 0.0
    %1148 = vmatprep.subr.mxu0 0.0
    %1149 = vmatpush2.xpose.msra.mxu0 0.0
    %1150 = vmatprep.subr.mxu0 0.0
    %1151 = vmatpush2.xpose.msra.mxu0 0.0
    %1152 = vmatprep.mubr.f32.mxu0 0.0
    %1153 = vmatmul.mubr.f32.gmra.mxu0 %v1084
    %v1154 = vpop.f32.mrf.mxu0
    %v1155 = vadd.f32 0.0, %v1154
    %v1156 = vpop.f32.mrf.mxu0
    %1157 = vdwg.mxu0
    %v1158 = vsel %vm182, %v1077, -inf
    %1159 = vmax.xlane.f32.xlu0 %v1158
    %v1160 = vpop.xlane.xlu0 %1159
    %v1161 = vsel %vm182, %v1155, -inf
    %1162 = vmax.xlane.f32.xlu0 %v1161
    %v1163 = vpop.xlane.xlu0 %1162
    %v1164 = vsub.f32 %v1077, %v1160
    %v1165 = vsub.f32 %v1155, %v1163
    %v1166 = vmul.f32 %v1164, 1.442695
    %v1167 = vpow.pop %v1166
    %v1168 = vmul.f32 %v1165, 1.442695
    %v1169 = vpow.pop %v1168
    %v1170 = vsel %vm182, %v1167, 0.0
    %1171 = vadd.xlane.f32.xlu0 %v1170
    %v1172 = vpop.xlane.xlu0 %1171
    %v1173 = vsel %vm182, %v1169, 0.0
    %1174 = vadd.xlane.f32.xlu0 %v1173
    %v1175 = vpop.xlane.xlu0 %1174
    %v1176 = vrcp.pop %v1172
    %v1177 = vmul.f32 %v1167, %v1176
    %v1178 = vrcp.pop %v1175
    %v1179 = vmul.f32 %v1169, %v1178
    %1180 = vrot.lane.b32.xlu0 %v169, 48
    %v1181 = vpop.permute.xlu0 %1180
    %v1184 = vsel %vm182, %v1177, 0
    %1186 = vmatprep.subr.mxu0 0.0
    %1187 = vmatpush1.msra.mxu0 0.0
    %1188 = vmatprep.subr.mxu0 0.0
    %1189 = vmatpush1.msra.mxu0 0.0
    %1190 = vmatprep.subr.mxu0 0.0
    %1191 = vmatpush1.msra.mxu0 0.0
    %1192 = vmatprep.subr.mxu0 0.0
    %1193 = vmatpush1.msra.mxu0 0.0
    %1194 = vmatprep.subr.mxu0 0.0
    %1195 = vmatpush1.msra.mxu0 0.0
    %1196 = vmatprep.subr.mxu0 0.0
    %1197 = vmatpush1.msra.mxu0 0.0
    %1198 = vmatprep.subr.mxu0 0.0
    %1199 = vmatpush1.msra.mxu0 0.0
    %1200 = vmatprep.subr.mxu0 0.0
    %1201 = vmatpush1.msra.mxu0 0.0
    %1202 = vmatprep.subr.mxu0 0.0
    %1203 = vmatpush1.msra.mxu0 0.0
    %1204 = vmatprep.subr.mxu0 0.0
    %1205 = vmatpush1.msra.mxu0 0.0
    %1206 = vmatprep.subr.mxu0 0.0
    %1207 = vmatpush1.msra.mxu0 0.0
    %1208 = vmatprep.subr.mxu0 0.0
    %1209 = vmatpush1.msra.mxu0 0.0
    %1210 = vmatprep.subr.mxu0 0.0
    %1211 = vmatpush1.msra.mxu0 0.0
    %1212 = vmatprep.subr.mxu0 0.0
    %1213 = vmatpush1.msra.mxu0 0.0
    %1214 = vmatprep.subr.mxu0 0.0
    %1215 = vmatpush1.msra.mxu0 0.0
    %1216 = vmatprep.subr.mxu0 0.0
    %1217 = vmatpush1.msra.mxu0 %v1181
    %1218 = vmatprep.subr.mxu0 0.0
    %1219 = vmatpush2.msra.mxu0 0.0
    %1220 = vmatprep.subr.mxu0 0.0
    %1221 = vmatpush2.msra.mxu0 0.0
    %1222 = vmatprep.subr.mxu0 0.0
    %1223 = vmatpush2.msra.mxu0 0.0
    %1224 = vmatprep.subr.mxu0 0.0
    %1225 = vmatpush2.msra.mxu0 0.0
    %1226 = vmatprep.subr.mxu0 0.0
    %1227 = vmatpush2.msra.mxu0 0.0
    %1228 = vmatprep.subr.mxu0 0.0
    %1229 = vmatpush2.msra.mxu0 0.0
    %1230 = vmatprep.subr.mxu0 0.0
    %1231 = vmatpush2.msra.mxu0 0.0
    %1232 = vmatprep.subr.mxu0 0.0
    %1233 = vmatpush2.msra.mxu0 0.0
    %1234 = vmatprep.subr.mxu0 0.0
    %1235 = vmatpush2.msra.mxu0 0.0
    %1236 = vmatprep.subr.mxu0 0.0
    %1237 = vmatpush2.msra.mxu0 0.0
    %1238 = vmatprep.subr.mxu0 0.0
    %1239 = vmatpush2.msra.mxu0 0.0
    %1240 = vmatprep.subr.mxu0 0.0
    %1241 = vmatpush2.msra.mxu0 0.0
    %1242 = vmatprep.subr.mxu0 0.0
    %1243 = vmatpush2.msra.mxu0 0.0
    %1244 = vmatprep.subr.mxu0 0.0
    %1245 = vmatpush2.msra.mxu0 0.0
    %1246 = vmatprep.subr.mxu0 0.0
    %1247 = vmatpush2.msra.mxu0 0.0
    %1248 = vmatprep.subr.mxu0 0.0
    %1249 = vmatpush2.msra.mxu0 0.0
    %1250 = vmatprep.mubr.f32.mxu0 0.0
    %1251 = vmatmul.mubr.f32.gmra.mxu0 %v1184
    %v1252 = vpop.f32.mrf.mxu0
    %v1253 = vadd.f32 0.0, %v1252
    %v1254 = vpop.f32.mrf.mxu0
    %1255 = vdwg.mxu0
    %1256 = vrot.lane.b32.xlu0 %v174, 48
    %v1257 = vpop.permute.xlu0 %1256
    %v1260 = vsel %vm182, %v1179, 0
    %1262 = vmatprep.subr.mxu0 0.0
    %1263 = vmatpush1.msra.mxu0 0.0
    %1264 = vmatprep.subr.mxu0 0.0
    %1265 = vmatpush1.msra.mxu0 0.0
    %1266 = vmatprep.subr.mxu0 0.0
    %1267 = vmatpush1.msra.mxu0 0.0
    %1268 = vmatprep.subr.mxu0 0.0
    %1269 = vmatpush1.msra.mxu0 0.0
    %1270 = vmatprep.subr.mxu0 0.0
    %1271 = vmatpush1.msra.mxu0 0.0
    %1272 = vmatprep.subr.mxu0 0.0
    %1273 = vmatpush1.msra.mxu0 0.0
    %1274 = vmatprep.subr.mxu0 0.0
    %1275 = vmatpush1.msra.mxu0 0.0
    %1276 = vmatprep.subr.mxu0 0.0
    %1277 = vmatpush1.msra.mxu0 0.0
    %1278 = vmatprep.subr.mxu0 0.0
    %1279 = vmatpush1.msra.mxu0 0.0
    %1280 = vmatprep.subr.mxu0 0.0
    %1281 = vmatpush1.msra.mxu0 0.0
    %1282 = vmatprep.subr.mxu0 0.0
    %1283 = vmatpush1.msra.mxu0 0.0
    %1284 = vmatprep.subr.mxu0 0.0
    %1285 = vmatpush1.msra.mxu0 0.0
    %1286 = vmatprep.subr.mxu0 0.0
    %1287 = vmatpush1.msra.mxu0 0.0
    %1288 = vmatprep.subr.mxu0 0.0
    %1289 = vmatpush1.msra.mxu0 0.0
    %1290 = vmatprep.subr.mxu0 0.0
    %1291 = vmatpush1.msra.mxu0 0.0
    %1292 = vmatprep.subr.mxu0 0.0
    %1293 = vmatpush1.msra.mxu0 %v1257
    %1294 = vmatprep.subr.mxu0 0.0
    %1295 = vmatpush2.msra.mxu0 0.0
    %1296 = vmatprep.subr.mxu0 0.0
    %1297 = vmatpush2.msra.mxu0 0.0
    %1298 = vmatprep.subr.mxu0 0.0
    %1299 = vmatpush2.msra.mxu0 0.0
    %1300 = vmatprep.subr.mxu0 0.0
    %1301 = vmatpush2.msra.mxu0 0.0
    %1302 = vmatprep.subr.mxu0 0.0
    %1303 = vmatpush2.msra.mxu0 0.0
    %1304 = vmatprep.subr.mxu0 0.0
    %1305 = vmatpush2.msra.mxu0 0.0
    %1306 = vmatprep.subr.mxu0 0.0
    %1307 = vmatpush2.msra.mxu0 0.0
    %1308 = vmatprep.subr.mxu0 0.0
    %1309 = vmatpush2.msra.mxu0 0.0
    %1310 = vmatprep.subr.mxu0 0.0
    %1311 = vmatpush2.msra.mxu0 0.0
    %1312 = vmatprep.subr.mxu0 0.0
    %1313 = vmatpush2.msra.mxu0 0.0
    %1314 = vmatprep.subr.mxu0 0.0
    %1315 = vmatpush2.msra.mxu0 0.0
    %1316 = vmatprep.subr.mxu0 0.0
    %1317 = vmatpush2.msra.mxu0 0.0
    %1318 = vmatprep.subr.mxu0 0.0
    %1319 = vmatpush2.msra.mxu0 0.0
    %1320 = vmatprep.subr.mxu0 0.0
    %1321 = vmatpush2.msra.mxu0 0.0
    %1322 = vmatprep.subr.mxu0 0.0
    %1323 = vmatpush2.msra.mxu0 0.0
    %1324 = vmatprep.subr.mxu0 0.0
    %1325 = vmatpush2.msra.mxu0 0.0
    %1326 = vmatprep.mubr.f32.mxu0 0.0
    %1327 = vmatmul.mubr.f32.gmra.mxu0 %v1260
    %v1328 = vpop.f32.mrf.mxu0
    %v1329 = vadd.f32 0.0, %v1328
    %v1330 = vpop.f32.mrf.mxu0
    %1331 = vdwg.mxu0
    %v1333 = vsel %vm182, %v1253, 0
    %v1336 = vsel %vm182, %v1329, 0
    %1338 = vmatprep.subr.mxu0 0.0
    %1339 = vmatpush1.msra.mxu0 0.0
    %1340 = vmatprep.subr.mxu0 0.0
    %1341 = vmatpush1.msra.mxu0 0.0
    %1342 = vmatprep.subr.mxu0 0.0
    %1343 = vmatpush1.msra.mxu0 0.0
    %1344 = vmatprep.subr.mxu0 0.0
    %1345 = vmatpush1.msra.mxu0 0.0
    %1346 = vmatprep.subr.mxu0 0.0
    %1347 = vmatpush1.msra.mxu0 0.0
    %1348 = vmatprep.subr.mxu0 0.0
    %1349 = vmatpush1.msra.mxu0 0.0
    %1350 = vmatprep.subr.mxu0 0.0
    %1351 = vmatpush1.msra.mxu0 0.0
    %1352 = vmatprep.subr.mxu0 0.0
    %1353 = vmatpush1.msra.mxu0 0.0
    %1354 = vmatprep.subr.mxu0 0.0
    %1355 = vmatpush1.msra.mxu0 0.0
    %1356 = vmatprep.subr.mxu0 0.0
    %1357 = vmatpush1.msra.mxu0 0.0
    %1358 = vmatprep.subr.mxu0 0.0
    %1359 = vmatpush1.msra.mxu0 0.0
    %1360 = vmatprep.subr.mxu0 0.0
    %1361 = vmatpush1.msra.mxu0 0.0
    %1362 = vmatprep.subr.mxu0 0.0
    %1363 = vmatpush1.msra.mxu0 0.0
    %1364 = vmatprep.subr.mxu0 0.0
    %1365 = vmatpush1.msra.mxu0 0.0
    %1366 = vmatprep.subr.mxu0 0.0
    %1367 = vmatpush1.msra.mxu0 0.0
    %1368 = vmatprep.subr.mxu0 0.0
    %1369 = vmatpush1.msra.mxu0 %v77
    %1370 = vmatprep.subr.mxu0 0.0
    %1371 = vmatpush2.msra.mxu0 0.0
    %1372 = vmatprep.subr.mxu0 0.0
    %1373 = vmatpush2.msra.mxu0 0.0
    %1374 = vmatprep.subr.mxu0 0.0
    %1375 = vmatpush2.msra.mxu0 0.0
    %1376 = vmatprep.subr.mxu0 0.0
    %1377 = vmatpush2.msra.mxu0 0.0
    %1378 = vmatprep.subr.mxu0 0.0
    %1379 = vmatpush2.msra.mxu0 0.0
    %1380 = vmatprep.subr.mxu0 0.0
    %1381 = vmatpush2.msra.mxu0 0.0
    %1382 = vmatprep.subr.mxu0 0.0
    %1383 = vmatpush2.msra.mxu0 0.0
    %1384 = vmatprep.subr.mxu0 0.0
    %1385 = vmatpush2.msra.mxu0 0.0
    %1386 = vmatprep.subr.mxu0 0.0
    %1387 = vmatpush2.msra.mxu0 0.0
    %1388 = vmatprep.subr.mxu0 0.0
    %1389 = vmatpush2.msra.mxu0 0.0
    %1390 = vmatprep.subr.mxu0 0.0
    %1391 = vmatpush2.msra.mxu0 0.0
    %1392 = vmatprep.subr.mxu0 0.0
    %1393 = vmatpush2.msra.mxu0 0.0
    %1394 = vmatprep.subr.mxu0 0.0
    %1395 = vmatpush2.msra.mxu0 0.0
    %1396 = vmatprep.subr.mxu0 0.0
    %1397 = vmatpush2.msra.mxu0 0.0
    %1398 = vmatprep.subr.mxu0 0.0
    %1399 = vmatpush2.msra.mxu0 0.0
    %1400 = vmatprep.subr.mxu0 0.0
    %1401 = vmatpush2.msra.mxu0 0.0
    %1402 = vmatprep.mubr.f32.mxu0 0.0
    %1403 = vmatmul.mubr.f32.gmra.mxu0 %v1333
    %v1404 = vpop.f32.mrf.mxu0
    %v1405 = vadd.f32 0.0, %v1404
    %v1406 = vpop.f32.mrf.mxu0
    %1407 = vmatprep.mubr.f32.mxu0 0.0
    %1408 = vmatmul.mubr.f32.gmra.mxu0 %v1336
    %v1409 = vpop.f32.mrf.mxu0
    %v1410 = vadd.f32 0.0, %v1409
    %v1411 = vpop.f32.mrf.mxu0
    %1412 = vdwg.mxu0
    %v1413 = vadd.f32 %v994, %v1405
    %v1414 = vadd.f32 %v999, %v1410
    %1415 = vrot.lane.b32.xlu0 %v177, 104
    %v1416 = vpop.permute.xlu0 %1415
    %1417 = vrot.lane.b32.xlu0 %v169, 72
    %v1418 = vpop.permute.xlu0 %1417
    %v1419 = vsel %vm182, %v1416, 0
    %v1421 = vsel %vm182, %v1418, 0
    %1423 = vmatprep.subr.mxu0 0.0
    %1424 = vmatpush1.xpose.msra.mxu0 0.0
    %1425 = vmatprep.subr.mxu0 0.0
    %1426 = vmatpush1.xpose.msra.mxu0 0.0
    %1427 = vmatprep.subr.mxu0 0.0
    %1428 = vmatpush1.xpose.msra.mxu0 0.0
    %1429 = vmatprep.subr.mxu0 0.0
    %1430 = vmatpush1.xpose.msra.mxu0 0.0
    %1431 = vmatprep.subr.mxu0 0.0
    %1432 = vmatpush1.xpose.msra.mxu0 0.0
    %1433 = vmatprep.subr.mxu0 0.0
    %1434 = vmatpush1.xpose.msra.mxu0 0.0
    %1435 = vmatprep.subr.mxu0 0.0
    %1436 = vmatpush1.xpose.msra.mxu0 0.0
    %1437 = vmatprep.subr.mxu0 0.0
    %1438 = vmatpush1.xpose.msra.mxu0 0.0
    %1439 = vmatprep.subr.mxu0 0.0
    %1440 = vmatpush1.xpose.msra.mxu0 0.0
    %1441 = vmatprep.subr.mxu0 0.0
    %1442 = vmatpush1.xpose.msra.mxu0 0.0
    %1443 = vmatprep.subr.mxu0 0.0
    %1444 = vmatpush1.xpose.msra.mxu0 0.0
    %1445 = vmatprep.subr.mxu0 0.0
    %1446 = vmatpush1.xpose.msra.mxu0 0.0
    %1447 = vmatprep.subr.mxu0 0.0
    %1448 = vmatpush1.xpose.msra.mxu0 0.0
    %1449 = vmatprep.subr.mxu0 0.0
    %1450 = vmatpush1.xpose.msra.mxu0 0.0
    %1451 = vmatprep.subr.mxu0 0.0
    %1452 = vmatpush1.xpose.msra.mxu0 0.0
    %1453 = vmatprep.subr.mxu0 0.0
    %1454 = vmatpush1.xpose.msra.mxu0 %v1421
    %1455 = vmatprep.subr.mxu0 0.0
    %1456 = vmatpush2.xpose.msra.mxu0 0.0
    %1457 = vmatprep.subr.mxu0 0.0
    %1458 = vmatpush2.xpose.msra.mxu0 0.0
    %1459 = vmatprep.subr.mxu0 0.0
    %1460 = vmatpush2.xpose.msra.mxu0 0.0
    %1461 = vmatprep.subr.mxu0 0.0
    %1462 = vmatpush2.xpose.msra.mxu0 0.0
    %1463 = vmatprep.subr.mxu0 0.0
    %1464 = vmatpush2.xpose.msra.mxu0 0.0
    %1465 = vmatprep.subr.mxu0 0.0
    %1466 = vmatpush2.xpose.msra.mxu0 0.0
    %1467 = vmatprep.subr.mxu0 0.0
    %1468 = vmatpush2.xpose.msra.mxu0 0.0
    %1469 = vmatprep.subr.mxu0 0.0
    %1470 = vmatpush2.xpose.msra.mxu0 0.0
    %1471 = vmatprep.subr.mxu0 0.0
    %1472 = vmatpush2.xpose.msra.mxu0 0.0
    %1473 = vmatprep.subr.mxu0 0.0
    %1474 = vmatpush2.xpose.msra.mxu0 0.0
    %1475 = vmatprep.subr.mxu0 0.0
    %1476 = vmatpush2.xpose.msra.mxu0 0.0
    %1477 = vmatprep.subr.mxu0 0.0
    %1478 = vmatpush2.xpose.msra.mxu0 0.0
    %1479 = vmatprep.subr.mxu0 0.0
    %1480 = vmatpush2.xpose.msra.mxu0 0.0
    %1481 = vmatprep.subr.mxu0 0.0
    %1482 = vmatpush2.xpose.msra.mxu0 0.0
    %1483 = vmatprep.subr.mxu0 0.0
    %1484 = vmatpush2.xpose.msra.mxu0 0.0
    %1485 = vmatprep.subr.mxu0 0.0
    %1486 = vmatpush2.xpose.msra.mxu0 0.0
    %1487 = vmatprep.mubr.f32.mxu0 0.0
    %1488 = vmatmul.mubr.f32.gmra.mxu0 %v1419
    %v1489 = vpop.f32.mrf.mxu0
    %v1490 = vadd.f32 0.0, %v1489
    %v1491 = vpop.f32.mrf.mxu0
    %1492 = vdwg.mxu0
    %1493 = vrot.lane.b32.xlu0 %v178, 104
    %v1494 = vpop.permute.xlu0 %1493
    %1495 = vrot.lane.b32.xlu0 %v174, 72
    %v1496 = vpop.permute.xlu0 %1495
    %v1497 = vsel %vm182, %v1494, 0
    %v1499 = vsel %vm182, %v1496, 0
    %1501 = vmatprep.subr.mxu0 0.0
    %1502 = vmatpush1.xpose.msra.mxu0 0.0
    %1503 = vmatprep.subr.mxu0 0.0
    %1504 = vmatpush1.xpose.msra.mxu0 0.0
    %1505 = vmatprep.subr.mxu0 0.0
    %1506 = vmatpush1.xpose.msra.mxu0 0.0
    %1507 = vmatprep.subr.mxu0 0.0
    %1508 = vmatpush1.xpose.msra.mxu0 0.0
    %1509 = vmatprep.subr.mxu0 0.0
    %1510 = vmatpush1.xpose.msra.mxu0 0.0
    %1511 = vmatprep.subr.mxu0 0.0
    %1512 = vmatpush1.xpose.msra.mxu0 0.0
    %1513 = vmatprep.subr.mxu0 0.0
    %1514 = vmatpush1.xpose.msra.mxu0 0.0
    %1515 = vmatprep.subr.mxu0 0.0
    %1516 = vmatpush1.xpose.msra.mxu0 0.0
    %1517 = vmatprep.subr.mxu0 0.0
    %1518 = vmatpush1.xpose.msra.mxu0 0.0
    %1519 = vmatprep.subr.mxu0 0.0
    %1520 = vmatpush1.xpose.msra.mxu0 0.0
    %1521 = vmatprep.subr.mxu0 0.0
    %1522 = vmatpush1.xpose.msra.mxu0 0.0
    %1523 = vmatprep.subr.mxu0 0.0
    %1524 = vmatpush1.xpose.msra.mxu0 0.0
    %1525 = vmatprep.subr.mxu0 0.0
    %1526 = vmatpush1.xpose.msra.mxu0 0.0
    %1527 = vmatprep.subr.mxu0 0.0
    %1528 = vmatpush1.xpose.msra.mxu0 0.0
    %1529 = vmatprep.subr.mxu0 0.0
    %1530 = vmatpush1.xpose.msra.mxu0 0.0
    %1531 = vmatprep.subr.mxu0 0.0
    %1532 = vmatpush1.xpose.msra.mxu0 %v1499
    %1533 = vmatprep.subr.mxu0 0.0
    %1534 = vmatpush2.xpose.msra.mxu0 0.0
    %1535 = vmatprep.subr.mxu0 0.0
    %1536 = vmatpush2.xpose.msra.mxu0 0.0
    %1537 = vmatprep.subr.mxu0 0.0
    %1538 = vmatpush2.xpose.msra.mxu0 0.0
    %1539 = vmatprep.subr.mxu0 0.0
    %1540 = vmatpush2.xpose.msra.mxu0 0.0
    %1541 = vmatprep.subr.mxu0 0.0
    %1542 = vmatpush2.xpose.msra.mxu0 0.0
    %1543 = vmatprep.subr.mxu0 0.0
    %1544 = vmatpush2.xpose.msra.mxu0 0.0
    %1545 = vmatprep.subr.mxu0 0.0
    %1546 = vmatpush2.xpose.msra.mxu0 0.0
    %1547 = vmatprep.subr.mxu0 0.0
    %1548 = vmatpush2.xpose.msra.mxu0 0.0
    %1549 = vmatprep.subr.mxu0 0.0
    %1550 = vmatpush2.xpose.msra.mxu0 0.0
    %1551 = vmatprep.subr.mxu0 0.0
    %1552 = vmatpush2.xpose.msra.mxu0 0.0
    %1553 = vmatprep.subr.mxu0 0.0
    %1554 = vmatpush2.xpose.msra.mxu0 0.0
    %1555 = vmatprep.subr.mxu0 0.0
    %1556 = vmatpush2.xpose.msra.mxu0 0.0
    %1557 = vmatprep.subr.mxu0 0.0
    %1558 = vmatpush2.xpose.msra.mxu0 0.0
    %1559 = vmatprep.subr.mxu0 0.0
    %1560 = vmatpush2.xpose.msra.mxu0 0.0
    %1561 = vmatprep.subr.mxu0 0.0
    %1562 = vmatpush2.xpose.msra.mxu0 0.0
    %1563 = vmatprep.subr.mxu0 0.0
    %1564 = vmatpush2.xpose.msra.mxu0 0.0
    %1565 = vmatprep.mubr.f32.mxu0 0.0
    %1566 = vmatmul.mubr.f32.gmra.mxu0 %v1497
    %v1567 = vpop.f32.mrf.mxu0
    %v1568 = vadd.f32 0.0, %v1567
    %v1569 = vpop.f32.mrf.mxu0
    %1570 = vdwg.mxu0
    %v1571 = vsel %vm182, %v1490, -inf
    %1572 = vmax.xlane.f32.xlu0 %v1571
    %v1573 = vpop.xlane.xlu0 %1572
    %v1574 = vsel %vm182, %v1568, -inf
    %1575 = vmax.xlane.f32.xlu0 %v1574
    %v1576 = vpop.xlane.xlu0 %1575
    %v1577 = vsub.f32 %v1490, %v1573
    %v1578 = vsub.f32 %v1568, %v1576
    %v1579 = vmul.f32 %v1577, 1.442695
    %v1580 = vpow.pop %v1579
    %v1581 = vmul.f32 %v1578, 1.442695
    %v1582 = vpow.pop %v1581
    %v1583 = vsel %vm182, %v1580, 0.0
    %1584 = vadd.xlane.f32.xlu0 %v1583
    %v1585 = vpop.xlane.xlu0 %1584
    %v1586 = vsel %vm182, %v1582, 0.0
    %1587 = vadd.xlane.f32.xlu0 %v1586
    %v1588 = vpop.xlane.xlu0 %1587
    %v1589 = vrcp.pop %v1585
    %v1590 = vmul.f32 %v1580, %v1589
    %v1591 = vrcp.pop %v1588
    %v1592 = vmul.f32 %v1582, %v1591
    %1593 = vrot.lane.b32.xlu0 %v169, 40
    %v1594 = vpop.permute.xlu0 %1593
    %v1597 = vsel %vm182, %v1590, 0
    %1599 = vmatprep.subr.mxu0 0.0
    %1600 = vmatpush1.msra.mxu0 0.0
    %1601 = vmatprep.subr.mxu0 0.0
    %1602 = vmatpush1.msra.mxu0 0.0
    %1603 = vmatprep.subr.mxu0 0.0
    %1604 = vmatpush1.msra.mxu0 0.0
    %1605 = vmatprep.subr.mxu0 0.0
    %1606 = vmatpush1.msra.mxu0 0.0
    %1607 = vmatprep.subr.mxu0 0.0
    %1608 = vmatpush1.msra.mxu0 0.0
    %1609 = vmatprep.subr.mxu0 0.0
    %1610 = vmatpush1.msra.mxu0 0.0
    %1611 = vmatprep.subr.mxu0 0.0
    %1612 = vmatpush1.msra.mxu0 0.0
    %1613 = vmatprep.subr.mxu0 0.0
    %1614 = vmatpush1.msra.mxu0 0.0
    %1615 = vmatprep.subr.mxu0 0.0
    %1616 = vmatpush1.msra.mxu0 0.0
    %1617 = vmatprep.subr.mxu0 0.0
    %1618 = vmatpush1.msra.mxu0 0.0
    %1619 = vmatprep.subr.mxu0 0.0
    %1620 = vmatpush1.msra.mxu0 0.0
    %1621 = vmatprep.subr.mxu0 0.0
    %1622 = vmatpush1.msra.mxu0 0.0
    %1623 = vmatprep.subr.mxu0 0.0
    %1624 = vmatpush1.msra.mxu0 0.0
    %1625 = vmatprep.subr.mxu0 0.0
    %1626 = vmatpush1.msra.mxu0 0.0
    %1627 = vmatprep.subr.mxu0 0.0
    %1628 = vmatpush1.msra.mxu0 0.0
    %1629 = vmatprep.subr.mxu0 0.0
    %1630 = vmatpush1.msra.mxu0 %v1594
    %1631 = vmatprep.subr.mxu0 0.0
    %1632 = vmatpush2.msra.mxu0 0.0
    %1633 = vmatprep.subr.mxu0 0.0
    %1634 = vmatpush2.msra.mxu0 0.0
    %1635 = vmatprep.subr.mxu0 0.0
    %1636 = vmatpush2.msra.mxu0 0.0
    %1637 = vmatprep.subr.mxu0 0.0
    %1638 = vmatpush2.msra.mxu0 0.0
    %1639 = vmatprep.subr.mxu0 0.0
    %1640 = vmatpush2.msra.mxu0 0.0
    %1641 = vmatprep.subr.mxu0 0.0
    %1642 = vmatpush2.msra.mxu0 0.0
    %1643 = vmatprep.subr.mxu0 0.0
    %1644 = vmatpush2.msra.mxu0 0.0
    %1645 = vmatprep.subr.mxu0 0.0
    %1646 = vmatpush2.msra.mxu0 0.0
    %1647 = vmatprep.subr.mxu0 0.0
    %1648 = vmatpush2.msra.mxu0 0.0
    %1649 = vmatprep.subr.mxu0 0.0
    %1650 = vmatpush2.msra.mxu0 0.0
    %1651 = vmatprep.subr.mxu0 0.0
    %1652 = vmatpush2.msra.mxu0 0.0
    %1653 = vmatprep.subr.mxu0 0.0
    %1654 = vmatpush2.msra.mxu0 0.0
    %1655 = vmatprep.subr.mxu0 0.0
    %1656 = vmatpush2.msra.mxu0 0.0
    %1657 = vmatprep.subr.mxu0 0.0
    %1658 = vmatpush2.msra.mxu0 0.0
    %1659 = vmatprep.subr.mxu0 0.0
    %1660 = vmatpush2.msra.mxu0 0.0
    %1661 = vmatprep.subr.mxu0 0.0
    %1662 = vmatpush2.msra.mxu0 0.0
    %1663 = vmatprep.mubr.f32.mxu0 0.0
    %1664 = vmatmul.mubr.f32.gmra.mxu0 %v1597
    %v1665 = vpop.f32.mrf.mxu0
    %v1666 = vadd.f32 0.0, %v1665
    %v1667 = vpop.f32.mrf.mxu0
    %1668 = vdwg.mxu0
    %1669 = vrot.lane.b32.xlu0 %v174, 40
    %v1670 = vpop.permute.xlu0 %1669
    %v1673 = vsel %vm182, %v1592, 0
    %1675 = vmatprep.subr.mxu0 0.0
    %1676 = vmatpush1.msra.mxu0 0.0
    %1677 = vmatprep.subr.mxu0 0.0
    %1678 = vmatpush1.msra.mxu0 0.0
    %1679 = vmatprep.subr.mxu0 0.0
    %1680 = vmatpush1.msra.mxu0 0.0
    %1681 = vmatprep.subr.mxu0 0.0
    %1682 = vmatpush1.msra.mxu0 0.0
    %1683 = vmatprep.subr.mxu0 0.0
    %1684 = vmatpush1.msra.mxu0 0.0
    %1685 = vmatprep.subr.mxu0 0.0
    %1686 = vmatpush1.msra.mxu0 0.0
    %1687 = vmatprep.subr.mxu0 0.0
    %1688 = vmatpush1.msra.mxu0 0.0
    %1689 = vmatprep.subr.mxu0 0.0
    %1690 = vmatpush1.msra.mxu0 0.0
    %1691 = vmatprep.subr.mxu0 0.0
    %1692 = vmatpush1.msra.mxu0 0.0
    %1693 = vmatprep.subr.mxu0 0.0
    %1694 = vmatpush1.msra.mxu0 0.0
    %1695 = vmatprep.subr.mxu0 0.0
    %1696 = vmatpush1.msra.mxu0 0.0
    %1697 = vmatprep.subr.mxu0 0.0
    %1698 = vmatpush1.msra.mxu0 0.0
    %1699 = vmatprep.subr.mxu0 0.0
    %1700 = vmatpush1.msra.mxu0 0.0
    %1701 = vmatprep.subr.mxu0 0.0
    %1702 = vmatpush1.msra.mxu0 0.0
    %1703 = vmatprep.subr.mxu0 0.0
    %1704 = vmatpush1.msra.mxu0 0.0
    %1705 = vmatprep.subr.mxu0 0.0
    %1706 = vmatpush1.msra.mxu0 %v1670
    %1707 = vmatprep.subr.mxu0 0.0
    %1708 = vmatpush2.msra.mxu0 0.0
    %1709 = vmatprep.subr.mxu0 0.0
    %1710 = vmatpush2.msra.mxu0 0.0
    %1711 = vmatprep.subr.mxu0 0.0
    %1712 = vmatpush2.msra.mxu0 0.0
    %1713 = vmatprep.subr.mxu0 0.0
    %1714 = vmatpush2.msra.mxu0 0.0
    %1715 = vmatprep.subr.mxu0 0.0
    %1716 = vmatpush2.msra.mxu0 0.0
    %1717 = vmatprep.subr.mxu0 0.0
    %1718 = vmatpush2.msra.mxu0 0.0
    %1719 = vmatprep.subr.mxu0 0.0
    %1720 = vmatpush2.msra.mxu0 0.0
    %1721 = vmatprep.subr.mxu0 0.0
    %1722 = vmatpush2.msra.mxu0 0.0
    %1723 = vmatprep.subr.mxu0 0.0
    %1724 = vmatpush2.msra.mxu0 0.0
    %1725 = vmatprep.subr.mxu0 0.0
    %1726 = vmatpush2.msra.mxu0 0.0
    %1727 = vmatprep.subr.mxu0 0.0
    %1728 = vmatpush2.msra.mxu0 0.0
    %1729 = vmatprep.subr.mxu0 0.0
    %1730 = vmatpush2.msra.mxu0 0.0
    %1731 = vmatprep.subr.mxu0 0.0
    %1732 = vmatpush2.msra.mxu0 0.0
    %1733 = vmatprep.subr.mxu0 0.0
    %1734 = vmatpush2.msra.mxu0 0.0
    %1735 = vmatprep.subr.mxu0 0.0
    %1736 = vmatpush2.msra.mxu0 0.0
    %1737 = vmatprep.subr.mxu0 0.0
    %1738 = vmatpush2.msra.mxu0 0.0
    %1739 = vmatprep.mubr.f32.mxu0 0.0
    %1740 = vmatmul.mubr.f32.gmra.mxu0 %v1673
    %v1741 = vpop.f32.mrf.mxu0
    %v1742 = vadd.f32 0.0, %v1741
    %v1743 = vpop.f32.mrf.mxu0
    %1744 = vdwg.mxu0
    %v1746 = vsel %vm182, %v1666, 0
    %v1749 = vsel %vm182, %v1742, 0
    %1751 = vmatprep.subr.mxu0 0.0
    %1752 = vmatpush1.msra.mxu0 0.0
    %1753 = vmatprep.subr.mxu0 0.0
    %1754 = vmatpush1.msra.mxu0 0.0
    %1755 = vmatprep.subr.mxu0 0.0
    %1756 = vmatpush1.msra.mxu0 0.0
    %1757 = vmatprep.subr.mxu0 0.0
    %1758 = vmatpush1.msra.mxu0 0.0
    %1759 = vmatprep.subr.mxu0 0.0
    %1760 = vmatpush1.msra.mxu0 0.0
    %1761 = vmatprep.subr.mxu0 0.0
    %1762 = vmatpush1.msra.mxu0 0.0
    %1763 = vmatprep.subr.mxu0 0.0
    %1764 = vmatpush1.msra.mxu0 0.0
    %1765 = vmatprep.subr.mxu0 0.0
    %1766 = vmatpush1.msra.mxu0 0.0
    %1767 = vmatprep.subr.mxu0 0.0
    %1768 = vmatpush1.msra.mxu0 0.0
    %1769 = vmatprep.subr.mxu0 0.0
    %1770 = vmatpush1.msra.mxu0 0.0
    %1771 = vmatprep.subr.mxu0 0.0
    %1772 = vmatpush1.msra.mxu0 0.0
    %1773 = vmatprep.subr.mxu0 0.0
    %1774 = vmatpush1.msra.mxu0 0.0
    %1775 = vmatprep.subr.mxu0 0.0
    %1776 = vmatpush1.msra.mxu0 0.0
    %1777 = vmatprep.subr.mxu0 0.0
    %1778 = vmatpush1.msra.mxu0 0.0
    %1779 = vmatprep.subr.mxu0 0.0
    %1780 = vmatpush1.msra.mxu0 0.0
    %1781 = vmatprep.subr.mxu0 0.0
    %1782 = vmatpush1.msra.mxu0 %v78
    %1783 = vmatprep.subr.mxu0 0.0
    %1784 = vmatpush2.msra.mxu0 0.0
    %1785 = vmatprep.subr.mxu0 0.0
    %1786 = vmatpush2.msra.mxu0 0.0
    %1787 = vmatprep.subr.mxu0 0.0
    %1788 = vmatpush2.msra.mxu0 0.0
    %1789 = vmatprep.subr.mxu0 0.0
    %1790 = vmatpush2.msra.mxu0 0.0
    %1791 = vmatprep.subr.mxu0 0.0
    %1792 = vmatpush2.msra.mxu0 0.0
    %1793 = vmatprep.subr.mxu0 0.0
    %1794 = vmatpush2.msra.mxu0 0.0
    %1795 = vmatprep.subr.mxu0 0.0
    %1796 = vmatpush2.msra.mxu0 0.0
    %1797 = vmatprep.subr.mxu0 0.0
    %1798 = vmatpush2.msra.mxu0 0.0
    %1799 = vmatprep.subr.mxu0 0.0
    %1800 = vmatpush2.msra.mxu0 0.0
    %1801 = vmatprep.subr.mxu0 0.0
    %1802 = vmatpush2.msra.mxu0 0.0
    %1803 = vmatprep.subr.mxu0 0.0
    %1804 = vmatpush2.msra.mxu0 0.0
    %1805 = vmatprep.subr.mxu0 0.0
    %1806 = vmatpush2.msra.mxu0 0.0
    %1807 = vmatprep.subr.mxu0 0.0
    %1808 = vmatpush2.msra.mxu0 0.0
    %1809 = vmatprep.subr.mxu0 0.0
    %1810 = vmatpush2.msra.mxu0 0.0
    %1811 = vmatprep.subr.mxu0 0.0
    %1812 = vmatpush2.msra.mxu0 0.0
    %1813 = vmatprep.subr.mxu0 0.0
    %1814 = vmatpush2.msra.mxu0 0.0
    %1815 = vmatprep.mubr.f32.mxu0 0.0
    %1816 = vmatmul.mubr.f32.gmra.mxu0 %v1746
    %v1817 = vpop.f32.mrf.mxu0
    %v1818 = vadd.f32 0.0, %v1817
    %v1819 = vpop.f32.mrf.mxu0
    %1820 = vmatprep.mubr.f32.mxu0 0.0
    %1821 = vmatmul.mubr.f32.gmra.mxu0 %v1749
    %v1822 = vpop.f32.mrf.mxu0
    %v1823 = vadd.f32 0.0, %v1822
    %v1824 = vpop.f32.mrf.mxu0
    %1825 = vdwg.mxu0
    %v1826 = vadd.f32 %v1413, %v1818
    %v1827 = vadd.f32 %v1414, %v1823
    %v1828 = vadd.f32 %v65, %v1826
    %v1829 = vadd.f32 %v66, %v1827
    %v1830 = vlaneseq
    %v1831 = vshrl.u32 %v1830, 7
    %v1832 = vsub.s32 0, %v1831
    %v1833 = vrot.slane %v69, %v1832
    %v1834 = vadd.f32 %v1828, %v1833
    %v1835 = vadd.f32 %v1829, %v1833
    %v1836 = vsel %vm95, %v1834, 0.0
    %1837 = vadd.xlane.f32.xlu0 %v1836
    %v1838 = vpop.xlane.xlu0 %1837
    %v1839 = vsel %vm95, %v1835, 0.0
    %1840 = vadd.xlane.f32.xlu0 %v1839
    %v1841 = vpop.xlane.xlu0 %1840
    %v1842 = vrcp.pop 32.0
    %v1843 = vmul.f32 %v1838, %v1842
    %v1844 = vmul.f32 %v1841, %v1842
    %v1845 = vsub.f32 %v1834, %v1843
    %v1846 = vsub.f32 %v1835, %v1844
    %v1847 = vmul.f32 %v1845, %v1845
    %v1848 = vmul.f32 %v1846, %v1846
    %v1849 = vsel %vm95, %v1847, 0.0
    %1850 = vadd.xlane.f32.xlu0 %v1849
    %v1851 = vpop.xlane.xlu0 %1850
    %v1852 = vsel %vm95, %v1848, 0.0
    %1853 = vadd.xlane.f32.xlu0 %v1852
    %v1854 = vpop.xlane.xlu0 %1853
    %v1855 = vmul.f32 %v1851, %v1842
    %v1856 = vmul.f32 %v1854, %v1842
    %v1857 = vadd.f32 %v1855, 1e-05
    %v1858 = vadd.f32 %v1856, 1e-05
    %v1859 = vrsqrt.pop %v1857
    %v1860 = vrsqrt.pop %v1858
    %v1861 = vmul.f32 %v1845, %v1859
    %v1862 = vmul.f32 %v1846, %v1860
    %v1863 = vlaneseq
    %v1864 = vshrl.u32 %v1863, 7
    %v1865 = vsub.s32 1, %v1864
    %v1866 = vrot.slane %v69, %v1865
    %v1867 = vmul.f32 %v1861, %v1866
    %v1868 = vmul.f32 %v1862, %v1866
    %v1869 = vlaneseq
    %v1870 = vshrl.u32 %v1869, 7
    %v1871 = vsub.s32 2, %v1870
    %v1872 = vrot.slane %v69, %v1871
    %v1873 = vadd.f32 %v1867, %v1872
    %v1874 = vadd.f32 %v1868, %v1872
    %v1875 = vlaneseq
    %v1876 = vshrl.u32 %v1875, 7
    %v1877 = vsub.s32 0, %v1876
    %v1878 = vrot.slane %v68, %v1877
    %v1880 = vsel %vm95, %v1873, 0
    %v1883 = vsel %vm95, %v1874, 0
    %1885 = vmatprep.subr.mxu0 0.0
    %1886 = vmatpush1.msra.mxu0 0.0
    %1887 = vmatprep.subr.mxu0 0.0
    %1888 = vmatpush1.msra.mxu0 0.0
    %1889 = vmatprep.subr.mxu0 0.0
    %1890 = vmatpush1.msra.mxu0 0.0
    %1891 = vmatprep.subr.mxu0 0.0
    %1892 = vmatpush1.msra.mxu0 0.0
    %1893 = vmatprep.subr.mxu0 0.0
    %1894 = vmatpush1.msra.mxu0 0.0
    %1895 = vmatprep.subr.mxu0 0.0
    %1896 = vmatpush1.msra.mxu0 0.0
    %1897 = vmatprep.subr.mxu0 0.0
    %1898 = vmatpush1.msra.mxu0 0.0
    %1899 = vmatprep.subr.mxu0 0.0
    %1900 = vmatpush1.msra.mxu0 0.0
    %1901 = vmatprep.subr.mxu0 0.0
    %1902 = vmatpush1.msra.mxu0 0.0
    %1903 = vmatprep.subr.mxu0 0.0
    %1904 = vmatpush1.msra.mxu0 0.0
    %1905 = vmatprep.subr.mxu0 0.0
    %1906 = vmatpush1.msra.mxu0 0.0
    %1907 = vmatprep.subr.mxu0 0.0
    %1908 = vmatpush1.msra.mxu0 0.0
    %1909 = vmatprep.subr.mxu0 0.0
    %1910 = vmatpush1.msra.mxu0 %v82
    %1911 = vmatprep.subr.mxu0 0.0
    %1912 = vmatpush1.msra.mxu0 %v81
    %1913 = vmatprep.subr.mxu0 0.0
    %1914 = vmatpush1.msra.mxu0 %v80
    %1915 = vmatprep.subr.mxu0 0.0
    %1916 = vmatpush1.msra.mxu0 %v79
    %1917 = vmatprep.subr.mxu0 0.0
    %1918 = vmatpush2.msra.mxu0 0.0
    %1919 = vmatprep.subr.mxu0 0.0
    %1920 = vmatpush2.msra.mxu0 0.0
    %1921 = vmatprep.subr.mxu0 0.0
    %1922 = vmatpush2.msra.mxu0 0.0
    %1923 = vmatprep.subr.mxu0 0.0
    %1924 = vmatpush2.msra.mxu0 0.0
    %1925 = vmatprep.subr.mxu0 0.0
    %1926 = vmatpush2.msra.mxu0 0.0
    %1927 = vmatprep.subr.mxu0 0.0
    %1928 = vmatpush2.msra.mxu0 0.0
    %1929 = vmatprep.subr.mxu0 0.0
    %1930 = vmatpush2.msra.mxu0 0.0
    %1931 = vmatprep.subr.mxu0 0.0
    %1932 = vmatpush2.msra.mxu0 0.0
    %1933 = vmatprep.subr.mxu0 0.0
    %1934 = vmatpush2.msra.mxu0 0.0
    %1935 = vmatprep.subr.mxu0 0.0
    %1936 = vmatpush2.msra.mxu0 0.0
    %1937 = vmatprep.subr.mxu0 0.0
    %1938 = vmatpush2.msra.mxu0 0.0
    %1939 = vmatprep.subr.mxu0 0.0
    %1940 = vmatpush2.msra.mxu0 0.0
    %1941 = vmatprep.subr.mxu0 0.0
    %1942 = vmatpush2.msra.mxu0 0.0
    %1943 = vmatprep.subr.mxu0 0.0
    %1944 = vmatpush2.msra.mxu0 0.0
    %1945 = vmatprep.subr.mxu0 0.0
    %1946 = vmatpush2.msra.mxu0 0.0
    %1947 = vmatprep.subr.mxu0 0.0
    %1948 = vmatpush2.msra.mxu0 0.0
    %1949 = vmatprep.mubr.f32.mxu0 0.0
    %1950 = vmatmul.mubr.f32.gmra.mxu0 %v1880
    %v1951 = vpop.f32.mrf.mxu0
    %v1952 = vadd.f32 %v1878, %v1951
    %v1953 = vpop.f32.mrf.mxu0
    %1954 = vmatprep.mubr.f32.mxu0 0.0
    %1955 = vmatmul.mubr.f32.gmra.mxu0 %v1883
    %v1956 = vpop.f32.mrf.mxu0
    %v1957 = vadd.f32 %v1878, %v1956
    %v1958 = vpop.f32.mrf.mxu0
    %1959 = vdwg.mxu0
    %v1960 = vmax.f32 %v1952, 0.0
    %v1961 = vmax.f32 %v1957, 0.0
    %v1962 = vlaneseq
    %v1963 = vshrl.u32 %v1962, 7
    %v1964 = vsub.s32 3, %v1963
    %v1965 = vrot.slane %v69, %v1964
    %vm1966 = vcmask 523264
    %v1968 = vsel %vm1966, %v1960, 0
    %v1971 = vsel %vm1966, %v1961, 0
    %1973 = vmatprep.subr.mxu0 0.0
    %1974 = vmatpush1.msra.mxu0 0.0
    %1975 = vmatprep.subr.mxu0 0.0
    %1976 = vmatpush1.msra.mxu0 0.0
    %1977 = vmatprep.subr.mxu0 0.0
    %1978 = vmatpush1.msra.mxu0 0.0
    %1979 = vmatprep.subr.mxu0 0.0
    %1980 = vmatpush1.msra.mxu0 0.0
    %1981 = vmatprep.subr.mxu0 0.0
    %1982 = vmatpush1.msra.mxu0 0.0
    %1983 = vmatprep.subr.mxu0 0.0
    %1984 = vmatpush1.msra.mxu0 0.0
    %1985 = vmatprep.subr.mxu0 0.0
    %1986 = vmatpush1.msra.mxu0 0.0
    %1987 = vmatprep.subr.mxu0 0.0
    %1988 = vmatpush1.msra.mxu0 0.0
    %1989 = vmatprep.subr.mxu0 0.0
    %1990 = vmatpush1.msra.mxu0 %v90
    %1991 = vmatprep.subr.mxu0 0.0
    %1992 = vmatpush1.msra.mxu0 %v89
    %1993 = vmatprep.subr.mxu0 0.0
    %1994 = vmatpush1.msra.mxu0 %v88
    %1995 = vmatprep.subr.mxu0 0.0
    %1996 = vmatpush1.msra.mxu0 %v87
    %1997 = vmatprep.subr.mxu0 0.0
    %1998 = vmatpush1.msra.mxu0 %v86
    %1999 = vmatprep.subr.mxu0 0.0
    %2000 = vmatpush1.msra.mxu0 %v85
    %2001 = vmatprep.subr.mxu0 0.0
    %2002 = vmatpush1.msra.mxu0 %v84
    %2003 = vmatprep.subr.mxu0 0.0
    %2004 = vmatpush1.msra.mxu0 %v83
    %2005 = vmatprep.subr.mxu0 0.0
    %2006 = vmatpush2.msra.mxu0 0.0
    %2007 = vmatprep.subr.mxu0 0.0
    %2008 = vmatpush2.msra.mxu0 0.0
    %2009 = vmatprep.subr.mxu0 0.0
    %2010 = vmatpush2.msra.mxu0 0.0
    %2011 = vmatprep.subr.mxu0 0.0
    %2012 = vmatpush2.msra.mxu0 0.0
    %2013 = vmatprep.subr.mxu0 0.0
    %2014 = vmatpush2.msra.mxu0 0.0
    %2015 = vmatprep.subr.mxu0 0.0
    %2016 = vmatpush2.msra.mxu0 0.0
    %2017 = vmatprep.subr.mxu0 0.0
    %2018 = vmatpush2.msra.mxu0 0.0
    %2019 = vmatprep.subr.mxu0 0.0
    %2020 = vmatpush2.msra.mxu0 0.0
    %2021 = vmatprep.subr.mxu0 0.0
    %2022 = vmatpush2.msra.mxu0 0.0
    %2023 = vmatprep.subr.mxu0 0.0
    %2024 = vmatpush2.msra.mxu0 0.0
    %2025 = vmatprep.subr.mxu0 0.0
    %2026 = vmatpush2.msra.mxu0 0.0
    %2027 = vmatprep.subr.mxu0 0.0
    %2028 = vmatpush2.msra.mxu0 0.0
    %2029 = vmatprep.subr.mxu0 0.0
    %2030 = vmatpush2.msra.mxu0 0.0
    %2031 = vmatprep.subr.mxu0 0.0
    %2032 = vmatpush2.msra.mxu0 0.0
    %2033 = vmatprep.subr.mxu0 0.0
    %2034 = vmatpush2.msra.mxu0 0.0
    %2035 = vmatprep.subr.mxu0 0.0
    %2036 = vmatpush2.msra.mxu0 0.0
    %2037 = vmatprep.mubr.f32.mxu0 0.0
    %2038 = vmatmul.mubr.f32.gmra.mxu0 %v1968
    %v2039 = vpop.f32.mrf.mxu0
    %v2040 = vadd.f32 %v1965, %v2039
    %v2041 = vpop.f32.mrf.mxu0
    %2042 = vmatprep.mubr.f32.mxu0 0.0
    %2043 = vmatmul.mubr.f32.gmra.mxu0 %v1971
    %v2044 = vpop.f32.mrf.mxu0
    %v2045 = vadd.f32 %v1965, %v2044
    %v2046 = vpop.f32.mrf.mxu0
    %2047 = vdwg.mxu0
    %v2048 = vadd.f32 %v1873, %v2040
    %v2049 = vadd.f32 %v1874, %v2045
    %v2050 = vsel %vm95, %v2048, 0.0
    %2051 = vadd.xlane.f32.xlu0 %v2050
    %v2052 = vpop.xlane.xlu0 %2051
    %v2053 = vsel %vm95, %v2049, 0.0
    %2054 = vadd.xlane.f32.xlu0 %v2053
    %v2055 = vpop.xlane.xlu0 %2054
    %v2056 = vmul.f32 %v2052, %v1842
    %v2057 = vmul.f32 %v2055, %v1842
    %v2058 = vsub.f32 %v2048, %v2056
    %v2059 = vsub.f32 %v2049, %v2057
    %v2060 = vmul.f32 %v2058, %v2058
    %v2061 = vmul.f32 %v2059, %v2059
    %v2062 = vsel %vm95, %v2060, 0.0
    %2063 = vadd.xlane.f32.xlu0 %v2062
    %v2064 = vpop.xlane.xlu0 %2063
    %v2065 = vsel %vm95, %v2061, 0.0
    %2066 = vadd.xlane.f32.xlu0 %v2065
    %v2067 = vpop.xlane.xlu0 %2066
    %v2068 = vmul.f32 %v2064, %v1842
    %v2069 = vmul.f32 %v2067, %v1842
    %v2070 = vadd.f32 %v2068, 1e-05
    %v2071 = vadd.f32 %v2069, 1e-05
    %v2072 = vrsqrt.pop %v2070
    %v2073 = vrsqrt.pop %v2071
    %v2074 = vmul.f32 %v2058, %v2072
    %v2075 = vmul.f32 %v2059, %v2073
    %v2076 = vlaneseq
    %v2077 = vshrl.u32 %v2076, 7
    %v2078 = vsub.s32 4, %v2077
    %v2079 = vrot.slane %v69, %v2078
    %v2080 = vmul.f32 %v2074, %v2079
    %v2081 = vmul.f32 %v2075, %v2079
    %v2082 = vlaneseq
    %v2083 = vshrl.u32 %v2082, 7
    %v2084 = vsub.s32 5, %v2083
    %v2085 = vrot.slane %v69, %v2084
    %v2086 = vadd.f32 %v2080, %v2085
    %v2087 = vadd.f32 %v2081, %v2085
    %s2088 = scalar_lea.vmem %s3, 32
    %v2089 = vld [vmem:[%s2088] sm:$0xff]
    %v2090 = vld [vmem:[%s2088 + $0x8] sm:$0xff]
    %v2091 = vld [vmem:[%s2088 + $0x10] sm:$0xff]
    %v2092 = vld [vmem:[%s2088 + $0x18] sm:$0xff]
    %s2093 = scalar_lea.vmem %s5, 32
    %v2094 = vld [vmem:[%s2093] sm:$0xff]
    %v2095 = vld [vmem:[%s2093 + $0x8] sm:$0xff]
    %v2096 = vld [vmem:[%s2093 + $0x10] sm:$0xff]
    %v2097 = vld [vmem:[%s2093 + $0x18] sm:$0xff]
    %s2098 = scalar_lea.vmem %s6, 32
    %v2099 = vld [vmem:[%s2098] sm:$0xff]
    %v2100 = vld [vmem:[%s2098 + $0x8] sm:$0xff]
    %v2101 = vld [vmem:[%s2098 + $0x10] sm:$0xff]
    %v2102 = vld [vmem:[%s2098 + $0x18] sm:$0xff]
    %s2103 = scalar_lea.vmem %s8, 64
    %v2104 = vld [vmem:[%s2103] sm:$0xff]
    %v2105 = vld [vmem:[%s2103 + $0x8] sm:$0xff]
    %v2106 = vld [vmem:[%s2103 + $0x10] sm:$0xff]
    %v2107 = vld [vmem:[%s2103 + $0x18] sm:$0xff]
    %v2108 = vld [vmem:[%s2103 + $0x20] sm:$0xff]
    %v2109 = vld [vmem:[%s2103 + $0x28] sm:$0xff]
    %v2110 = vld [vmem:[%s2103 + $0x30] sm:$0xff]
    %v2111 = vld [vmem:[%s2103 + $0x38] sm:$0xff]
    %v2112 = vlaneseq
    %v2113 = vshrl.u32 %v2112, 7
    %v2114 = vsub.s32 1, %v2113
    %v2115 = vrot.slane %v67, %v2114
    %v2117 = vsel %vm95, %v2086, 0
    %v2120 = vsel %vm95, %v2087, 0
    %2122 = vmatprep.subr.mxu0 0.0
    %2123 = vmatpush1.msra.mxu0 0.0
    %2124 = vmatprep.subr.mxu0 0.0
    %2125 = vmatpush1.msra.mxu0 0.0
    %2126 = vmatprep.subr.mxu0 0.0
    %2127 = vmatpush1.msra.mxu0 0.0
    %2128 = vmatprep.subr.mxu0 0.0
    %2129 = vmatpush1.msra.mxu0 0.0
    %2130 = vmatprep.subr.mxu0 0.0
    %2131 = vmatpush1.msra.mxu0 0.0
    %2132 = vmatprep.subr.mxu0 0.0
    %2133 = vmatpush1.msra.mxu0 0.0
    %2134 = vmatprep.subr.mxu0 0.0
    %2135 = vmatpush1.msra.mxu0 0.0
    %2136 = vmatprep.subr.mxu0 0.0
    %2137 = vmatpush1.msra.mxu0 0.0
    %2138 = vmatprep.subr.mxu0 0.0
    %2139 = vmatpush1.msra.mxu0 0.0
    %2140 = vmatprep.subr.mxu0 0.0
    %2141 = vmatpush1.msra.mxu0 0.0
    %2142 = vmatprep.subr.mxu0 0.0
    %2143 = vmatpush1.msra.mxu0 0.0
    %2144 = vmatprep.subr.mxu0 0.0
    %2145 = vmatpush1.msra.mxu0 0.0
    %2146 = vmatprep.subr.mxu0 0.0
    %2147 = vmatpush1.msra.mxu0 %v2092
    %2148 = vmatprep.subr.mxu0 0.0
    %2149 = vmatpush1.msra.mxu0 %v2091
    %2150 = vmatprep.subr.mxu0 0.0
    %2151 = vmatpush1.msra.mxu0 %v2090
    %2152 = vmatprep.subr.mxu0 0.0
    %2153 = vmatpush1.msra.mxu0 %v2089
    %2154 = vmatprep.subr.mxu0 0.0
    %2155 = vmatpush2.msra.mxu0 0.0
    %2156 = vmatprep.subr.mxu0 0.0
    %2157 = vmatpush2.msra.mxu0 0.0
    %2158 = vmatprep.subr.mxu0 0.0
    %2159 = vmatpush2.msra.mxu0 0.0
    %2160 = vmatprep.subr.mxu0 0.0
    %2161 = vmatpush2.msra.mxu0 0.0
    %2162 = vmatprep.subr.mxu0 0.0
    %2163 = vmatpush2.msra.mxu0 0.0
    %2164 = vmatprep.subr.mxu0 0.0
    %2165 = vmatpush2.msra.mxu0 0.0
    %2166 = vmatprep.subr.mxu0 0.0
    %2167 = vmatpush2.msra.mxu0 0.0
    %2168 = vmatprep.subr.mxu0 0.0
    %2169 = vmatpush2.msra.mxu0 0.0
    %2170 = vmatprep.subr.mxu0 0.0
    %2171 = vmatpush2.msra.mxu0 0.0
    %2172 = vmatprep.subr.mxu0 0.0
    %2173 = vmatpush2.msra.mxu0 0.0
    %2174 = vmatprep.subr.mxu0 0.0
    %2175 = vmatpush2.msra.mxu0 0.0
    %2176 = vmatprep.subr.mxu0 0.0
    %2177 = vmatpush2.msra.mxu0 0.0
    %2178 = vmatprep.subr.mxu0 0.0
    %2179 = vmatpush2.msra.mxu0 0.0
    %2180 = vmatprep.subr.mxu0 0.0
    %2181 = vmatpush2.msra.mxu0 0.0
    %2182 = vmatprep.subr.mxu0 0.0
    %2183 = vmatpush2.msra.mxu0 0.0
    %2184 = vmatprep.subr.mxu0 0.0
    %2185 = vmatpush2.msra.mxu0 0.0
    %2186 = vmatprep.mubr.f32.mxu0 0.0
    %2187 = vmatmul.mubr.f32.gmra.mxu0 %v2117
    %v2188 = vpop.f32.mrf.mxu0
    %v2189 = vadd.f32 %v2115, %v2188
    %v2190 = vpop.f32.mrf.mxu0
    %2191 = vmatprep.mubr.f32.mxu0 0.0
    %2192 = vmatmul.mubr.f32.gmra.mxu0 %v2120
    %v2193 = vpop.f32.mrf.mxu0
    %v2194 = vadd.f32 %v2115, %v2193
    %v2195 = vpop.f32.mrf.mxu0
    %2196 = vdwg.mxu0
    %v2197 = vmul.f32 %v2189, 0.35355338
    %v2198 = vmul.f32 %v2194, 0.35355338
    %2200 = vrot.lane.b32.xlu0 %v2189, 96
    %v2201 = vpop.permute.xlu0 %2200
    %v2203 = vsel %vm182, %v2197, 0
    %v2205 = vsel %vm182, %v2201, 0
    %2207 = vmatprep.subr.mxu0 0.0
    %2208 = vmatpush1.xpose.msra.mxu0 0.0
    %2209 = vmatprep.subr.mxu0 0.0
    %2210 = vmatpush1.xpose.msra.mxu0 0.0
    %2211 = vmatprep.subr.mxu0 0.0
    %2212 = vmatpush1.xpose.msra.mxu0 0.0
    %2213 = vmatprep.subr.mxu0 0.0
    %2214 = vmatpush1.xpose.msra.mxu0 0.0
    %2215 = vmatprep.subr.mxu0 0.0
    %2216 = vmatpush1.xpose.msra.mxu0 0.0
    %2217 = vmatprep.subr.mxu0 0.0
    %2218 = vmatpush1.xpose.msra.mxu0 0.0
    %2219 = vmatprep.subr.mxu0 0.0
    %2220 = vmatpush1.xpose.msra.mxu0 0.0
    %2221 = vmatprep.subr.mxu0 0.0
    %2222 = vmatpush1.xpose.msra.mxu0 0.0
    %2223 = vmatprep.subr.mxu0 0.0
    %2224 = vmatpush1.xpose.msra.mxu0 0.0
    %2225 = vmatprep.subr.mxu0 0.0
    %2226 = vmatpush1.xpose.msra.mxu0 0.0
    %2227 = vmatprep.subr.mxu0 0.0
    %2228 = vmatpush1.xpose.msra.mxu0 0.0
    %2229 = vmatprep.subr.mxu0 0.0
    %2230 = vmatpush1.xpose.msra.mxu0 0.0
    %2231 = vmatprep.subr.mxu0 0.0
    %2232 = vmatpush1.xpose.msra.mxu0 0.0
    %2233 = vmatprep.subr.mxu0 0.0
    %2234 = vmatpush1.xpose.msra.mxu0 0.0
    %2235 = vmatprep.subr.mxu0 0.0
    %2236 = vmatpush1.xpose.msra.mxu0 0.0
    %2237 = vmatprep.subr.mxu0 0.0
    %2238 = vmatpush1.xpose.msra.mxu0 %v2205
    %2239 = vmatprep.subr.mxu0 0.0
    %2240 = vmatpush2.xpose.msra.mxu0 0.0
    %2241 = vmatprep.subr.mxu0 0.0
    %2242 = vmatpush2.xpose.msra.mxu0 0.0
    %2243 = vmatprep.subr.mxu0 0.0
    %2244 = vmatpush2.xpose.msra.mxu0 0.0
    %2245 = vmatprep.subr.mxu0 0.0
    %2246 = vmatpush2.xpose.msra.mxu0 0.0
    %2247 = vmatprep.subr.mxu0 0.0
    %2248 = vmatpush2.xpose.msra.mxu0 0.0
    %2249 = vmatprep.subr.mxu0 0.0
    %2250 = vmatpush2.xpose.msra.mxu0 0.0
    %2251 = vmatprep.subr.mxu0 0.0
    %2252 = vmatpush2.xpose.msra.mxu0 0.0
    %2253 = vmatprep.subr.mxu0 0.0
    %2254 = vmatpush2.xpose.msra.mxu0 0.0
    %2255 = vmatprep.subr.mxu0 0.0
    %2256 = vmatpush2.xpose.msra.mxu0 0.0
    %2257 = vmatprep.subr.mxu0 0.0
    %2258 = vmatpush2.xpose.msra.mxu0 0.0
    %2259 = vmatprep.subr.mxu0 0.0
    %2260 = vmatpush2.xpose.msra.mxu0 0.0
    %2261 = vmatprep.subr.mxu0 0.0
    %2262 = vmatpush2.xpose.msra.mxu0 0.0
    %2263 = vmatprep.subr.mxu0 0.0
    %2264 = vmatpush2.xpose.msra.mxu0 0.0
    %2265 = vmatprep.subr.mxu0 0.0
    %2266 = vmatpush2.xpose.msra.mxu0 0.0
    %2267 = vmatprep.subr.mxu0 0.0
    %2268 = vmatpush2.xpose.msra.mxu0 0.0
    %2269 = vmatprep.subr.mxu0 0.0
    %2270 = vmatpush2.xpose.msra.mxu0 0.0
    %2271 = vmatprep.mubr.f32.mxu0 0.0
    %2272 = vmatmul.mubr.f32.gmra.mxu0 %v2203
    %v2273 = vpop.f32.mrf.mxu0
    %v2274 = vadd.f32 0.0, %v2273
    %v2275 = vpop.f32.mrf.mxu0
    %2276 = vdwg.mxu0
    %2278 = vrot.lane.b32.xlu0 %v2194, 96
    %v2279 = vpop.permute.xlu0 %2278
    %v2281 = vsel %vm182, %v2198, 0
    %v2283 = vsel %vm182, %v2279, 0
    %2285 = vmatprep.subr.mxu0 0.0
    %2286 = vmatpush1.xpose.msra.mxu0 0.0
    %2287 = vmatprep.subr.mxu0 0.0
    %2288 = vmatpush1.xpose.msra.mxu0 0.0
    %2289 = vmatprep.subr.mxu0 0.0
    %2290 = vmatpush1.xpose.msra.mxu0 0.0
    %2291 = vmatprep.subr.mxu0 0.0
    %2292 = vmatpush1.xpose.msra.mxu0 0.0
    %2293 = vmatprep.subr.mxu0 0.0
    %2294 = vmatpush1.xpose.msra.mxu0 0.0
    %2295 = vmatprep.subr.mxu0 0.0
    %2296 = vmatpush1.xpose.msra.mxu0 0.0
    %2297 = vmatprep.subr.mxu0 0.0
    %2298 = vmatpush1.xpose.msra.mxu0 0.0
    %2299 = vmatprep.subr.mxu0 0.0
    %2300 = vmatpush1.xpose.msra.mxu0 0.0
    %2301 = vmatprep.subr.mxu0 0.0
    %2302 = vmatpush1.xpose.msra.mxu0 0.0
    %2303 = vmatprep.subr.mxu0 0.0
    %2304 = vmatpush1.xpose.msra.mxu0 0.0
    %2305 = vmatprep.subr.mxu0 0.0
    %2306 = vmatpush1.xpose.msra.mxu0 0.0
    %2307 = vmatprep.subr.mxu0 0.0
    %2308 = vmatpush1.xpose.msra.mxu0 0.0
    %2309 = vmatprep.subr.mxu0 0.0
    %2310 = vmatpush1.xpose.msra.mxu0 0.0
    %2311 = vmatprep.subr.mxu0 0.0
    %2312 = vmatpush1.xpose.msra.mxu0 0.0
    %2313 = vmatprep.subr.mxu0 0.0
    %2314 = vmatpush1.xpose.msra.mxu0 0.0
    %2315 = vmatprep.subr.mxu0 0.0
    %2316 = vmatpush1.xpose.msra.mxu0 %v2283
    %2317 = vmatprep.subr.mxu0 0.0
    %2318 = vmatpush2.xpose.msra.mxu0 0.0
    %2319 = vmatprep.subr.mxu0 0.0
    %2320 = vmatpush2.xpose.msra.mxu0 0.0
    %2321 = vmatprep.subr.mxu0 0.0
    %2322 = vmatpush2.xpose.msra.mxu0 0.0
    %2323 = vmatprep.subr.mxu0 0.0
    %2324 = vmatpush2.xpose.msra.mxu0 0.0
    %2325 = vmatprep.subr.mxu0 0.0
    %2326 = vmatpush2.xpose.msra.mxu0 0.0
    %2327 = vmatprep.subr.mxu0 0.0
    %2328 = vmatpush2.xpose.msra.mxu0 0.0
    %2329 = vmatprep.subr.mxu0 0.0
    %2330 = vmatpush2.xpose.msra.mxu0 0.0
    %2331 = vmatprep.subr.mxu0 0.0
    %2332 = vmatpush2.xpose.msra.mxu0 0.0
    %2333 = vmatprep.subr.mxu0 0.0
    %2334 = vmatpush2.xpose.msra.mxu0 0.0
    %2335 = vmatprep.subr.mxu0 0.0
    %2336 = vmatpush2.xpose.msra.mxu0 0.0
    %2337 = vmatprep.subr.mxu0 0.0
    %2338 = vmatpush2.xpose.msra.mxu0 0.0
    %2339 = vmatprep.subr.mxu0 0.0
    %2340 = vmatpush2.xpose.msra.mxu0 0.0
    %2341 = vmatprep.subr.mxu0 0.0
    %2342 = vmatpush2.xpose.msra.mxu0 0.0
    %2343 = vmatprep.subr.mxu0 0.0
    %2344 = vmatpush2.xpose.msra.mxu0 0.0
    %2345 = vmatprep.subr.mxu0 0.0
    %2346 = vmatpush2.xpose.msra.mxu0 0.0
    %2347 = vmatprep.subr.mxu0 0.0
    %2348 = vmatpush2.xpose.msra.mxu0 0.0
    %2349 = vmatprep.mubr.f32.mxu0 0.0
    %2350 = vmatmul.mubr.f32.gmra.mxu0 %v2281
    %v2351 = vpop.f32.mrf.mxu0
    %v2352 = vadd.f32 0.0, %v2351
    %v2353 = vpop.f32.mrf.mxu0
    %2354 = vdwg.mxu0
    %v2355 = vsel %vm182, %v2274, -inf
    %2356 = vmax.xlane.f32.xlu0 %v2355
    %v2357 = vpop.xlane.xlu0 %2356
    %v2358 = vsel %vm182, %v2352, -inf
    %2359 = vmax.xlane.f32.xlu0 %v2358
    %v2360 = vpop.xlane.xlu0 %2359
    %v2361 = vsub.f32 %v2274, %v2357
    %v2362 = vsub.f32 %v2352, %v2360
    %v2363 = vmul.f32 %v2361, 1.442695
    %v2364 = vpow.pop %v2363
    %v2365 = vmul.f32 %v2362, 1.442695
    %v2366 = vpow.pop %v2365
    %v2367 = vsel %vm182, %v2364, 0.0
    %2368 = vadd.xlane.f32.xlu0 %v2367
    %v2369 = vpop.xlane.xlu0 %2368
    %v2370 = vsel %vm182, %v2366, 0.0
    %2371 = vadd.xlane.f32.xlu0 %v2370
    %v2372 = vpop.xlane.xlu0 %2371
    %v2373 = vrcp.pop %v2369
    %v2374 = vmul.f32 %v2364, %v2373
    %v2375 = vrcp.pop %v2372
    %v2376 = vmul.f32 %v2366, %v2375
    %2377 = vrot.lane.b32.xlu0 %v2189, 64
    %v2378 = vpop.permute.xlu0 %2377
    %v2381 = vsel %vm182, %v2374, 0
    %2383 = vmatprep.subr.mxu0 0.0
    %2384 = vmatpush1.msra.mxu0 0.0
    %2385 = vmatprep.subr.mxu0 0.0
    %2386 = vmatpush1.msra.mxu0 0.0
    %2387 = vmatprep.subr.mxu0 0.0
    %2388 = vmatpush1.msra.mxu0 0.0
    %2389 = vmatprep.subr.mxu0 0.0
    %2390 = vmatpush1.msra.mxu0 0.0
    %2391 = vmatprep.subr.mxu0 0.0
    %2392 = vmatpush1.msra.mxu0 0.0
    %2393 = vmatprep.subr.mxu0 0.0
    %2394 = vmatpush1.msra.mxu0 0.0
    %2395 = vmatprep.subr.mxu0 0.0
    %2396 = vmatpush1.msra.mxu0 0.0
    %2397 = vmatprep.subr.mxu0 0.0
    %2398 = vmatpush1.msra.mxu0 0.0
    %2399 = vmatprep.subr.mxu0 0.0
    %2400 = vmatpush1.msra.mxu0 0.0
    %2401 = vmatprep.subr.mxu0 0.0
    %2402 = vmatpush1.msra.mxu0 0.0
    %2403 = vmatprep.subr.mxu0 0.0
    %2404 = vmatpush1.msra.mxu0 0.0
    %2405 = vmatprep.subr.mxu0 0.0
    %2406 = vmatpush1.msra.mxu0 0.0
    %2407 = vmatprep.subr.mxu0 0.0
    %2408 = vmatpush1.msra.mxu0 0.0
    %2409 = vmatprep.subr.mxu0 0.0
    %2410 = vmatpush1.msra.mxu0 0.0
    %2411 = vmatprep.subr.mxu0 0.0
    %2412 = vmatpush1.msra.mxu0 0.0
    %2413 = vmatprep.subr.mxu0 0.0
    %2414 = vmatpush1.msra.mxu0 %v2378
    %2415 = vmatprep.subr.mxu0 0.0
    %2416 = vmatpush2.msra.mxu0 0.0
    %2417 = vmatprep.subr.mxu0 0.0
    %2418 = vmatpush2.msra.mxu0 0.0
    %2419 = vmatprep.subr.mxu0 0.0
    %2420 = vmatpush2.msra.mxu0 0.0
    %2421 = vmatprep.subr.mxu0 0.0
    %2422 = vmatpush2.msra.mxu0 0.0
    %2423 = vmatprep.subr.mxu0 0.0
    %2424 = vmatpush2.msra.mxu0 0.0
    %2425 = vmatprep.subr.mxu0 0.0
    %2426 = vmatpush2.msra.mxu0 0.0
    %2427 = vmatprep.subr.mxu0 0.0
    %2428 = vmatpush2.msra.mxu0 0.0
    %2429 = vmatprep.subr.mxu0 0.0
    %2430 = vmatpush2.msra.mxu0 0.0
    %2431 = vmatprep.subr.mxu0 0.0
    %2432 = vmatpush2.msra.mxu0 0.0
    %2433 = vmatprep.subr.mxu0 0.0
    %2434 = vmatpush2.msra.mxu0 0.0
    %2435 = vmatprep.subr.mxu0 0.0
    %2436 = vmatpush2.msra.mxu0 0.0
    %2437 = vmatprep.subr.mxu0 0.0
    %2438 = vmatpush2.msra.mxu0 0.0
    %2439 = vmatprep.subr.mxu0 0.0
    %2440 = vmatpush2.msra.mxu0 0.0
    %2441 = vmatprep.subr.mxu0 0.0
    %2442 = vmatpush2.msra.mxu0 0.0
    %2443 = vmatprep.subr.mxu0 0.0
    %2444 = vmatpush2.msra.mxu0 0.0
    %2445 = vmatprep.subr.mxu0 0.0
    %2446 = vmatpush2.msra.mxu0 0.0
    %2447 = vmatprep.mubr.f32.mxu0 0.0
    %2448 = vmatmul.mubr.f32.gmra.mxu0 %v2381
    %v2449 = vpop.f32.mrf.mxu0
    %v2450 = vadd.f32 0.0, %v2449
    %v2451 = vpop.f32.mrf.mxu0
    %2452 = vdwg.mxu0
    %2453 = vrot.lane.b32.xlu0 %v2194, 64
    %v2454 = vpop.permute.xlu0 %2453
    %v2457 = vsel %vm182, %v2376, 0
    %2459 = vmatprep.subr.mxu0 0.0
    %2460 = vmatpush1.msra.mxu0 0.0
    %2461 = vmatprep.subr.mxu0 0.0
    %2462 = vmatpush1.msra.mxu0 0.0
    %2463 = vmatprep.subr.mxu0 0.0
    %2464 = vmatpush1.msra.mxu0 0.0
    %2465 = vmatprep.subr.mxu0 0.0
    %2466 = vmatpush1.msra.mxu0 0.0
    %2467 = vmatprep.subr.mxu0 0.0
    %2468 = vmatpush1.msra.mxu0 0.0
    %2469 = vmatprep.subr.mxu0 0.0
    %2470 = vmatpush1.msra.mxu0 0.0
    %2471 = vmatprep.subr.mxu0 0.0
    %2472 = vmatpush1.msra.mxu0 0.0
    %2473 = vmatprep.subr.mxu0 0.0
    %2474 = vmatpush1.msra.mxu0 0.0
    %2475 = vmatprep.subr.mxu0 0.0
    %2476 = vmatpush1.msra.mxu0 0.0
    %2477 = vmatprep.subr.mxu0 0.0
    %2478 = vmatpush1.msra.mxu0 0.0
    %2479 = vmatprep.subr.mxu0 0.0
    %2480 = vmatpush1.msra.mxu0 0.0
    %2481 = vmatprep.subr.mxu0 0.0
    %2482 = vmatpush1.msra.mxu0 0.0
    %2483 = vmatprep.subr.mxu0 0.0
    %2484 = vmatpush1.msra.mxu0 0.0
    %2485 = vmatprep.subr.mxu0 0.0
    %2486 = vmatpush1.msra.mxu0 0.0
    %2487 = vmatprep.subr.mxu0 0.0
    %2488 = vmatpush1.msra.mxu0 0.0
    %2489 = vmatprep.subr.mxu0 0.0
    %2490 = vmatpush1.msra.mxu0 %v2454
    %2491 = vmatprep.subr.mxu0 0.0
    %2492 = vmatpush2.msra.mxu0 0.0
    %2493 = vmatprep.subr.mxu0 0.0
    %2494 = vmatpush2.msra.mxu0 0.0
    %2495 = vmatprep.subr.mxu0 0.0
    %2496 = vmatpush2.msra.mxu0 0.0
    %2497 = vmatprep.subr.mxu0 0.0
    %2498 = vmatpush2.msra.mxu0 0.0
    %2499 = vmatprep.subr.mxu0 0.0
    %2500 = vmatpush2.msra.mxu0 0.0
    %2501 = vmatprep.subr.mxu0 0.0
    %2502 = vmatpush2.msra.mxu0 0.0
    %2503 = vmatprep.subr.mxu0 0.0
    %2504 = vmatpush2.msra.mxu0 0.0
    %2505 = vmatprep.subr.mxu0 0.0
    %2506 = vmatpush2.msra.mxu0 0.0
    %2507 = vmatprep.subr.mxu0 0.0
    %2508 = vmatpush2.msra.mxu0 0.0
    %2509 = vmatprep.subr.mxu0 0.0
    %2510 = vmatpush2.msra.mxu0 0.0
    %2511 = vmatprep.subr.mxu0 0.0
    %2512 = vmatpush2.msra.mxu0 0.0
    %2513 = vmatprep.subr.mxu0 0.0
    %2514 = vmatpush2.msra.mxu0 0.0
    %2515 = vmatprep.subr.mxu0 0.0
    %2516 = vmatpush2.msra.mxu0 0.0
    %2517 = vmatprep.subr.mxu0 0.0
    %2518 = vmatpush2.msra.mxu0 0.0
    %2519 = vmatprep.subr.mxu0 0.0
    %2520 = vmatpush2.msra.mxu0 0.0
    %2521 = vmatprep.subr.mxu0 0.0
    %2522 = vmatpush2.msra.mxu0 0.0
    %2523 = vmatprep.mubr.f32.mxu0 0.0
    %2524 = vmatmul.mubr.f32.gmra.mxu0 %v2457
    %v2525 = vpop.f32.mrf.mxu0
    %v2526 = vadd.f32 0.0, %v2525
    %v2527 = vpop.f32.mrf.mxu0
    %2528 = vdwg.mxu0
    %2529 = vrot.lane.b32.xlu0 %v2197, 120
    %v2530 = vpop.permute.xlu0 %2529
    %2531 = vrot.lane.b32.xlu0 %v2189, 88
    %v2532 = vpop.permute.xlu0 %2531
    %v2533 = vsel %vm182, %v2530, 0
    %v2535 = vsel %vm182, %v2532, 0
    %2537 = vmatprep.subr.mxu0 0.0
    %2538 = vmatpush1.xpose.msra.mxu0 0.0
    %2539 = vmatprep.subr.mxu0 0.0
    %2540 = vmatpush1.xpose.msra.mxu0 0.0
    %2541 = vmatprep.subr.mxu0 0.0
    %2542 = vmatpush1.xpose.msra.mxu0 0.0
    %2543 = vmatprep.subr.mxu0 0.0
    %2544 = vmatpush1.xpose.msra.mxu0 0.0
    %2545 = vmatprep.subr.mxu0 0.0
    %2546 = vmatpush1.xpose.msra.mxu0 0.0
    %2547 = vmatprep.subr.mxu0 0.0
    %2548 = vmatpush1.xpose.msra.mxu0 0.0
    %2549 = vmatprep.subr.mxu0 0.0
    %2550 = vmatpush1.xpose.msra.mxu0 0.0
    %2551 = vmatprep.subr.mxu0 0.0
    %2552 = vmatpush1.xpose.msra.mxu0 0.0
    %2553 = vmatprep.subr.mxu0 0.0
    %2554 = vmatpush1.xpose.msra.mxu0 0.0
    %2555 = vmatprep.subr.mxu0 0.0
    %2556 = vmatpush1.xpose.msra.mxu0 0.0
    %2557 = vmatprep.subr.mxu0 0.0
    %2558 = vmatpush1.xpose.msra.mxu0 0.0
    %2559 = vmatprep.subr.mxu0 0.0
    %2560 = vmatpush1.xpose.msra.mxu0 0.0
    %2561 = vmatprep.subr.mxu0 0.0
    %2562 = vmatpush1.xpose.msra.mxu0 0.0
    %2563 = vmatprep.subr.mxu0 0.0
    %2564 = vmatpush1.xpose.msra.mxu0 0.0
    %2565 = vmatprep.subr.mxu0 0.0
    %2566 = vmatpush1.xpose.msra.mxu0 0.0
    %2567 = vmatprep.subr.mxu0 0.0
    %2568 = vmatpush1.xpose.msra.mxu0 %v2535
    %2569 = vmatprep.subr.mxu0 0.0
    %2570 = vmatpush2.xpose.msra.mxu0 0.0
    %2571 = vmatprep.subr.mxu0 0.0
    %2572 = vmatpush2.xpose.msra.mxu0 0.0
    %2573 = vmatprep.subr.mxu0 0.0
    %2574 = vmatpush2.xpose.msra.mxu0 0.0
    %2575 = vmatprep.subr.mxu0 0.0
    %2576 = vmatpush2.xpose.msra.mxu0 0.0
    %2577 = vmatprep.subr.mxu0 0.0
    %2578 = vmatpush2.xpose.msra.mxu0 0.0
    %2579 = vmatprep.subr.mxu0 0.0
    %2580 = vmatpush2.xpose.msra.mxu0 0.0
    %2581 = vmatprep.subr.mxu0 0.0
    %2582 = vmatpush2.xpose.msra.mxu0 0.0
    %2583 = vmatprep.subr.mxu0 0.0
    %2584 = vmatpush2.xpose.msra.mxu0 0.0
    %2585 = vmatprep.subr.mxu0 0.0
    %2586 = vmatpush2.xpose.msra.mxu0 0.0
    %2587 = vmatprep.subr.mxu0 0.0
    %2588 = vmatpush2.xpose.msra.mxu0 0.0
    %2589 = vmatprep.subr.mxu0 0.0
    %2590 = vmatpush2.xpose.msra.mxu0 0.0
    %2591 = vmatprep.subr.mxu0 0.0
    %2592 = vmatpush2.xpose.msra.mxu0 0.0
    %2593 = vmatprep.subr.mxu0 0.0
    %2594 = vmatpush2.xpose.msra.mxu0 0.0
    %2595 = vmatprep.subr.mxu0 0.0
    %2596 = vmatpush2.xpose.msra.mxu0 0.0
    %2597 = vmatprep.subr.mxu0 0.0
    %2598 = vmatpush2.xpose.msra.mxu0 0.0
    %2599 = vmatprep.subr.mxu0 0.0
    %2600 = vmatpush2.xpose.msra.mxu0 0.0
    %2601 = vmatprep.mubr.f32.mxu0 0.0
    %2602 = vmatmul.mubr.f32.gmra.mxu0 %v2533
    %v2603 = vpop.f32.mrf.mxu0
    %v2604 = vadd.f32 0.0, %v2603
    %v2605 = vpop.f32.mrf.mxu0
    %2606 = vdwg.mxu0
    %2607 = vrot.lane.b32.xlu0 %v2198, 120
    %v2608 = vpop.permute.xlu0 %2607
    %2609 = vrot.lane.b32.xlu0 %v2194, 88
    %v2610 = vpop.permute.xlu0 %2609
    %v2611 = vsel %vm182, %v2608, 0
    %v2613 = vsel %vm182, %v2610, 0
    %2615 = vmatprep.subr.mxu0 0.0
    %2616 = vmatpush1.xpose.msra.mxu0 0.0
    %2617 = vmatprep.subr.mxu0 0.0
    %2618 = vmatpush1.xpose.msra.mxu0 0.0
    %2619 = vmatprep.subr.mxu0 0.0
    %2620 = vmatpush1.xpose.msra.mxu0 0.0
    %2621 = vmatprep.subr.mxu0 0.0
    %2622 = vmatpush1.xpose.msra.mxu0 0.0
    %2623 = vmatprep.subr.mxu0 0.0
    %2624 = vmatpush1.xpose.msra.mxu0 0.0
    %2625 = vmatprep.subr.mxu0 0.0
    %2626 = vmatpush1.xpose.msra.mxu0 0.0
    %2627 = vmatprep.subr.mxu0 0.0
    %2628 = vmatpush1.xpose.msra.mxu0 0.0
    %2629 = vmatprep.subr.mxu0 0.0
    %2630 = vmatpush1.xpose.msra.mxu0 0.0
    %2631 = vmatprep.subr.mxu0 0.0
    %2632 = vmatpush1.xpose.msra.mxu0 0.0
    %2633 = vmatprep.subr.mxu0 0.0
    %2634 = vmatpush1.xpose.msra.mxu0 0.0
    %2635 = vmatprep.subr.mxu0 0.0
    %2636 = vmatpush1.xpose.msra.mxu0 0.0
    %2637 = vmatprep.subr.mxu0 0.0
    %2638 = vmatpush1.xpose.msra.mxu0 0.0
    %2639 = vmatprep.subr.mxu0 0.0
    %2640 = vmatpush1.xpose.msra.mxu0 0.0
    %2641 = vmatprep.subr.mxu0 0.0
    %2642 = vmatpush1.xpose.msra.mxu0 0.0
    %2643 = vmatprep.subr.mxu0 0.0
    %2644 = vmatpush1.xpose.msra.mxu0 0.0
    %2645 = vmatprep.subr.mxu0 0.0
    %2646 = vmatpush1.xpose.msra.mxu0 %v2613
    %2647 = vmatprep.subr.mxu0 0.0
    %2648 = vmatpush2.xpose.msra.mxu0 0.0
    %2649 = vmatprep.subr.mxu0 0.0
    %2650 = vmatpush2.xpose.msra.mxu0 0.0
    %2651 = vmatprep.subr.mxu0 0.0
    %2652 = vmatpush2.xpose.msra.mxu0 0.0
    %2653 = vmatprep.subr.mxu0 0.0
    %2654 = vmatpush2.xpose.msra.mxu0 0.0
    %2655 = vmatprep.subr.mxu0 0.0
    %2656 = vmatpush2.xpose.msra.mxu0 0.0
    %2657 = vmatprep.subr.mxu0 0.0
    %2658 = vmatpush2.xpose.msra.mxu0 0.0
    %2659 = vmatprep.subr.mxu0 0.0
    %2660 = vmatpush2.xpose.msra.mxu0 0.0
    %2661 = vmatprep.subr.mxu0 0.0
    %2662 = vmatpush2.xpose.msra.mxu0 0.0
    %2663 = vmatprep.subr.mxu0 0.0
    %2664 = vmatpush2.xpose.msra.mxu0 0.0
    %2665 = vmatprep.subr.mxu0 0.0
    %2666 = vmatpush2.xpose.msra.mxu0 0.0
    %2667 = vmatprep.subr.mxu0 0.0
    %2668 = vmatpush2.xpose.msra.mxu0 0.0
    %2669 = vmatprep.subr.mxu0 0.0
    %2670 = vmatpush2.xpose.msra.mxu0 0.0
    %2671 = vmatprep.subr.mxu0 0.0
    %2672 = vmatpush2.xpose.msra.mxu0 0.0
    %2673 = vmatprep.subr.mxu0 0.0
    %2674 = vmatpush2.xpose.msra.mxu0 0.0
    %2675 = vmatprep.subr.mxu0 0.0
    %2676 = vmatpush2.xpose.msra.mxu0 0.0
    %2677 = vmatprep.subr.mxu0 0.0
    %2678 = vmatpush2.xpose.msra.mxu0 0.0
    %2679 = vmatprep.mubr.f32.mxu0 0.0
    %2680 = vmatmul.mubr.f32.gmra.mxu0 %v2611
    %v2681 = vpop.f32.mrf.mxu0
    %v2682 = vadd.f32 0.0, %v2681
    %v2683 = vpop.f32.mrf.mxu0
    %2684 = vdwg.mxu0
    %v2685 = vsel %vm182, %v2604, -inf
    %2686 = vmax.xlane.f32.xlu0 %v2685
    %v2687 = vpop.xlane.xlu0 %2686
    %v2688 = vsel %vm182, %v2682, -inf
    %2689 = vmax.xlane.f32.xlu0 %v2688
    %v2690 = vpop.xlane.xlu0 %2689
    %v2691 = vsub.f32 %v2604, %v2687
    %v2692 = vsub.f32 %v2682, %v2690
    %v2693 = vmul.f32 %v2691, 1.442695
    %v2694 = vpow.pop %v2693
    %v2695 = vmul.f32 %v2692, 1.442695
    %v2696 = vpow.pop %v2695
    %v2697 = vsel %vm182, %v2694, 0.0
    %2698 = vadd.xlane.f32.xlu0 %v2697
    %v2699 = vpop.xlane.xlu0 %2698
    %v2700 = vsel %vm182, %v2696, 0.0
    %2701 = vadd.xlane.f32.xlu0 %v2700
    %v2702 = vpop.xlane.xlu0 %2701
    %v2703 = vrcp.pop %v2699
    %v2704 = vmul.f32 %v2694, %v2703
    %v2705 = vrcp.pop %v2702
    %v2706 = vmul.f32 %v2696, %v2705
    %2707 = vrot.lane.b32.xlu0 %v2189, 56
    %v2708 = vpop.permute.xlu0 %2707
    %v2711 = vsel %vm182, %v2704, 0
    %2713 = vmatprep.subr.mxu0 0.0
    %2714 = vmatpush1.msra.mxu0 0.0
    %2715 = vmatprep.subr.mxu0 0.0
    %2716 = vmatpush1.msra.mxu0 0.0
    %2717 = vmatprep.subr.mxu0 0.0
    %2718 = vmatpush1.msra.mxu0 0.0
    %2719 = vmatprep.subr.mxu0 0.0
    %2720 = vmatpush1.msra.mxu0 0.0
    %2721 = vmatprep.subr.mxu0 0.0
    %2722 = vmatpush1.msra.mxu0 0.0
    %2723 = vmatprep.subr.mxu0 0.0
    %2724 = vmatpush1.msra.mxu0 0.0
    %2725 = vmatprep.subr.mxu0 0.0
    %2726 = vmatpush1.msra.mxu0 0.0
    %2727 = vmatprep.subr.mxu0 0.0
    %2728 = vmatpush1.msra.mxu0 0.0
    %2729 = vmatprep.subr.mxu0 0.0
    %2730 = vmatpush1.msra.mxu0 0.0
    %2731 = vmatprep.subr.mxu0 0.0
    %2732 = vmatpush1.msra.mxu0 0.0
    %2733 = vmatprep.subr.mxu0 0.0
    %2734 = vmatpush1.msra.mxu0 0.0
    %2735 = vmatprep.subr.mxu0 0.0
    %2736 = vmatpush1.msra.mxu0 0.0
    %2737 = vmatprep.subr.mxu0 0.0
    %2738 = vmatpush1.msra.mxu0 0.0
    %2739 = vmatprep.subr.mxu0 0.0
    %2740 = vmatpush1.msra.mxu0 0.0
    %2741 = vmatprep.subr.mxu0 0.0
    %2742 = vmatpush1.msra.mxu0 0.0
    %2743 = vmatprep.subr.mxu0 0.0
    %2744 = vmatpush1.msra.mxu0 %v2708
    %2745 = vmatprep.subr.mxu0 0.0
    %2746 = vmatpush2.msra.mxu0 0.0
    %2747 = vmatprep.subr.mxu0 0.0
    %2748 = vmatpush2.msra.mxu0 0.0
    %2749 = vmatprep.subr.mxu0 0.0
    %2750 = vmatpush2.msra.mxu0 0.0
    %2751 = vmatprep.subr.mxu0 0.0
    %2752 = vmatpush2.msra.mxu0 0.0
    %2753 = vmatprep.subr.mxu0 0.0
    %2754 = vmatpush2.msra.mxu0 0.0
    %2755 = vmatprep.subr.mxu0 0.0
    %2756 = vmatpush2.msra.mxu0 0.0
    %2757 = vmatprep.subr.mxu0 0.0
    %2758 = vmatpush2.msra.mxu0 0.0
    %2759 = vmatprep.subr.mxu0 0.0
    %2760 = vmatpush2.msra.mxu0 0.0
    %2761 = vmatprep.subr.mxu0 0.0
    %2762 = vmatpush2.msra.mxu0 0.0
    %2763 = vmatprep.subr.mxu0 0.0
    %2764 = vmatpush2.msra.mxu0 0.0
    %2765 = vmatprep.subr.mxu0 0.0
    %2766 = vmatpush2.msra.mxu0 0.0
    %2767 = vmatprep.subr.mxu0 0.0
    %2768 = vmatpush2.msra.mxu0 0.0
    %2769 = vmatprep.subr.mxu0 0.0
    %2770 = vmatpush2.msra.mxu0 0.0
    %2771 = vmatprep.subr.mxu0 0.0
    %2772 = vmatpush2.msra.mxu0 0.0
    %2773 = vmatprep.subr.mxu0 0.0
    %2774 = vmatpush2.msra.mxu0 0.0
    %2775 = vmatprep.subr.mxu0 0.0
    %2776 = vmatpush2.msra.mxu0 0.0
    %2777 = vmatprep.mubr.f32.mxu0 0.0
    %2778 = vmatmul.mubr.f32.gmra.mxu0 %v2711
    %v2779 = vpop.f32.mrf.mxu0
    %v2780 = vadd.f32 0.0, %v2779
    %v2781 = vpop.f32.mrf.mxu0
    %2782 = vdwg.mxu0
    %2783 = vrot.lane.b32.xlu0 %v2194, 56
    %v2784 = vpop.permute.xlu0 %2783
    %v2787 = vsel %vm182, %v2706, 0
    %2789 = vmatprep.subr.mxu0 0.0
    %2790 = vmatpush1.msra.mxu0 0.0
    %2791 = vmatprep.subr.mxu0 0.0
    %2792 = vmatpush1.msra.mxu0 0.0
    %2793 = vmatprep.subr.mxu0 0.0
    %2794 = vmatpush1.msra.mxu0 0.0
    %2795 = vmatprep.subr.mxu0 0.0
    %2796 = vmatpush1.msra.mxu0 0.0
    %2797 = vmatprep.subr.mxu0 0.0
    %2798 = vmatpush1.msra.mxu0 0.0
    %2799 = vmatprep.subr.mxu0 0.0
    %2800 = vmatpush1.msra.mxu0 0.0
    %2801 = vmatprep.subr.mxu0 0.0
    %2802 = vmatpush1.msra.mxu0 0.0
    %2803 = vmatprep.subr.mxu0 0.0
    %2804 = vmatpush1.msra.mxu0 0.0
    %2805 = vmatprep.subr.mxu0 0.0
    %2806 = vmatpush1.msra.mxu0 0.0
    %2807 = vmatprep.subr.mxu0 0.0
    %2808 = vmatpush1.msra.mxu0 0.0
    %2809 = vmatprep.subr.mxu0 0.0
    %2810 = vmatpush1.msra.mxu0 0.0
    %2811 = vmatprep.subr.mxu0 0.0
    %2812 = vmatpush1.msra.mxu0 0.0
    %2813 = vmatprep.subr.mxu0 0.0
    %2814 = vmatpush1.msra.mxu0 0.0
    %2815 = vmatprep.subr.mxu0 0.0
    %2816 = vmatpush1.msra.mxu0 0.0
    %2817 = vmatprep.subr.mxu0 0.0
    %2818 = vmatpush1.msra.mxu0 0.0
    %2819 = vmatprep.subr.mxu0 0.0
    %2820 = vmatpush1.msra.mxu0 %v2784
    %2821 = vmatprep.subr.mxu0 0.0
    %2822 = vmatpush2.msra.mxu0 0.0
    %2823 = vmatprep.subr.mxu0 0.0
    %2824 = vmatpush2.msra.mxu0 0.0
    %2825 = vmatprep.subr.mxu0 0.0
    %2826 = vmatpush2.msra.mxu0 0.0
    %2827 = vmatprep.subr.mxu0 0.0
    %2828 = vmatpush2.msra.mxu0 0.0
    %2829 = vmatprep.subr.mxu0 0.0
    %2830 = vmatpush2.msra.mxu0 0.0
    %2831 = vmatprep.subr.mxu0 0.0
    %2832 = vmatpush2.msra.mxu0 0.0
    %2833 = vmatprep.subr.mxu0 0.0
    %2834 = vmatpush2.msra.mxu0 0.0
    %2835 = vmatprep.subr.mxu0 0.0
    %2836 = vmatpush2.msra.mxu0 0.0
    %2837 = vmatprep.subr.mxu0 0.0
    %2838 = vmatpush2.msra.mxu0 0.0
    %2839 = vmatprep.subr.mxu0 0.0
    %2840 = vmatpush2.msra.mxu0 0.0
    %2841 = vmatprep.subr.mxu0 0.0
    %2842 = vmatpush2.msra.mxu0 0.0
    %2843 = vmatprep.subr.mxu0 0.0
    %2844 = vmatpush2.msra.mxu0 0.0
    %2845 = vmatprep.subr.mxu0 0.0
    %2846 = vmatpush2.msra.mxu0 0.0
    %2847 = vmatprep.subr.mxu0 0.0
    %2848 = vmatpush2.msra.mxu0 0.0
    %2849 = vmatprep.subr.mxu0 0.0
    %2850 = vmatpush2.msra.mxu0 0.0
    %2851 = vmatprep.subr.mxu0 0.0
    %2852 = vmatpush2.msra.mxu0 0.0
    %2853 = vmatprep.mubr.f32.mxu0 0.0
    %2854 = vmatmul.mubr.f32.gmra.mxu0 %v2787
    %v2855 = vpop.f32.mrf.mxu0
    %v2856 = vadd.f32 0.0, %v2855
    %v2857 = vpop.f32.mrf.mxu0
    %2858 = vdwg.mxu0
    %v2860 = vsel %vm182, %v2780, 0
    %v2863 = vsel %vm182, %v2856, 0
    %2865 = vmatprep.subr.mxu0 0.0
    %2866 = vmatpush1.msra.mxu0 0.0
    %2867 = vmatprep.subr.mxu0 0.0
    %2868 = vmatpush1.msra.mxu0 0.0
    %2869 = vmatprep.subr.mxu0 0.0
    %2870 = vmatpush1.msra.mxu0 0.0
    %2871 = vmatprep.subr.mxu0 0.0
    %2872 = vmatpush1.msra.mxu0 0.0
    %2873 = vmatprep.subr.mxu0 0.0
    %2874 = vmatpush1.msra.mxu0 0.0
    %2875 = vmatprep.subr.mxu0 0.0
    %2876 = vmatpush1.msra.mxu0 0.0
    %2877 = vmatprep.subr.mxu0 0.0
    %2878 = vmatpush1.msra.mxu0 0.0
    %2879 = vmatprep.subr.mxu0 0.0
    %2880 = vmatpush1.msra.mxu0 0.0
    %2881 = vmatprep.subr.mxu0 0.0
    %2882 = vmatpush1.msra.mxu0 0.0
    %2883 = vmatprep.subr.mxu0 0.0
    %2884 = vmatpush1.msra.mxu0 0.0
    %2885 = vmatprep.subr.mxu0 0.0
    %2886 = vmatpush1.msra.mxu0 0.0
    %2887 = vmatprep.subr.mxu0 0.0
    %2888 = vmatpush1.msra.mxu0 0.0
    %2889 = vmatprep.subr.mxu0 0.0
    %2890 = vmatpush1.msra.mxu0 0.0
    %2891 = vmatprep.subr.mxu0 0.0
    %2892 = vmatpush1.msra.mxu0 0.0
    %2893 = vmatprep.subr.mxu0 0.0
    %2894 = vmatpush1.msra.mxu0 0.0
    %2895 = vmatprep.subr.mxu0 0.0
    %2896 = vmatpush1.msra.mxu0 %v2095
    %2897 = vmatprep.subr.mxu0 0.0
    %2898 = vmatpush2.msra.mxu0 0.0
    %2899 = vmatprep.subr.mxu0 0.0
    %2900 = vmatpush2.msra.mxu0 0.0
    %2901 = vmatprep.subr.mxu0 0.0
    %2902 = vmatpush2.msra.mxu0 0.0
    %2903 = vmatprep.subr.mxu0 0.0
    %2904 = vmatpush2.msra.mxu0 0.0
    %2905 = vmatprep.subr.mxu0 0.0
    %2906 = vmatpush2.msra.mxu0 0.0
    %2907 = vmatprep.subr.mxu0 0.0
    %2908 = vmatpush2.msra.mxu0 0.0
    %2909 = vmatprep.subr.mxu0 0.0
    %2910 = vmatpush2.msra.mxu0 0.0
    %2911 = vmatprep.subr.mxu0 0.0
    %2912 = vmatpush2.msra.mxu0 0.0
    %2913 = vmatprep.subr.mxu0 0.0
    %2914 = vmatpush2.msra.mxu0 0.0
    %2915 = vmatprep.subr.mxu0 0.0
    %2916 = vmatpush2.msra.mxu0 0.0
    %2917 = vmatprep.subr.mxu0 0.0
    %2918 = vmatpush2.msra.mxu0 0.0
    %2919 = vmatprep.subr.mxu0 0.0
    %2920 = vmatpush2.msra.mxu0 0.0
    %2921 = vmatprep.subr.mxu0 0.0
    %2922 = vmatpush2.msra.mxu0 0.0
    %2923 = vmatprep.subr.mxu0 0.0
    %2924 = vmatpush2.msra.mxu0 0.0
    %2925 = vmatprep.subr.mxu0 0.0
    %2926 = vmatpush2.msra.mxu0 0.0
    %2927 = vmatprep.subr.mxu0 0.0
    %2928 = vmatpush2.msra.mxu0 0.0
    %2929 = vmatprep.mubr.f32.mxu0 0.0
    %2930 = vmatmul.mubr.f32.gmra.mxu0 %v2860
    %v2931 = vpop.f32.mrf.mxu0
    %v2932 = vadd.f32 0.0, %v2931
    %v2933 = vpop.f32.mrf.mxu0
    %2934 = vmatprep.mubr.f32.mxu0 0.0
    %2935 = vmatmul.mubr.f32.gmra.mxu0 %v2863
    %v2936 = vpop.f32.mrf.mxu0
    %v2937 = vadd.f32 0.0, %v2936
    %v2938 = vpop.f32.mrf.mxu0
    %2939 = vdwg.mxu0
    %v2941 = vsel %vm182, %v2450, 0
    %v2944 = vsel %vm182, %v2526, 0
    %2946 = vmatprep.subr.mxu0 0.0
    %2947 = vmatpush1.msra.mxu0 0.0
    %2948 = vmatprep.subr.mxu0 0.0
    %2949 = vmatpush1.msra.mxu0 0.0
    %2950 = vmatprep.subr.mxu0 0.0
    %2951 = vmatpush1.msra.mxu0 0.0
    %2952 = vmatprep.subr.mxu0 0.0
    %2953 = vmatpush1.msra.mxu0 0.0
    %2954 = vmatprep.subr.mxu0 0.0
    %2955 = vmatpush1.msra.mxu0 0.0
    %2956 = vmatprep.subr.mxu0 0.0
    %2957 = vmatpush1.msra.mxu0 0.0
    %2958 = vmatprep.subr.mxu0 0.0
    %2959 = vmatpush1.msra.mxu0 0.0
    %2960 = vmatprep.subr.mxu0 0.0
    %2961 = vmatpush1.msra.mxu0 0.0
    %2962 = vmatprep.subr.mxu0 0.0
    %2963 = vmatpush1.msra.mxu0 0.0
    %2964 = vmatprep.subr.mxu0 0.0
    %2965 = vmatpush1.msra.mxu0 0.0
    %2966 = vmatprep.subr.mxu0 0.0
    %2967 = vmatpush1.msra.mxu0 0.0
    %2968 = vmatprep.subr.mxu0 0.0
    %2969 = vmatpush1.msra.mxu0 0.0
    %2970 = vmatprep.subr.mxu0 0.0
    %2971 = vmatpush1.msra.mxu0 0.0
    %2972 = vmatprep.subr.mxu0 0.0
    %2973 = vmatpush1.msra.mxu0 0.0
    %2974 = vmatprep.subr.mxu0 0.0
    %2975 = vmatpush1.msra.mxu0 0.0
    %2976 = vmatprep.subr.mxu0 0.0
    %2977 = vmatpush1.msra.mxu0 %v2094
    %2978 = vmatprep.subr.mxu0 0.0
    %2979 = vmatpush2.msra.mxu0 0.0
    %2980 = vmatprep.subr.mxu0 0.0
    %2981 = vmatpush2.msra.mxu0 0.0
    %2982 = vmatprep.subr.mxu0 0.0
    %2983 = vmatpush2.msra.mxu0 0.0
    %2984 = vmatprep.subr.mxu0 0.0
    %2985 = vmatpush2.msra.mxu0 0.0
    %2986 = vmatprep.subr.mxu0 0.0
    %2987 = vmatpush2.msra.mxu0 0.0
    %2988 = vmatprep.subr.mxu0 0.0
    %2989 = vmatpush2.msra.mxu0 0.0
    %2990 = vmatprep.subr.mxu0 0.0
    %2991 = vmatpush2.msra.mxu0 0.0
    %2992 = vmatprep.subr.mxu0 0.0
    %2993 = vmatpush2.msra.mxu0 0.0
    %2994 = vmatprep.subr.mxu0 0.0
    %2995 = vmatpush2.msra.mxu0 0.0
    %2996 = vmatprep.subr.mxu0 0.0
    %2997 = vmatpush2.msra.mxu0 0.0
    %2998 = vmatprep.subr.mxu0 0.0
    %2999 = vmatpush2.msra.mxu0 0.0
    %3000 = vmatprep.subr.mxu0 0.0
    %3001 = vmatpush2.msra.mxu0 0.0
    %3002 = vmatprep.subr.mxu0 0.0
    %3003 = vmatpush2.msra.mxu0 0.0
    %3004 = vmatprep.subr.mxu0 0.0
    %3005 = vmatpush2.msra.mxu0 0.0
    %3006 = vmatprep.subr.mxu0 0.0
    %3007 = vmatpush2.msra.mxu0 0.0
    %3008 = vmatprep.subr.mxu0 0.0
    %3009 = vmatpush2.msra.mxu0 0.0
    %3010 = vmatprep.mubr.f32.mxu0 0.0
    %3011 = vmatmul.mubr.f32.gmra.mxu0 %v2941
    %v3012 = vpop.f32.mrf.mxu0
    %v3013 = vadd.f32 %v2932, %v3012
    %v3014 = vpop.f32.mrf.mxu0
    %3015 = vmatprep.mubr.f32.mxu0 0.0
    %3016 = vmatmul.mubr.f32.gmra.mxu0 %v2944
    %v3017 = vpop.f32.mrf.mxu0
    %v3018 = vadd.f32 %v2937, %v3017
    %v3019 = vpop.f32.mrf.mxu0
    %3020 = vdwg.mxu0
    %3021 = vrot.lane.b32.xlu0 %v2197, 112
    %v3022 = vpop.permute.xlu0 %3021
    %3023 = vrot.lane.b32.xlu0 %v2189, 80
    %v3024 = vpop.permute.xlu0 %3023
    %v3025 = vsel %vm182, %v3022, 0
    %v3027 = vsel %vm182, %v3024, 0
    %3029 = vmatprep.subr.mxu0 0.0
    %3030 = vmatpush1.xpose.msra.mxu0 0.0
    %3031 = vmatprep.subr.mxu0 0.0
    %3032 = vmatpush1.xpose.msra.mxu0 0.0
    %3033 = vmatprep.subr.mxu0 0.0
    %3034 = vmatpush1.xpose.msra.mxu0 0.0
    %3035 = vmatprep.subr.mxu0 0.0
    %3036 = vmatpush1.xpose.msra.mxu0 0.0
    %3037 = vmatprep.subr.mxu0 0.0
    %3038 = vmatpush1.xpose.msra.mxu0 0.0
    %3039 = vmatprep.subr.mxu0 0.0
    %3040 = vmatpush1.xpose.msra.mxu0 0.0
    %3041 = vmatprep.subr.mxu0 0.0
    %3042 = vmatpush1.xpose.msra.mxu0 0.0
    %3043 = vmatprep.subr.mxu0 0.0
    %3044 = vmatpush1.xpose.msra.mxu0 0.0
    %3045 = vmatprep.subr.mxu0 0.0
    %3046 = vmatpush1.xpose.msra.mxu0 0.0
    %3047 = vmatprep.subr.mxu0 0.0
    %3048 = vmatpush1.xpose.msra.mxu0 0.0
    %3049 = vmatprep.subr.mxu0 0.0
    %3050 = vmatpush1.xpose.msra.mxu0 0.0
    %3051 = vmatprep.subr.mxu0 0.0
    %3052 = vmatpush1.xpose.msra.mxu0 0.0
    %3053 = vmatprep.subr.mxu0 0.0
    %3054 = vmatpush1.xpose.msra.mxu0 0.0
    %3055 = vmatprep.subr.mxu0 0.0
    %3056 = vmatpush1.xpose.msra.mxu0 0.0
    %3057 = vmatprep.subr.mxu0 0.0
    %3058 = vmatpush1.xpose.msra.mxu0 0.0
    %3059 = vmatprep.subr.mxu0 0.0
    %3060 = vmatpush1.xpose.msra.mxu0 %v3027
    %3061 = vmatprep.subr.mxu0 0.0
    %3062 = vmatpush2.xpose.msra.mxu0 0.0
    %3063 = vmatprep.subr.mxu0 0.0
    %3064 = vmatpush2.xpose.msra.mxu0 0.0
    %3065 = vmatprep.subr.mxu0 0.0
    %3066 = vmatpush2.xpose.msra.mxu0 0.0
    %3067 = vmatprep.subr.mxu0 0.0
    %3068 = vmatpush2.xpose.msra.mxu0 0.0
    %3069 = vmatprep.subr.mxu0 0.0
    %3070 = vmatpush2.xpose.msra.mxu0 0.0
    %3071 = vmatprep.subr.mxu0 0.0
    %3072 = vmatpush2.xpose.msra.mxu0 0.0
    %3073 = vmatprep.subr.mxu0 0.0
    %3074 = vmatpush2.xpose.msra.mxu0 0.0
    %3075 = vmatprep.subr.mxu0 0.0
    %3076 = vmatpush2.xpose.msra.mxu0 0.0
    %3077 = vmatprep.subr.mxu0 0.0
    %3078 = vmatpush2.xpose.msra.mxu0 0.0
    %3079 = vmatprep.subr.mxu0 0.0
    %3080 = vmatpush2.xpose.msra.mxu0 0.0
    %3081 = vmatprep.subr.mxu0 0.0
    %3082 = vmatpush2.xpose.msra.mxu0 0.0
    %3083 = vmatprep.subr.mxu0 0.0
    %3084 = vmatpush2.xpose.msra.mxu0 0.0
    %3085 = vmatprep.subr.mxu0 0.0
    %3086 = vmatpush2.xpose.msra.mxu0 0.0
    %3087 = vmatprep.subr.mxu0 0.0
    %3088 = vmatpush2.xpose.msra.mxu0 0.0
    %3089 = vmatprep.subr.mxu0 0.0
    %3090 = vmatpush2.xpose.msra.mxu0 0.0
    %3091 = vmatprep.subr.mxu0 0.0
    %3092 = vmatpush2.xpose.msra.mxu0 0.0
    %3093 = vmatprep.mubr.f32.mxu0 0.0
    %3094 = vmatmul.mubr.f32.gmra.mxu0 %v3025
    %v3095 = vpop.f32.mrf.mxu0
    %v3096 = vadd.f32 0.0, %v3095
    %v3097 = vpop.f32.mrf.mxu0
    %3098 = vdwg.mxu0
    %3099 = vrot.lane.b32.xlu0 %v2198, 112
    %v3100 = vpop.permute.xlu0 %3099
    %3101 = vrot.lane.b32.xlu0 %v2194, 80
    %v3102 = vpop.permute.xlu0 %3101
    %v3103 = vsel %vm182, %v3100, 0
    %v3105 = vsel %vm182, %v3102, 0
    %3107 = vmatprep.subr.mxu0 0.0
    %3108 = vmatpush1.xpose.msra.mxu0 0.0
    %3109 = vmatprep.subr.mxu0 0.0
    %3110 = vmatpush1.xpose.msra.mxu0 0.0
    %3111 = vmatprep.subr.mxu0 0.0
    %3112 = vmatpush1.xpose.msra.mxu0 0.0
    %3113 = vmatprep.subr.mxu0 0.0
    %3114 = vmatpush1.xpose.msra.mxu0 0.0
    %3115 = vmatprep.subr.mxu0 0.0
    %3116 = vmatpush1.xpose.msra.mxu0 0.0
    %3117 = vmatprep.subr.mxu0 0.0
    %3118 = vmatpush1.xpose.msra.mxu0 0.0
    %3119 = vmatprep.subr.mxu0 0.0
    %3120 = vmatpush1.xpose.msra.mxu0 0.0
    %3121 = vmatprep.subr.mxu0 0.0
    %3122 = vmatpush1.xpose.msra.mxu0 0.0
    %3123 = vmatprep.subr.mxu0 0.0
    %3124 = vmatpush1.xpose.msra.mxu0 0.0
    %3125 = vmatprep.subr.mxu0 0.0
    %3126 = vmatpush1.xpose.msra.mxu0 0.0
    %3127 = vmatprep.subr.mxu0 0.0
    %3128 = vmatpush1.xpose.msra.mxu0 0.0
    %3129 = vmatprep.subr.mxu0 0.0
    %3130 = vmatpush1.xpose.msra.mxu0 0.0
    %3131 = vmatprep.subr.mxu0 0.0
    %3132 = vmatpush1.xpose.msra.mxu0 0.0
    %3133 = vmatprep.subr.mxu0 0.0
    %3134 = vmatpush1.xpose.msra.mxu0 0.0
    %3135 = vmatprep.subr.mxu0 0.0
    %3136 = vmatpush1.xpose.msra.mxu0 0.0
    %3137 = vmatprep.subr.mxu0 0.0
    %3138 = vmatpush1.xpose.msra.mxu0 %v3105
    %3139 = vmatprep.subr.mxu0 0.0
    %3140 = vmatpush2.xpose.msra.mxu0 0.0
    %3141 = vmatprep.subr.mxu0 0.0
    %3142 = vmatpush2.xpose.msra.mxu0 0.0
    %3143 = vmatprep.subr.mxu0 0.0
    %3144 = vmatpush2.xpose.msra.mxu0 0.0
    %3145 = vmatprep.subr.mxu0 0.0
    %3146 = vmatpush2.xpose.msra.mxu0 0.0
    %3147 = vmatprep.subr.mxu0 0.0
    %3148 = vmatpush2.xpose.msra.mxu0 0.0
    %3149 = vmatprep.subr.mxu0 0.0
    %3150 = vmatpush2.xpose.msra.mxu0 0.0
    %3151 = vmatprep.subr.mxu0 0.0
    %3152 = vmatpush2.xpose.msra.mxu0 0.0
    %3153 = vmatprep.subr.mxu0 0.0
    %3154 = vmatpush2.xpose.msra.mxu0 0.0
    %3155 = vmatprep.subr.mxu0 0.0
    %3156 = vmatpush2.xpose.msra.mxu0 0.0
    %3157 = vmatprep.subr.mxu0 0.0
    %3158 = vmatpush2.xpose.msra.mxu0 0.0
    %3159 = vmatprep.subr.mxu0 0.0
    %3160 = vmatpush2.xpose.msra.mxu0 0.0
    %3161 = vmatprep.subr.mxu0 0.0
    %3162 = vmatpush2.xpose.msra.mxu0 0.0
    %3163 = vmatprep.subr.mxu0 0.0
    %3164 = vmatpush2.xpose.msra.mxu0 0.0
    %3165 = vmatprep.subr.mxu0 0.0
    %3166 = vmatpush2.xpose.msra.mxu0 0.0
    %3167 = vmatprep.subr.mxu0 0.0
    %3168 = vmatpush2.xpose.msra.mxu0 0.0
    %3169 = vmatprep.subr.mxu0 0.0
    %3170 = vmatpush2.xpose.msra.mxu0 0.0
    %3171 = vmatprep.mubr.f32.mxu0 0.0
    %3172 = vmatmul.mubr.f32.gmra.mxu0 %v3103
    %v3173 = vpop.f32.mrf.mxu0
    %v3174 = vadd.f32 0.0, %v3173
    %v3175 = vpop.f32.mrf.mxu0
    %3176 = vdwg.mxu0
    %v3177 = vsel %vm182, %v3096, -inf
    %3178 = vmax.xlane.f32.xlu0 %v3177
    %v3179 = vpop.xlane.xlu0 %3178
    %v3180 = vsel %vm182, %v3174, -inf
    %3181 = vmax.xlane.f32.xlu0 %v3180
    %v3182 = vpop.xlane.xlu0 %3181
    %v3183 = vsub.f32 %v3096, %v3179
    %v3184 = vsub.f32 %v3174, %v3182
    %v3185 = vmul.f32 %v3183, 1.442695
    %v3186 = vpow.pop %v3185
    %v3187 = vmul.f32 %v3184, 1.442695
    %v3188 = vpow.pop %v3187
    %v3189 = vsel %vm182, %v3186, 0.0
    %3190 = vadd.xlane.f32.xlu0 %v3189
    %v3191 = vpop.xlane.xlu0 %3190
    %v3192 = vsel %vm182, %v3188, 0.0
    %3193 = vadd.xlane.f32.xlu0 %v3192
    %v3194 = vpop.xlane.xlu0 %3193
    %v3195 = vrcp.pop %v3191
    %v3196 = vmul.f32 %v3186, %v3195
    %v3197 = vrcp.pop %v3194
    %v3198 = vmul.f32 %v3188, %v3197
    %3199 = vrot.lane.b32.xlu0 %v2189, 48
    %v3200 = vpop.permute.xlu0 %3199
    %v3203 = vsel %vm182, %v3196, 0
    %3205 = vmatprep.subr.mxu0 0.0
    %3206 = vmatpush1.msra.mxu0 0.0
    %3207 = vmatprep.subr.mxu0 0.0
    %3208 = vmatpush1.msra.mxu0 0.0
    %3209 = vmatprep.subr.mxu0 0.0
    %3210 = vmatpush1.msra.mxu0 0.0
    %3211 = vmatprep.subr.mxu0 0.0
    %3212 = vmatpush1.msra.mxu0 0.0
    %3213 = vmatprep.subr.mxu0 0.0
    %3214 = vmatpush1.msra.mxu0 0.0
    %3215 = vmatprep.subr.mxu0 0.0
    %3216 = vmatpush1.msra.mxu0 0.0
    %3217 = vmatprep.subr.mxu0 0.0
    %3218 = vmatpush1.msra.mxu0 0.0
    %3219 = vmatprep.subr.mxu0 0.0
    %3220 = vmatpush1.msra.mxu0 0.0
    %3221 = vmatprep.subr.mxu0 0.0
    %3222 = vmatpush1.msra.mxu0 0.0
    %3223 = vmatprep.subr.mxu0 0.0
    %3224 = vmatpush1.msra.mxu0 0.0
    %3225 = vmatprep.subr.mxu0 0.0
    %3226 = vmatpush1.msra.mxu0 0.0
    %3227 = vmatprep.subr.mxu0 0.0
    %3228 = vmatpush1.msra.mxu0 0.0
    %3229 = vmatprep.subr.mxu0 0.0
    %3230 = vmatpush1.msra.mxu0 0.0
    %3231 = vmatprep.subr.mxu0 0.0
    %3232 = vmatpush1.msra.mxu0 0.0
    %3233 = vmatprep.subr.mxu0 0.0
    %3234 = vmatpush1.msra.mxu0 0.0
    %3235 = vmatprep.subr.mxu0 0.0
    %3236 = vmatpush1.msra.mxu0 %v3200
    %3237 = vmatprep.subr.mxu0 0.0
    %3238 = vmatpush2.msra.mxu0 0.0
    %3239 = vmatprep.subr.mxu0 0.0
    %3240 = vmatpush2.msra.mxu0 0.0
    %3241 = vmatprep.subr.mxu0 0.0
    %3242 = vmatpush2.msra.mxu0 0.0
    %3243 = vmatprep.subr.mxu0 0.0
    %3244 = vmatpush2.msra.mxu0 0.0
    %3245 = vmatprep.subr.mxu0 0.0
    %3246 = vmatpush2.msra.mxu0 0.0
    %3247 = vmatprep.subr.mxu0 0.0
    %3248 = vmatpush2.msra.mxu0 0.0
    %3249 = vmatprep.subr.mxu0 0.0
    %3250 = vmatpush2.msra.mxu0 0.0
    %3251 = vmatprep.subr.mxu0 0.0
    %3252 = vmatpush2.msra.mxu0 0.0
    %3253 = vmatprep.subr.mxu0 0.0
    %3254 = vmatpush2.msra.mxu0 0.0
    %3255 = vmatprep.subr.mxu0 0.0
    %3256 = vmatpush2.msra.mxu0 0.0
    %3257 = vmatprep.subr.mxu0 0.0
    %3258 = vmatpush2.msra.mxu0 0.0
    %3259 = vmatprep.subr.mxu0 0.0
    %3260 = vmatpush2.msra.mxu0 0.0
    %3261 = vmatprep.subr.mxu0 0.0
    %3262 = vmatpush2.msra.mxu0 0.0
    %3263 = vmatprep.subr.mxu0 0.0
    %3264 = vmatpush2.msra.mxu0 0.0
    %3265 = vmatprep.subr.mxu0 0.0
    %3266 = vmatpush2.msra.mxu0 0.0
    %3267 = vmatprep.subr.mxu0 0.0
    %3268 = vmatpush2.msra.mxu0 0.0
    %3269 = vmatprep.mubr.f32.mxu0 0.0
    %3270 = vmatmul.mubr.f32.gmra.mxu0 %v3203
    %v3271 = vpop.f32.mrf.mxu0
    %v3272 = vadd.f32 0.0, %v3271
    %v3273 = vpop.f32.mrf.mxu0
    %3274 = vdwg.mxu0
    %3275 = vrot.lane.b32.xlu0 %v2194, 48
    %v3276 = vpop.permute.xlu0 %3275
    %v3279 = vsel %vm182, %v3198, 0
    %3281 = vmatprep.subr.mxu0 0.0
    %3282 = vmatpush1.msra.mxu0 0.0
    %3283 = vmatprep.subr.mxu0 0.0
    %3284 = vmatpush1.msra.mxu0 0.0
    %3285 = vmatprep.subr.mxu0 0.0
    %3286 = vmatpush1.msra.mxu0 0.0
    %3287 = vmatprep.subr.mxu0 0.0
    %3288 = vmatpush1.msra.mxu0 0.0
    %3289 = vmatprep.subr.mxu0 0.0
    %3290 = vmatpush1.msra.mxu0 0.0
    %3291 = vmatprep.subr.mxu0 0.0
    %3292 = vmatpush1.msra.mxu0 0.0
    %3293 = vmatprep.subr.mxu0 0.0
    %3294 = vmatpush1.msra.mxu0 0.0
    %3295 = vmatprep.subr.mxu0 0.0
    %3296 = vmatpush1.msra.mxu0 0.0
    %3297 = vmatprep.subr.mxu0 0.0
    %3298 = vmatpush1.msra.mxu0 0.0
    %3299 = vmatprep.subr.mxu0 0.0
    %3300 = vmatpush1.msra.mxu0 0.0
    %3301 = vmatprep.subr.mxu0 0.0
    %3302 = vmatpush1.msra.mxu0 0.0
    %3303 = vmatprep.subr.mxu0 0.0
    %3304 = vmatpush1.msra.mxu0 0.0
    %3305 = vmatprep.subr.mxu0 0.0
    %3306 = vmatpush1.msra.mxu0 0.0
    %3307 = vmatprep.subr.mxu0 0.0
    %3308 = vmatpush1.msra.mxu0 0.0
    %3309 = vmatprep.subr.mxu0 0.0
    %3310 = vmatpush1.msra.mxu0 0.0
    %3311 = vmatprep.subr.mxu0 0.0
    %3312 = vmatpush1.msra.mxu0 %v3276
    %3313 = vmatprep.subr.mxu0 0.0
    %3314 = vmatpush2.msra.mxu0 0.0
    %3315 = vmatprep.subr.mxu0 0.0
    %3316 = vmatpush2.msra.mxu0 0.0
    %3317 = vmatprep.subr.mxu0 0.0
    %3318 = vmatpush2.msra.mxu0 0.0
    %3319 = vmatprep.subr.mxu0 0.0
    %3320 = vmatpush2.msra.mxu0 0.0
    %3321 = vmatprep.subr.mxu0 0.0
    %3322 = vmatpush2.msra.mxu0 0.0
    %3323 = vmatprep.subr.mxu0 0.0
    %3324 = vmatpush2.msra.mxu0 0.0
    %3325 = vmatprep.subr.mxu0 0.0
    %3326 = vmatpush2.msra.mxu0 0.0
    %3327 = vmatprep.subr.mxu0 0.0
    %3328 = vmatpush2.msra.mxu0 0.0
    %3329 = vmatprep.subr.mxu0 0.0
    %3330 = vmatpush2.msra.mxu0 0.0
    %3331 = vmatprep.subr.mxu0 0.0
    %3332 = vmatpush2.msra.mxu0 0.0
    %3333 = vmatprep.subr.mxu0 0.0
    %3334 = vmatpush2.msra.mxu0 0.0
    %3335 = vmatprep.subr.mxu0 0.0
    %3336 = vmatpush2.msra.mxu0 0.0
    %3337 = vmatprep.subr.mxu0 0.0
    %3338 = vmatpush2.msra.mxu0 0.0
    %3339 = vmatprep.subr.mxu0 0.0
    %3340 = vmatpush2.msra.mxu0 0.0
    %3341 = vmatprep.subr.mxu0 0.0
    %3342 = vmatpush2.msra.mxu0 0.0
    %3343 = vmatprep.subr.mxu0 0.0
    %3344 = vmatpush2.msra.mxu0 0.0
    %3345 = vmatprep.mubr.f32.mxu0 0.0
    %3346 = vmatmul.mubr.f32.gmra.mxu0 %v3279
    %v3347 = vpop.f32.mrf.mxu0
    %v3348 = vadd.f32 0.0, %v3347
    %v3349 = vpop.f32.mrf.mxu0
    %3350 = vdwg.mxu0
    %v3352 = vsel %vm182, %v3272, 0
    %v3355 = vsel %vm182, %v3348, 0
    %3357 = vmatprep.subr.mxu0 0.0
    %3358 = vmatpush1.msra.mxu0 0.0
    %3359 = vmatprep.subr.mxu0 0.0
    %3360 = vmatpush1.msra.mxu0 0.0
    %3361 = vmatprep.subr.mxu0 0.0
    %3362 = vmatpush1.msra.mxu0 0.0
    %3363 = vmatprep.subr.mxu0 0.0
    %3364 = vmatpush1.msra.mxu0 0.0
    %3365 = vmatprep.subr.mxu0 0.0
    %3366 = vmatpush1.msra.mxu0 0.0
    %3367 = vmatprep.subr.mxu0 0.0
    %3368 = vmatpush1.msra.mxu0 0.0
    %3369 = vmatprep.subr.mxu0 0.0
    %3370 = vmatpush1.msra.mxu0 0.0
    %3371 = vmatprep.subr.mxu0 0.0
    %3372 = vmatpush1.msra.mxu0 0.0
    %3373 = vmatprep.subr.mxu0 0.0
    %3374 = vmatpush1.msra.mxu0 0.0
    %3375 = vmatprep.subr.mxu0 0.0
    %3376 = vmatpush1.msra.mxu0 0.0
    %3377 = vmatprep.subr.mxu0 0.0
    %3378 = vmatpush1.msra.mxu0 0.0
    %3379 = vmatprep.subr.mxu0 0.0
    %3380 = vmatpush1.msra.mxu0 0.0
    %3381 = vmatprep.subr.mxu0 0.0
    %3382 = vmatpush1.msra.mxu0 0.0
    %3383 = vmatprep.subr.mxu0 0.0
    %3384 = vmatpush1.msra.mxu0 0.0
    %3385 = vmatprep.subr.mxu0 0.0
    %3386 = vmatpush1.msra.mxu0 0.0
    %3387 = vmatprep.subr.mxu0 0.0
    %3388 = vmatpush1.msra.mxu0 %v2096
    %3389 = vmatprep.subr.mxu0 0.0
    %3390 = vmatpush2.msra.mxu0 0.0
    %3391 = vmatprep.subr.mxu0 0.0
    %3392 = vmatpush2.msra.mxu0 0.0
    %3393 = vmatprep.subr.mxu0 0.0
    %3394 = vmatpush2.msra.mxu0 0.0
    %3395 = vmatprep.subr.mxu0 0.0
    %3396 = vmatpush2.msra.mxu0 0.0
    %3397 = vmatprep.subr.mxu0 0.0
    %3398 = vmatpush2.msra.mxu0 0.0
    %3399 = vmatprep.subr.mxu0 0.0
    %3400 = vmatpush2.msra.mxu0 0.0
    %3401 = vmatprep.subr.mxu0 0.0
    %3402 = vmatpush2.msra.mxu0 0.0
    %3403 = vmatprep.subr.mxu0 0.0
    %3404 = vmatpush2.msra.mxu0 0.0
    %3405 = vmatprep.subr.mxu0 0.0
    %3406 = vmatpush2.msra.mxu0 0.0
    %3407 = vmatprep.subr.mxu0 0.0
    %3408 = vmatpush2.msra.mxu0 0.0
    %3409 = vmatprep.subr.mxu0 0.0
    %3410 = vmatpush2.msra.mxu0 0.0
    %3411 = vmatprep.subr.mxu0 0.0
    %3412 = vmatpush2.msra.mxu0 0.0
    %3413 = vmatprep.subr.mxu0 0.0
    %3414 = vmatpush2.msra.mxu0 0.0
    %3415 = vmatprep.subr.mxu0 0.0
    %3416 = vmatpush2.msra.mxu0 0.0
    %3417 = vmatprep.subr.mxu0 0.0
    %3418 = vmatpush2.msra.mxu0 0.0
    %3419 = vmatprep.subr.mxu0 0.0
    %3420 = vmatpush2.msra.mxu0 0.0
    %3421 = vmatprep.mubr.f32.mxu0 0.0
    %3422 = vmatmul.mubr.f32.gmra.mxu0 %v3352
    %v3423 = vpop.f32.mrf.mxu0
    %v3424 = vadd.f32 0.0, %v3423
    %v3425 = vpop.f32.mrf.mxu0
    %3426 = vmatprep.mubr.f32.mxu0 0.0
    %3427 = vmatmul.mubr.f32.gmra.mxu0 %v3355
    %v3428 = vpop.f32.mrf.mxu0
    %v3429 = vadd.f32 0.0, %v3428
    %v3430 = vpop.f32.mrf.mxu0
    %3431 = vdwg.mxu0
    %v3432 = vadd.f32 %v3013, %v3424
    %v3433 = vadd.f32 %v3018, %v3429
    %3434 = vrot.lane.b32.xlu0 %v2197, 104
    %v3435 = vpop.permute.xlu0 %3434
    %3436 = vrot.lane.b32.xlu0 %v2189, 72
    %v3437 = vpop.permute.xlu0 %3436
    %v3438 = vsel %vm182, %v3435, 0
    %v3440 = vsel %vm182, %v3437, 0
    %3442 = vmatprep.subr.mxu0 0.0
    %3443 = vmatpush1.xpose.msra.mxu0 0.0
    %3444 = vmatprep.subr.mxu0 0.0
    %3445 = vmatpush1.xpose.msra.mxu0 0.0
    %3446 = vmatprep.subr.mxu0 0.0
    %3447 = vmatpush1.xpose.msra.mxu0 0.0
    %3448 = vmatprep.subr.mxu0 0.0
    %3449 = vmatpush1.xpose.msra.mxu0 0.0
    %3450 = vmatprep.subr.mxu0 0.0
    %3451 = vmatpush1.xpose.msra.mxu0 0.0
    %3452 = vmatprep.subr.mxu0 0.0
    %3453 = vmatpush1.xpose.msra.mxu0 0.0
    %3454 = vmatprep.subr.mxu0 0.0
    %3455 = vmatpush1.xpose.msra.mxu0 0.0
    %3456 = vmatprep.subr.mxu0 0.0
    %3457 = vmatpush1.xpose.msra.mxu0 0.0
    %3458 = vmatprep.subr.mxu0 0.0
    %3459 = vmatpush1.xpose.msra.mxu0 0.0
    %3460 = vmatprep.subr.mxu0 0.0
    %3461 = vmatpush1.xpose.msra.mxu0 0.0
    %3462 = vmatprep.subr.mxu0 0.0
    %3463 = vmatpush1.xpose.msra.mxu0 0.0
    %3464 = vmatprep.subr.mxu0 0.0
    %3465 = vmatpush1.xpose.msra.mxu0 0.0
    %3466 = vmatprep.subr.mxu0 0.0
    %3467 = vmatpush1.xpose.msra.mxu0 0.0
    %3468 = vmatprep.subr.mxu0 0.0
    %3469 = vmatpush1.xpose.msra.mxu0 0.0
    %3470 = vmatprep.subr.mxu0 0.0
    %3471 = vmatpush1.xpose.msra.mxu0 0.0
    %3472 = vmatprep.subr.mxu0 0.0
    %3473 = vmatpush1.xpose.msra.mxu0 %v3440
    %3474 = vmatprep.subr.mxu0 0.0
    %3475 = vmatpush2.xpose.msra.mxu0 0.0
    %3476 = vmatprep.subr.mxu0 0.0
    %3477 = vmatpush2.xpose.msra.mxu0 0.0
    %3478 = vmatprep.subr.mxu0 0.0
    %3479 = vmatpush2.xpose.msra.mxu0 0.0
    %3480 = vmatprep.subr.mxu0 0.0
    %3481 = vmatpush2.xpose.msra.mxu0 0.0
    %3482 = vmatprep.subr.mxu0 0.0
    %3483 = vmatpush2.xpose.msra.mxu0 0.0
    %3484 = vmatprep.subr.mxu0 0.0
    %3485 = vmatpush2.xpose.msra.mxu0 0.0
    %3486 = vmatprep.subr.mxu0 0.0
    %3487 = vmatpush2.xpose.msra.mxu0 0.0
    %3488 = vmatprep.subr.mxu0 0.0
    %3489 = vmatpush2.xpose.msra.mxu0 0.0
    %3490 = vmatprep.subr.mxu0 0.0
    %3491 = vmatpush2.xpose.msra.mxu0 0.0
    %3492 = vmatprep.subr.mxu0 0.0
    %3493 = vmatpush2.xpose.msra.mxu0 0.0
    %3494 = vmatprep.subr.mxu0 0.0
    %3495 = vmatpush2.xpose.msra.mxu0 0.0
    %3496 = vmatprep.subr.mxu0 0.0
    %3497 = vmatpush2.xpose.msra.mxu0 0.0
    %3498 = vmatprep.subr.mxu0 0.0
    %3499 = vmatpush2.xpose.msra.mxu0 0.0
    %3500 = vmatprep.subr.mxu0 0.0
    %3501 = vmatpush2.xpose.msra.mxu0 0.0
    %3502 = vmatprep.subr.mxu0 0.0
    %3503 = vmatpush2.xpose.msra.mxu0 0.0
    %3504 = vmatprep.subr.mxu0 0.0
    %3505 = vmatpush2.xpose.msra.mxu0 0.0
    %3506 = vmatprep.mubr.f32.mxu0 0.0
    %3507 = vmatmul.mubr.f32.gmra.mxu0 %v3438
    %v3508 = vpop.f32.mrf.mxu0
    %v3509 = vadd.f32 0.0, %v3508
    %v3510 = vpop.f32.mrf.mxu0
    %3511 = vdwg.mxu0
    %3512 = vrot.lane.b32.xlu0 %v2198, 104
    %v3513 = vpop.permute.xlu0 %3512
    %3514 = vrot.lane.b32.xlu0 %v2194, 72
    %v3515 = vpop.permute.xlu0 %3514
    %v3516 = vsel %vm182, %v3513, 0
    %v3518 = vsel %vm182, %v3515, 0
    %3520 = vmatprep.subr.mxu0 0.0
    %3521 = vmatpush1.xpose.msra.mxu0 0.0
    %3522 = vmatprep.subr.mxu0 0.0
    %3523 = vmatpush1.xpose.msra.mxu0 0.0
    %3524 = vmatprep.subr.mxu0 0.0
    %3525 = vmatpush1.xpose.msra.mxu0 0.0
    %3526 = vmatprep.subr.mxu0 0.0
    %3527 = vmatpush1.xpose.msra.mxu0 0.0
    %3528 = vmatprep.subr.mxu0 0.0
    %3529 = vmatpush1.xpose.msra.mxu0 0.0
    %3530 = vmatprep.subr.mxu0 0.0
    %3531 = vmatpush1.xpose.msra.mxu0 0.0
    %3532 = vmatprep.subr.mxu0 0.0
    %3533 = vmatpush1.xpose.msra.mxu0 0.0
    %3534 = vmatprep.subr.mxu0 0.0
    %3535 = vmatpush1.xpose.msra.mxu0 0.0
    %3536 = vmatprep.subr.mxu0 0.0
    %3537 = vmatpush1.xpose.msra.mxu0 0.0
    %3538 = vmatprep.subr.mxu0 0.0
    %3539 = vmatpush1.xpose.msra.mxu0 0.0
    %3540 = vmatprep.subr.mxu0 0.0
    %3541 = vmatpush1.xpose.msra.mxu0 0.0
    %3542 = vmatprep.subr.mxu0 0.0
    %3543 = vmatpush1.xpose.msra.mxu0 0.0
    %3544 = vmatprep.subr.mxu0 0.0
    %3545 = vmatpush1.xpose.msra.mxu0 0.0
    %3546 = vmatprep.subr.mxu0 0.0
    %3547 = vmatpush1.xpose.msra.mxu0 0.0
    %3548 = vmatprep.subr.mxu0 0.0
    %3549 = vmatpush1.xpose.msra.mxu0 0.0
    %3550 = vmatprep.subr.mxu0 0.0
    %3551 = vmatpush1.xpose.msra.mxu0 %v3518
    %3552 = vmatprep.subr.mxu0 0.0
    %3553 = vmatpush2.xpose.msra.mxu0 0.0
    %3554 = vmatprep.subr.mxu0 0.0
    %3555 = vmatpush2.xpose.msra.mxu0 0.0
    %3556 = vmatprep.subr.mxu0 0.0
    %3557 = vmatpush2.xpose.msra.mxu0 0.0
    %3558 = vmatprep.subr.mxu0 0.0
    %3559 = vmatpush2.xpose.msra.mxu0 0.0
    %3560 = vmatprep.subr.mxu0 0.0
    %3561 = vmatpush2.xpose.msra.mxu0 0.0
    %3562 = vmatprep.subr.mxu0 0.0
    %3563 = vmatpush2.xpose.msra.mxu0 0.0
    %3564 = vmatprep.subr.mxu0 0.0
    %3565 = vmatpush2.xpose.msra.mxu0 0.0
    %3566 = vmatprep.subr.mxu0 0.0
    %3567 = vmatpush2.xpose.msra.mxu0 0.0
    %3568 = vmatprep.subr.mxu0 0.0
    %3569 = vmatpush2.xpose.msra.mxu0 0.0
    %3570 = vmatprep.subr.mxu0 0.0
    %3571 = vmatpush2.xpose.msra.mxu0 0.0
    %3572 = vmatprep.subr.mxu0 0.0
    %3573 = vmatpush2.xpose.msra.mxu0 0.0
    %3574 = vmatprep.subr.mxu0 0.0
    %3575 = vmatpush2.xpose.msra.mxu0 0.0
    %3576 = vmatprep.subr.mxu0 0.0
    %3577 = vmatpush2.xpose.msra.mxu0 0.0
    %3578 = vmatprep.subr.mxu0 0.0
    %3579 = vmatpush2.xpose.msra.mxu0 0.0
    %3580 = vmatprep.subr.mxu0 0.0
    %3581 = vmatpush2.xpose.msra.mxu0 0.0
    %3582 = vmatprep.subr.mxu0 0.0
    %3583 = vmatpush2.xpose.msra.mxu0 0.0
    %3584 = vmatprep.mubr.f32.mxu0 0.0
    %3585 = vmatmul.mubr.f32.gmra.mxu0 %v3516
    %v3586 = vpop.f32.mrf.mxu0
    %v3587 = vadd.f32 0.0, %v3586
    %v3588 = vpop.f32.mrf.mxu0
    %3589 = vdwg.mxu0
    %v3590 = vsel %vm182, %v3509, -inf
    %3591 = vmax.xlane.f32.xlu0 %v3590
    %v3592 = vpop.xlane.xlu0 %3591
    %v3593 = vsel %vm182, %v3587, -inf
    %3594 = vmax.xlane.f32.xlu0 %v3593
    %v3595 = vpop.xlane.xlu0 %3594
    %v3596 = vsub.f32 %v3509, %v3592
    %v3597 = vsub.f32 %v3587, %v3595
    %v3598 = vmul.f32 %v3596, 1.442695
    %v3599 = vpow.pop %v3598
    %v3600 = vmul.f32 %v3597, 1.442695
    %v3601 = vpow.pop %v3600
    %v3602 = vsel %vm182, %v3599, 0.0
    %3603 = vadd.xlane.f32.xlu0 %v3602
    %v3604 = vpop.xlane.xlu0 %3603
    %v3605 = vsel %vm182, %v3601, 0.0
    %3606 = vadd.xlane.f32.xlu0 %v3605
    %v3607 = vpop.xlane.xlu0 %3606
    %v3608 = vrcp.pop %v3604
    %v3609 = vmul.f32 %v3599, %v3608
    %v3610 = vrcp.pop %v3607
    %v3611 = vmul.f32 %v3601, %v3610
    %3612 = vrot.lane.b32.xlu0 %v2189, 40
    %v3613 = vpop.permute.xlu0 %3612
    %v3616 = vsel %vm182, %v3609, 0
    %3618 = vmatprep.subr.mxu0 0.0
    %3619 = vmatpush1.msra.mxu0 0.0
    %3620 = vmatprep.subr.mxu0 0.0
    %3621 = vmatpush1.msra.mxu0 0.0
    %3622 = vmatprep.subr.mxu0 0.0
    %3623 = vmatpush1.msra.mxu0 0.0
    %3624 = vmatprep.subr.mxu0 0.0
    %3625 = vmatpush1.msra.mxu0 0.0
    %3626 = vmatprep.subr.mxu0 0.0
    %3627 = vmatpush1.msra.mxu0 0.0
    %3628 = vmatprep.subr.mxu0 0.0
    %3629 = vmatpush1.msra.mxu0 0.0
    %3630 = vmatprep.subr.mxu0 0.0
    %3631 = vmatpush1.msra.mxu0 0.0
    %3632 = vmatprep.subr.mxu0 0.0
    %3633 = vmatpush1.msra.mxu0 0.0
    %3634 = vmatprep.subr.mxu0 0.0
    %3635 = vmatpush1.msra.mxu0 0.0
    %3636 = vmatprep.subr.mxu0 0.0
    %3637 = vmatpush1.msra.mxu0 0.0
    %3638 = vmatprep.subr.mxu0 0.0
    %3639 = vmatpush1.msra.mxu0 0.0
    %3640 = vmatprep.subr.mxu0 0.0
    %3641 = vmatpush1.msra.mxu0 0.0
    %3642 = vmatprep.subr.mxu0 0.0
    %3643 = vmatpush1.msra.mxu0 0.0
    %3644 = vmatprep.subr.mxu0 0.0
    %3645 = vmatpush1.msra.mxu0 0.0
    %3646 = vmatprep.subr.mxu0 0.0
    %3647 = vmatpush1.msra.mxu0 0.0
    %3648 = vmatprep.subr.mxu0 0.0
    %3649 = vmatpush1.msra.mxu0 %v3613
    %3650 = vmatprep.subr.mxu0 0.0
    %3651 = vmatpush2.msra.mxu0 0.0
    %3652 = vmatprep.subr.mxu0 0.0
    %3653 = vmatpush2.msra.mxu0 0.0
    %3654 = vmatprep.subr.mxu0 0.0
    %3655 = vmatpush2.msra.mxu0 0.0
    %3656 = vmatprep.subr.mxu0 0.0
    %3657 = vmatpush2.msra.mxu0 0.0
    %3658 = vmatprep.subr.mxu0 0.0
    %3659 = vmatpush2.msra.mxu0 0.0
    %3660 = vmatprep.subr.mxu0 0.0
    %3661 = vmatpush2.msra.mxu0 0.0
    %3662 = vmatprep.subr.mxu0 0.0
    %3663 = vmatpush2.msra.mxu0 0.0
    %3664 = vmatprep.subr.mxu0 0.0
    %3665 = vmatpush2.msra.mxu0 0.0
    %3666 = vmatprep.subr.mxu0 0.0
    %3667 = vmatpush2.msra.mxu0 0.0
    %3668 = vmatprep.subr.mxu0 0.0
    %3669 = vmatpush2.msra.mxu0 0.0
    %3670 = vmatprep.subr.mxu0 0.0
    %3671 = vmatpush2.msra.mxu0 0.0
    %3672 = vmatprep.subr.mxu0 0.0
    %3673 = vmatpush2.msra.mxu0 0.0
    %3674 = vmatprep.subr.mxu0 0.0
    %3675 = vmatpush2.msra.mxu0 0.0
    %3676 = vmatprep.subr.mxu0 0.0
    %3677 = vmatpush2.msra.mxu0 0.0
    %3678 = vmatprep.subr.mxu0 0.0
    %3679 = vmatpush2.msra.mxu0 0.0
    %3680 = vmatprep.subr.mxu0 0.0
    %3681 = vmatpush2.msra.mxu0 0.0
    %3682 = vmatprep.mubr.f32.mxu0 0.0
    %3683 = vmatmul.mubr.f32.gmra.mxu0 %v3616
    %v3684 = vpop.f32.mrf.mxu0
    %v3685 = vadd.f32 0.0, %v3684
    %v3686 = vpop.f32.mrf.mxu0
    %3687 = vdwg.mxu0
    %3688 = vrot.lane.b32.xlu0 %v2194, 40
    %v3689 = vpop.permute.xlu0 %3688
    %v3692 = vsel %vm182, %v3611, 0
    %3694 = vmatprep.subr.mxu0 0.0
    %3695 = vmatpush1.msra.mxu0 0.0
    %3696 = vmatprep.subr.mxu0 0.0
    %3697 = vmatpush1.msra.mxu0 0.0
    %3698 = vmatprep.subr.mxu0 0.0
    %3699 = vmatpush1.msra.mxu0 0.0
    %3700 = vmatprep.subr.mxu0 0.0
    %3701 = vmatpush1.msra.mxu0 0.0
    %3702 = vmatprep.subr.mxu0 0.0
    %3703 = vmatpush1.msra.mxu0 0.0
    %3704 = vmatprep.subr.mxu0 0.0
    %3705 = vmatpush1.msra.mxu0 0.0
    %3706 = vmatprep.subr.mxu0 0.0
    %3707 = vmatpush1.msra.mxu0 0.0
    %3708 = vmatprep.subr.mxu0 0.0
    %3709 = vmatpush1.msra.mxu0 0.0
    %3710 = vmatprep.subr.mxu0 0.0
    %3711 = vmatpush1.msra.mxu0 0.0
    %3712 = vmatprep.subr.mxu0 0.0
    %3713 = vmatpush1.msra.mxu0 0.0
    %3714 = vmatprep.subr.mxu0 0.0
    %3715 = vmatpush1.msra.mxu0 0.0
    %3716 = vmatprep.subr.mxu0 0.0
    %3717 = vmatpush1.msra.mxu0 0.0
    %3718 = vmatprep.subr.mxu0 0.0
    %3719 = vmatpush1.msra.mxu0 0.0
    %3720 = vmatprep.subr.mxu0 0.0
    %3721 = vmatpush1.msra.mxu0 0.0
    %3722 = vmatprep.subr.mxu0 0.0
    %3723 = vmatpush1.msra.mxu0 0.0
    %3724 = vmatprep.subr.mxu0 0.0
    %3725 = vmatpush1.msra.mxu0 %v3689
    %3726 = vmatprep.subr.mxu0 0.0
    %3727 = vmatpush2.msra.mxu0 0.0
    %3728 = vmatprep.subr.mxu0 0.0
    %3729 = vmatpush2.msra.mxu0 0.0
    %3730 = vmatprep.subr.mxu0 0.0
    %3731 = vmatpush2.msra.mxu0 0.0
    %3732 = vmatprep.subr.mxu0 0.0
    %3733 = vmatpush2.msra.mxu0 0.0
    %3734 = vmatprep.subr.mxu0 0.0
    %3735 = vmatpush2.msra.mxu0 0.0
    %3736 = vmatprep.subr.mxu0 0.0
    %3737 = vmatpush2.msra.mxu0 0.0
    %3738 = vmatprep.subr.mxu0 0.0
    %3739 = vmatpush2.msra.mxu0 0.0
    %3740 = vmatprep.subr.mxu0 0.0
    %3741 = vmatpush2.msra.mxu0 0.0
    %3742 = vmatprep.subr.mxu0 0.0
    %3743 = vmatpush2.msra.mxu0 0.0
    %3744 = vmatprep.subr.mxu0 0.0
    %3745 = vmatpush2.msra.mxu0 0.0
    %3746 = vmatprep.subr.mxu0 0.0
    %3747 = vmatpush2.msra.mxu0 0.0
    %3748 = vmatprep.subr.mxu0 0.0
    %3749 = vmatpush2.msra.mxu0 0.0
    %3750 = vmatprep.subr.mxu0 0.0
    %3751 = vmatpush2.msra.mxu0 0.0
    %3752 = vmatprep.subr.mxu0 0.0
    %3753 = vmatpush2.msra.mxu0 0.0
    %3754 = vmatprep.subr.mxu0 0.0
    %3755 = vmatpush2.msra.mxu0 0.0
    %3756 = vmatprep.subr.mxu0 0.0
    %3757 = vmatpush2.msra.mxu0 0.0
    %3758 = vmatprep.mubr.f32.mxu0 0.0
    %3759 = vmatmul.mubr.f32.gmra.mxu0 %v3692
    %v3760 = vpop.f32.mrf.mxu0
    %v3761 = vadd.f32 0.0, %v3760
    %v3762 = vpop.f32.mrf.mxu0
    %3763 = vdwg.mxu0
    %v3765 = vsel %vm182, %v3685, 0
    %v3768 = vsel %vm182, %v3761, 0
    %3770 = vmatprep.subr.mxu0 0.0
    %3771 = vmatpush1.msra.mxu0 0.0
    %3772 = vmatprep.subr.mxu0 0.0
    %3773 = vmatpush1.msra.mxu0 0.0
    %3774 = vmatprep.subr.mxu0 0.0
    %3775 = vmatpush1.msra.mxu0 0.0
    %3776 = vmatprep.subr.mxu0 0.0
    %3777 = vmatpush1.msra.mxu0 0.0
    %3778 = vmatprep.subr.mxu0 0.0
    %3779 = vmatpush1.msra.mxu0 0.0
    %3780 = vmatprep.subr.mxu0 0.0
    %3781 = vmatpush1.msra.mxu0 0.0
    %3782 = vmatprep.subr.mxu0 0.0
    %3783 = vmatpush1.msra.mxu0 0.0
    %3784 = vmatprep.subr.mxu0 0.0
    %3785 = vmatpush1.msra.mxu0 0.0
    %3786 = vmatprep.subr.mxu0 0.0
    %3787 = vmatpush1.msra.mxu0 0.0
    %3788 = vmatprep.subr.mxu0 0.0
    %3789 = vmatpush1.msra.mxu0 0.0
    %3790 = vmatprep.subr.mxu0 0.0
    %3791 = vmatpush1.msra.mxu0 0.0
    %3792 = vmatprep.subr.mxu0 0.0
    %3793 = vmatpush1.msra.mxu0 0.0
    %3794 = vmatprep.subr.mxu0 0.0
    %3795 = vmatpush1.msra.mxu0 0.0
    %3796 = vmatprep.subr.mxu0 0.0
    %3797 = vmatpush1.msra.mxu0 0.0
    %3798 = vmatprep.subr.mxu0 0.0
    %3799 = vmatpush1.msra.mxu0 0.0
    %3800 = vmatprep.subr.mxu0 0.0
    %3801 = vmatpush1.msra.mxu0 %v2097
    %3802 = vmatprep.subr.mxu0 0.0
    %3803 = vmatpush2.msra.mxu0 0.0
    %3804 = vmatprep.subr.mxu0 0.0
    %3805 = vmatpush2.msra.mxu0 0.0
    %3806 = vmatprep.subr.mxu0 0.0
    %3807 = vmatpush2.msra.mxu0 0.0
    %3808 = vmatprep.subr.mxu0 0.0
    %3809 = vmatpush2.msra.mxu0 0.0
    %3810 = vmatprep.subr.mxu0 0.0
    %3811 = vmatpush2.msra.mxu0 0.0
    %3812 = vmatprep.subr.mxu0 0.0
    %3813 = vmatpush2.msra.mxu0 0.0
    %3814 = vmatprep.subr.mxu0 0.0
    %3815 = vmatpush2.msra.mxu0 0.0
    %3816 = vmatprep.subr.mxu0 0.0
    %3817 = vmatpush2.msra.mxu0 0.0
    %3818 = vmatprep.subr.mxu0 0.0
    %3819 = vmatpush2.msra.mxu0 0.0
    %3820 = vmatprep.subr.mxu0 0.0
    %3821 = vmatpush2.msra.mxu0 0.0
    %3822 = vmatprep.subr.mxu0 0.0
    %3823 = vmatpush2.msra.mxu0 0.0
    %3824 = vmatprep.subr.mxu0 0.0
    %3825 = vmatpush2.msra.mxu0 0.0
    %3826 = vmatprep.subr.mxu0 0.0
    %3827 = vmatpush2.msra.mxu0 0.0
    %3828 = vmatprep.subr.mxu0 0.0
    %3829 = vmatpush2.msra.mxu0 0.0
    %3830 = vmatprep.subr.mxu0 0.0
    %3831 = vmatpush2.msra.mxu0 0.0
    %3832 = vmatprep.subr.mxu0 0.0
    %3833 = vmatpush2.msra.mxu0 0.0
    %3834 = vmatprep.mubr.f32.mxu0 0.0
    %3835 = vmatmul.mubr.f32.gmra.mxu0 %v3765
    %v3836 = vpop.f32.mrf.mxu0
    %v3837 = vadd.f32 0.0, %v3836
    %v3838 = vpop.f32.mrf.mxu0
    %3839 = vmatprep.mubr.f32.mxu0 0.0
    %3840 = vmatmul.mubr.f32.gmra.mxu0 %v3768
    %v3841 = vpop.f32.mrf.mxu0
    %v3842 = vadd.f32 0.0, %v3841
    %v3843 = vpop.f32.mrf.mxu0
    %3844 = vdwg.mxu0
    %v3845 = vadd.f32 %v3432, %v3837
    %v3846 = vadd.f32 %v3433, %v3842
    %v3847 = vadd.f32 %v2086, %v3845
    %v3848 = vadd.f32 %v2087, %v3846
    %v3849 = vlaneseq
    %v3850 = vshrl.u32 %v3849, 7
    %v3851 = vsub.s32 0, %v3850
    %v3852 = vrot.slane %v70, %v3851
    %v3853 = vadd.f32 %v3847, %v3852
    %v3854 = vadd.f32 %v3848, %v3852
    %v3855 = vsel %vm95, %v3853, 0.0
    %3856 = vadd.xlane.f32.xlu0 %v3855
    %v3857 = vpop.xlane.xlu0 %3856
    %v3858 = vsel %vm95, %v3854, 0.0
    %3859 = vadd.xlane.f32.xlu0 %v3858
    %v3860 = vpop.xlane.xlu0 %3859
    %v3861 = vmul.f32 %v3857, %v1842
    %v3862 = vmul.f32 %v3860, %v1842
    %v3863 = vsub.f32 %v3853, %v3861
    %v3864 = vsub.f32 %v3854, %v3862
    %v3865 = vmul.f32 %v3863, %v3863
    %v3866 = vmul.f32 %v3864, %v3864
    %v3867 = vsel %vm95, %v3865, 0.0
    %3868 = vadd.xlane.f32.xlu0 %v3867
    %v3869 = vpop.xlane.xlu0 %3868
    %v3870 = vsel %vm95, %v3866, 0.0
    %3871 = vadd.xlane.f32.xlu0 %v3870
    %v3872 = vpop.xlane.xlu0 %3871
    %v3873 = vmul.f32 %v3869, %v1842
    %v3874 = vmul.f32 %v3872, %v1842
    %v3875 = vadd.f32 %v3873, 1e-05
    %v3876 = vadd.f32 %v3874, 1e-05
    %v3877 = vrsqrt.pop %v3875
    %v3878 = vrsqrt.pop %v3876
    %v3879 = vmul.f32 %v3863, %v3877
    %v3880 = vmul.f32 %v3864, %v3878
    %v3881 = vlaneseq
    %v3882 = vshrl.u32 %v3881, 7
    %v3883 = vsub.s32 1, %v3882
    %v3884 = vrot.slane %v70, %v3883
    %v3885 = vmul.f32 %v3879, %v3884
    %v3886 = vmul.f32 %v3880, %v3884
    %v3887 = vlaneseq
    %v3888 = vshrl.u32 %v3887, 7
    %v3889 = vsub.s32 2, %v3888
    %v3890 = vrot.slane %v70, %v3889
    %v3891 = vadd.f32 %v3885, %v3890
    %v3892 = vadd.f32 %v3886, %v3890
    %v3893 = vlaneseq
    %v3894 = vshrl.u32 %v3893, 7
    %v3895 = vsub.s32 1, %v3894
    %v3896 = vrot.slane %v68, %v3895
    %v3898 = vsel %vm95, %v3891, 0
    %v3901 = vsel %vm95, %v3892, 0
    %3903 = vmatprep.subr.mxu0 0.0
    %3904 = vmatpush1.msra.mxu0 0.0
    %3905 = vmatprep.subr.mxu0 0.0
    %3906 = vmatpush1.msra.mxu0 0.0
    %3907 = vmatprep.subr.mxu0 0.0
    %3908 = vmatpush1.msra.mxu0 0.0
    %3909 = vmatprep.subr.mxu0 0.0
    %3910 = vmatpush1.msra.mxu0 0.0
    %3911 = vmatprep.subr.mxu0 0.0
    %3912 = vmatpush1.msra.mxu0 0.0
    %3913 = vmatprep.subr.mxu0 0.0
    %3914 = vmatpush1.msra.mxu0 0.0
    %3915 = vmatprep.subr.mxu0 0.0
    %3916 = vmatpush1.msra.mxu0 0.0
    %3917 = vmatprep.subr.mxu0 0.0
    %3918 = vmatpush1.msra.mxu0 0.0
    %3919 = vmatprep.subr.mxu0 0.0
    %3920 = vmatpush1.msra.mxu0 0.0
    %3921 = vmatprep.subr.mxu0 0.0
    %3922 = vmatpush1.msra.mxu0 0.0
    %3923 = vmatprep.subr.mxu0 0.0
    %3924 = vmatpush1.msra.mxu0 0.0
    %3925 = vmatprep.subr.mxu0 0.0
    %3926 = vmatpush1.msra.mxu0 0.0
    %3927 = vmatprep.subr.mxu0 0.0
    %3928 = vmatpush1.msra.mxu0 %v2102
    %3929 = vmatprep.subr.mxu0 0.0
    %3930 = vmatpush1.msra.mxu0 %v2101
    %3931 = vmatprep.subr.mxu0 0.0
    %3932 = vmatpush1.msra.mxu0 %v2100
    %3933 = vmatprep.subr.mxu0 0.0
    %3934 = vmatpush1.msra.mxu0 %v2099
    %3935 = vmatprep.subr.mxu0 0.0
    %3936 = vmatpush2.msra.mxu0 0.0
    %3937 = vmatprep.subr.mxu0 0.0
    %3938 = vmatpush2.msra.mxu0 0.0
    %3939 = vmatprep.subr.mxu0 0.0
    %3940 = vmatpush2.msra.mxu0 0.0
    %3941 = vmatprep.subr.mxu0 0.0
    %3942 = vmatpush2.msra.mxu0 0.0
    %3943 = vmatprep.subr.mxu0 0.0
    %3944 = vmatpush2.msra.mxu0 0.0
    %3945 = vmatprep.subr.mxu0 0.0
    %3946 = vmatpush2.msra.mxu0 0.0
    %3947 = vmatprep.subr.mxu0 0.0
    %3948 = vmatpush2.msra.mxu0 0.0
    %3949 = vmatprep.subr.mxu0 0.0
    %3950 = vmatpush2.msra.mxu0 0.0
    %3951 = vmatprep.subr.mxu0 0.0
    %3952 = vmatpush2.msra.mxu0 0.0
    %3953 = vmatprep.subr.mxu0 0.0
    %3954 = vmatpush2.msra.mxu0 0.0
    %3955 = vmatprep.subr.mxu0 0.0
    %3956 = vmatpush2.msra.mxu0 0.0
    %3957 = vmatprep.subr.mxu0 0.0
    %3958 = vmatpush2.msra.mxu0 0.0
    %3959 = vmatprep.subr.mxu0 0.0
    %3960 = vmatpush2.msra.mxu0 0.0
    %3961 = vmatprep.subr.mxu0 0.0
    %3962 = vmatpush2.msra.mxu0 0.0
    %3963 = vmatprep.subr.mxu0 0.0
    %3964 = vmatpush2.msra.mxu0 0.0
    %3965 = vmatprep.subr.mxu0 0.0
    %3966 = vmatpush2.msra.mxu0 0.0
    %3967 = vmatprep.mubr.f32.mxu0 0.0
    %3968 = vmatmul.mubr.f32.gmra.mxu0 %v3898
    %v3969 = vpop.f32.mrf.mxu0
    %v3970 = vadd.f32 %v3896, %v3969
    %v3971 = vpop.f32.mrf.mxu0
    %3972 = vmatprep.mubr.f32.mxu0 0.0
    %3973 = vmatmul.mubr.f32.gmra.mxu0 %v3901
    %v3974 = vpop.f32.mrf.mxu0
    %v3975 = vadd.f32 %v3896, %v3974
    %v3976 = vpop.f32.mrf.mxu0
    %3977 = vdwg.mxu0
    %v3978 = vmax.f32 %v3970, 0.0
    %v3979 = vmax.f32 %v3975, 0.0
    %v3980 = vlaneseq
    %v3981 = vshrl.u32 %v3980, 7
    %v3982 = vsub.s32 3, %v3981
    %v3983 = vrot.slane %v70, %v3982
    %v3985 = vsel %vm1966, %v3978, 0
    %v3988 = vsel %vm1966, %v3979, 0
    %3990 = vmatprep.subr.mxu0 0.0
    %3991 = vmatpush1.msra.mxu0 0.0
    %3992 = vmatprep.subr.mxu0 0.0
    %3993 = vmatpush1.msra.mxu0 0.0
    %3994 = vmatprep.subr.mxu0 0.0
    %3995 = vmatpush1.msra.mxu0 0.0
    %3996 = vmatprep.subr.mxu0 0.0
    %3997 = vmatpush1.msra.mxu0 0.0
    %3998 = vmatprep.subr.mxu0 0.0
    %3999 = vmatpush1.msra.mxu0 0.0
    %4000 = vmatprep.subr.mxu0 0.0
    %4001 = vmatpush1.msra.mxu0 0.0
    %4002 = vmatprep.subr.mxu0 0.0
    %4003 = vmatpush1.msra.mxu0 0.0
    %4004 = vmatprep.subr.mxu0 0.0
    %4005 = vmatpush1.msra.mxu0 0.0
    %4006 = vmatprep.subr.mxu0 0.0
    %4007 = vmatpush1.msra.mxu0 %v2111
    %4008 = vmatprep.subr.mxu0 0.0
    %4009 = vmatpush1.msra.mxu0 %v2110
    %4010 = vmatprep.subr.mxu0 0.0
    %4011 = vmatpush1.msra.mxu0 %v2109
    %4012 = vmatprep.subr.mxu0 0.0
    %4013 = vmatpush1.msra.mxu0 %v2108
    %4014 = vmatprep.subr.mxu0 0.0
    %4015 = vmatpush1.msra.mxu0 %v2107
    %4016 = vmatprep.subr.mxu0 0.0
    %4017 = vmatpush1.msra.mxu0 %v2106
    %4018 = vmatprep.subr.mxu0 0.0
    %4019 = vmatpush1.msra.mxu0 %v2105
    %4020 = vmatprep.subr.mxu0 0.0
    %4021 = vmatpush1.msra.mxu0 %v2104
    %4022 = vmatprep.subr.mxu0 0.0
    %4023 = vmatpush2.msra.mxu0 0.0
    %4024 = vmatprep.subr.mxu0 0.0
    %4025 = vmatpush2.msra.mxu0 0.0
    %4026 = vmatprep.subr.mxu0 0.0
    %4027 = vmatpush2.msra.mxu0 0.0
    %4028 = vmatprep.subr.mxu0 0.0
    %4029 = vmatpush2.msra.mxu0 0.0
    %4030 = vmatprep.subr.mxu0 0.0
    %4031 = vmatpush2.msra.mxu0 0.0
    %4032 = vmatprep.subr.mxu0 0.0
    %4033 = vmatpush2.msra.mxu0 0.0
    %4034 = vmatprep.subr.mxu0 0.0
    %4035 = vmatpush2.msra.mxu0 0.0
    %4036 = vmatprep.subr.mxu0 0.0
    %4037 = vmatpush2.msra.mxu0 0.0
    %4038 = vmatprep.subr.mxu0 0.0
    %4039 = vmatpush2.msra.mxu0 0.0
    %4040 = vmatprep.subr.mxu0 0.0
    %4041 = vmatpush2.msra.mxu0 0.0
    %4042 = vmatprep.subr.mxu0 0.0
    %4043 = vmatpush2.msra.mxu0 0.0
    %4044 = vmatprep.subr.mxu0 0.0
    %4045 = vmatpush2.msra.mxu0 0.0
    %4046 = vmatprep.subr.mxu0 0.0
    %4047 = vmatpush2.msra.mxu0 0.0
    %4048 = vmatprep.subr.mxu0 0.0
    %4049 = vmatpush2.msra.mxu0 0.0
    %4050 = vmatprep.subr.mxu0 0.0
    %4051 = vmatpush2.msra.mxu0 0.0
    %4052 = vmatprep.subr.mxu0 0.0
    %4053 = vmatpush2.msra.mxu0 0.0
    %4054 = vmatprep.mubr.f32.mxu0 0.0
    %4055 = vmatmul.mubr.f32.gmra.mxu0 %v3985
    %v4056 = vpop.f32.mrf.mxu0
    %v4057 = vadd.f32 %v3983, %v4056
    %v4058 = vpop.f32.mrf.mxu0
    %4059 = vmatprep.mubr.f32.mxu0 0.0
    %4060 = vmatmul.mubr.f32.gmra.mxu0 %v3988
    %v4061 = vpop.f32.mrf.mxu0
    %v4062 = vadd.f32 %v3983, %v4061
    %v4063 = vpop.f32.mrf.mxu0
    %4064 = vdwg.mxu0
    %v4065 = vadd.f32 %v3891, %v4057
    %v4066 = vadd.f32 %v3892, %v4062
    %v4067 = vsel %vm95, %v4065, 0.0
    %4068 = vadd.xlane.f32.xlu0 %v4067
    %v4069 = vpop.xlane.xlu0 %4068
    %v4070 = vsel %vm95, %v4066, 0.0
    %4071 = vadd.xlane.f32.xlu0 %v4070
    %v4072 = vpop.xlane.xlu0 %4071
    %v4073 = vmul.f32 %v4069, %v1842
    %v4074 = vmul.f32 %v4072, %v1842
    %v4075 = vsub.f32 %v4065, %v4073
    %v4076 = vsub.f32 %v4066, %v4074
    %v4077 = vmul.f32 %v4075, %v4075
    %v4078 = vmul.f32 %v4076, %v4076
    %v4079 = vsel %vm95, %v4077, 0.0
    %4080 = vadd.xlane.f32.xlu0 %v4079
    %v4081 = vpop.xlane.xlu0 %4080
    %v4082 = vsel %vm95, %v4078, 0.0
    %4083 = vadd.xlane.f32.xlu0 %v4082
    %v4084 = vpop.xlane.xlu0 %4083
    %v4085 = vmul.f32 %v4081, %v1842
    %v4086 = vmul.f32 %v4084, %v1842
    %v4087 = vadd.f32 %v4085, 1e-05
    %v4088 = vadd.f32 %v4086, 1e-05
    %v4089 = vrsqrt.pop %v4087
    %v4090 = vrsqrt.pop %v4088
    %v4091 = vmul.f32 %v4075, %v4089
    %v4092 = vmul.f32 %v4076, %v4090
    %v4093 = vlaneseq
    %v4094 = vshrl.u32 %v4093, 7
    %v4095 = vsub.s32 4, %v4094
    %v4096 = vrot.slane %v70, %v4095
    %v4097 = vmul.f32 %v4091, %v4096
    %v4098 = vmul.f32 %v4092, %v4096
    %v4099 = vlaneseq
    %v4100 = vshrl.u32 %v4099, 7
    %v4101 = vsub.s32 5, %v4100
    %v4102 = vrot.slane %v70, %v4101
    %v4103 = vadd.f32 %v4097, %v4102
    %v4104 = vadd.f32 %v4098, %v4102
    %v4105 = vsel %vm95, %v4103, 0.0
    %v4106 = vrot.slane %v4105, 4
    %v4107 = vadd.f32 %v4105, %v4106
    %v4108 = vrot.slane %v4107, 2
    %v4109 = vadd.f32 %v4107, %v4108
    %v4110 = vrot.slane %v4109, 1
    %v4111 = vadd.f32 %v4109, %v4110
    %v4112 = vsel %vm95, %v4104, 0.0
    %v4113 = vrot.slane %v4112, 4
    %v4114 = vadd.f32 %v4112, %v4113
    %v4115 = vrot.slane %v4114, 2
    %v4116 = vadd.f32 %v4114, %v4115
    %v4117 = vrot.slane %v4116, 1
    %v4118 = vadd.f32 %v4116, %v4117
    %v4119 = vrcp.pop 8.0
    %v4120 = vmul.f32 %v4111, %v4119
    %v4121 = vmul.f32 %v4118, %v4119
    %vm4124 = vcmask 1041409
    %v4125 = vsel %vm4124, %v4121, %v4120
    %vm4127 = vcmask 254976
    %4128 = vst.msk [vmem:[#allocation2] sm:$0x3] %vm4127, %v4125
    // Predicated region
    $region42: #{tpu_custom_call.1} parent=1 // pred_check
      _
    $region43: #{tpu_custom_call.1} parent=1 // pred_check_branch
      %4130 = sbr.rel (0) target = $region45
    $region44: #{tpu_custom_call.1} parent=1 // pred_region
      %s4132 = ssub.s32 32, 32
      %4133 = vsyncadd [#allocation3], %s4132
      %s4135 = sshll.u32 [#allocation2], 4
      %s4136 = int_to_ptr.vmem [resolvable:$true] %s4135
      %4138 = dma.vmem_to_hbm [thread:$0]  %s4136, 32, %s10, [#allocation3]
    $region45: #{tpu_custom_call.1} parent=1 // pred_fallthru
      _
    // Predicated region
    $region46: #{tpu_custom_call.1} parent=1 // pred_check
      _
    $region47: #{tpu_custom_call.1} parent=1 // pred_check_branch
      %4140 = sbr.rel (0) target = $region49
    $region48: #{tpu_custom_call.1} parent=1 // pred_region
      %4141 = dma.done [#allocation3], 32
    $region49: #{tpu_custom_call.1} parent=1 // pred_fallthru
      _
    %4142 = vsyncpa [#allocation3], 1

</llo_original>
